<compile_context>
chip_gen: v7x
topology: tpu7x:2x2x1
jax: 0.10.0
libtpu: 0.0.40
codegen_flags: <defaults>
</compile_context>

<pallas_src>
import functools

import jax
import jax.numpy as jnp
from jax.experimental import pallas as pl
from jax.experimental.pallas import tpu as pltpu


_MEAN = jnp.array([0.3235, 0.3310, 0.3445], jnp.float32)
_STD = jnp.array([0.2533, 0.2224, 0.2483], jnp.float32)

_VMEM_LIMIT_BYTES = 32 * 1024 * 1024   # well under v5e/v6e/v7x physical VMEM


def _round_up(x, m):
    return ((x + m - 1) // m) * m


# ---------------------------------------------------------------------------
# Pallas kernel: tap-accumulating conv, fused bias / ReLU / skip / 1x1 head,
# single dense store per row tile.
# ---------------------------------------------------------------------------
def _tap_conv_kernel(*refs, offsets, tile_m, relu, has_skip, has_head):
    win_ref, w_ref, b_ref = refs[:3]
    pos = 3
    skip_ref = None
    if has_skip:
        skip_ref = refs[pos]
        pos += 1
    hw_ref = hb_ref = None
    if has_head:
        hw_ref, hb_ref = refs[pos], refs[pos + 1]
        pos += 2
    o_ref = refs[pos]

    # Chained per-offset MXU dots into one f32 accumulator (single expression
    # so v7x's MRB can accumulate in place).  All output groups occupy the
    # columns of the packed weight, so there is exactly ONE dense store below.
    acc = None
    for d, off in enumerate(offsets):                    # static tap offsets
        a_tile = win_ref[off:off + tile_m, :]            # (TM, K) bf16
        part = jnp.dot(a_tile, w_ref[d],
                       preferred_element_type=jnp.float32)
        acc = part if acc is None else acc + part
    acc = acc + b_ref[...]                               # f32 bias
    if relu:
        acc = jnp.maximum(acc, 0.0)
    if has_head:                                         # fused 1x1 head conv
        acc = jnp.dot(acc.astype(jnp.bfloat16), hw_ref[...],
                      preferred_element_type=jnp.float32) + hb_ref[...]
    if has_skip:                                         # fused skip add
        acc = acc + skip_ref[...].astype(jnp.float32)
    o_ref[...] = acc.astype(o_ref.dtype)                 # one dense store


def tap_conv(z_flat, row_pitch, w_packed, bias, *, relu=True, skip=None,
             head_w=None, head_b=None, out_dtype=jnp.bfloat16, tile_m=1024):
    """Row-tiled Pallas call.

    The input is streamed as overlapping (tile_m + halo, K) windows (one per
    grid step, double-buffered by Pallas); weights / bias / head stay
    VMEM-resident via constant index maps; skip and output tiles stream.
    """
    n_rows, k = z_flat.shape
    n_off, kw, c_tot = w_packed.shape
    offsets = (0, 1, row_pitch, row_pitch + 1)
    assert n_off == len(offsets) and k <= kw

    tm = tile_m if n_rows >= tile_m else _round_up(n_rows, 8)
    rows_pad = _round_up(n_rows, tm)
    n_tiles = rows_pad // tm
    halo = _round_up(offsets[-1], 8)
    win = tm + halo

    # Single fused pad (tail rows for shifted reads + K pad), then overlapping
    # per-tile windows.  XLA fuses the cast/pad/slices into one gather pass.
    a = jnp.pad(z_flat.astype(jnp.bfloat16),
                ((0, rows_pad + halo - n_rows), (0, kw - k)))
    windows = jnp.stack([a[i * tm:i * tm + win] for i in range(n_tiles)])

    has_skip = skip is not None
    has_head = head_w is not None
    c_final = head_w.shape[1] if has_head else c_tot

    inputs = [windows, w_packed, bias]
    in_specs = [
        pl.BlockSpec((None, win, kw), lambda i: (i, 0, 0)),     # streamed
        pl.BlockSpec((n_off, kw, c_tot), lambda i: (0, 0, 0)),  # resident
        pl.BlockSpec((1, c_tot), lambda i: (0, 0)),             # resident
    ]
    if has_skip:
        inputs.append(jnp.pad(skip.astype(jnp.bfloat16),
                              ((0, rows_pad - skip.shape[0]), (0, 0))))
        in_specs.append(pl.BlockSpec((tm, c_tot), lambda i: (i, 0)))
    if has_head:
        inputs += [head_w, head_b]
        in_specs += [pl.BlockSpec(head_w.shape, lambda i: (0, 0)),
                     pl.BlockSpec((1, c_final), lambda i: (0, 0))]

    kernel = functools.partial(
        _tap_conv_kernel, offsets=offsets, tile_m=tm, relu=relu,
        has_skip=has_skip, has_head=has_head)

    out = pl.pallas_call(
        kernel,
        out_shape=jax.ShapeDtypeStruct((rows_pad, c_final), out_dtype),
        grid=(n_tiles,),
        in_specs=in_specs,
        out_specs=pl.BlockSpec((tm, c_final), lambda i: (i, 0)),
        compiler_params=pltpu.CompilerParams(
            dimension_semantics=("parallel",),
            vmem_limit_bytes=_VMEM_LIMIT_BYTES),
    )(*inputs)
    # NOTE: rows near right/bottom image edges and across batch boundaries are
    # intentionally contaminated (they read into the next flattened row /
    # image); they are discarded by this crop + the [:H, :W] crops in
    # fcn_forward.  Do not remove those crops.
    return out[:n_rows]


# ---------------------------------------------------------------------------
# One-time weight repacking (hoisted out of the forward pass)
# ---------------------------------------------------------------------------
def _pack_strided_conv(w, b, scale=None):
    """Conv2d(Cin->Cout, 3x3, stride=2, pad=1) -> 4 space-to-depth taps packed
    as (4, K, Cout) with K = round_up(4*Cin, 8); tap order matches the kernel
    offsets (0, 1, wi, wi+1) <-> (dy, dx) = (0,0),(0,1),(1,0),(1,1)."""
    cout, cin = w.shape[:2]
    if scale is not None:
        w = w * scale[None, :, None, None]               # fold 1/std
    kpad = _round_up(4 * cin, 8)
    mats = []
    for dy in (0, 1):
        for dx in (0, 1):
            m = jnp.zeros((2, 2, cin, cout), jnp.float32)
            for py in (0, 1):
                for px in (0, 1):
                    ky, kx = 2 * dy + py, 2 * dx + px
                    if ky <= 2 and kx <= 2:
                        m = m.at[py, px].set(w[:, :, ky, kx].T)
            m = jnp.pad(m.reshape(4 * cin, cout), ((0, kpad - 4 * cin), (0, 0)))
            mats.append(m)
    wp = jnp.stack(mats)                                  # (4, K, Cout)
    return wp.astype(jnp.bfloat16), b.reshape(1, -1).astype(jnp.float32)


# (output parity r, input offset d) -> kernel index (None = no tap)
_DECONV_K = {(0, 0): 1, (0, 1): None, (1, 0): 2, (1, 1): 0}


def _pack_deconv(w, b):
    """ConvTranspose2d(Cin->Cout, 3x3, stride=2, pad=1, out_pad=1) packed as
    (4, Cin, 4*Cout): one (Cin, 4*Cout) matrix per input offset d=(dy,dx),
    whose column block g=(ry,rx) holds the sub-pixel tap (zero if absent)."""
    cin, cout = w.shape[:2]
    mats = []
    for dy in (0, 1):
        for dx in (0, 1):
            blocks = []
            for ry in (0, 1):
                for rx in (0, 1):
                    ky, kx = _DECONV_K[(ry, dy)], _DECONV_K[(rx, dx)]
                    if ky is None or kx is None:
                        blocks.append(jnp.zeros((cin, cout), jnp.float32))
                    else:
                        blocks.append(w[:, :, ky, kx])    # (Cin, Cout)
            mats.append(jnp.concatenate(blocks, axis=1))  # (Cin, 4*Cout)
    wp = jnp.stack(mats)                                  # (4, Cin, 4*Cout)
    bias = jnp.tile(b.reshape(1, -1), (1, 4)).astype(jnp.float32)
    return wp.astype(jnp.bfloat16), bias


def pack_fcn_params(p):
    packed = {}
    packed["conv1_w"], packed["conv1_b"] = _pack_strided_conv(
        p["conv1_w"], p["conv1_b"], scale=1.0 / _STD)     # 1/std folded in
    packed["conv2_w"], packed["conv2_b"] = _pack_strided_conv(
        p["conv2_w"], p["conv2_b"])
    packed["up1_w"], packed["up1_b"] = _pack_deconv(p["up1_w"], p["up1_b"])
    packed["up2_w"], packed["up2_b"] = _pack_deconv(p["up2_w"], p["up2_b"])

    # 1x1 head (16 -> 5), padded to 8 classes, block-diagonal over the 4
    # output-pixel parities of up2 -> applied once per tile on (TM, 64).
    hw = p["head_w"].reshape(p["head_w"].shape[0], -1).T  # (16, 5)
    hw = jnp.pad(hw, ((0, 0), (0, 8 - hw.shape[1])))      # (16, 8)
    hbd = jnp.zeros((64, 32), jnp.float32)
    for g in range(4):
        hbd = hbd.at[g * 16:(g + 1) * 16, g * 8:(g + 1) * 8].set(hw)
    packed["head_w"] = hbd.astype(jnp.bfloat16)
    hb = jnp.pad(p["head_b"], (0, 8 - p["head_b"].shape[0]))
    packed["head_b"] = jnp.tile(hb, 4).reshape(1, 32).astype(jnp.float32)
    return packed


# ---------------------------------------------------------------------------
# FCN parameters (PyTorch layouts) and forward pass
# ---------------------------------------------------------------------------
def init_fcn_params(key):
    ks = jax.random.split(key, 5)

    def w(k, shape):
        return jax.random.normal(k, shape, jnp.float32) * 0.1

    return {
        "conv1_w": w(ks[0], (16, 3, 3, 3)),  "conv1_b": jnp.zeros((16,), jnp.float32),
        "conv2_w": w(ks[1], (32, 16, 3, 3)), "conv2_b": jnp.zeros((32,), jnp.float32),
        # ConvTranspose2d weight layout: (C_in, C_out, kh, kw)
        "up1_w":   w(ks[2], (32, 16, 3, 3)), "up1_b":   jnp.zeros((16,), jnp.float32),
        "up2_w":   w(ks[3], (16, 16, 3, 3)), "up2_b":   jnp.zeros((16,), jnp.float32),
        "head_w":  w(ks[4], (5, 16, 1, 1)),  "head_b":  jnp.zeros((5,), jnp.float32),
    }


def _space_to_depth2(x):
    """(B, 2H, 2W, C) -> (B, H, W, 4C), channel order (py, px, c)."""
    b, h, w, c = x.shape
    x = x.reshape(b, h // 2, 2, w // 2, 2, c).transpose(0, 1, 3, 2, 4, 5)
    return x.reshape(b, h // 2, w // 2, 4 * c)


def fcn_forward(packed, x):
    """x: (B, 3, H, W) float32 -> (B, 5, H, W) float32 (H, W multiples of 4)."""
    b, _, h, w = x.shape
    if h % 4 or w % 4:
        # TODO(synk): support odd spatial sizes (floor-division strided convs).
        raise ValueError("H and W must be multiples of 4")
    h2, w2, h4, w4 = h // 2, w // 2, h // 4, w // 4

    # Normalization: mean subtracted here (fused by XLA with the one entry
    # layout change); 1/std is folded into the packed conv1 weights.
    x0 = x.transpose(0, 2, 3, 1) - _MEAN                  # NHWC, f32

    # --- conv1: 3x3 stride 2, 3 -> 16, ReLU (2x2 conv over space-to-depth) ---
    xs = _space_to_depth2(jnp.pad(x0, ((0, 0), (1, 1), (1, 1), (0, 0))))
    hi, wi = h2 + 1, w2 + 1
    o = tap_conv(xs.reshape(b * hi * wi, -1), wi,
                 packed["conv1_w"], packed["conv1_b"], relu=True)
    d1 = o.reshape(b, hi, wi, 16)[:, :h2, :w2, :]

    # --- conv2: 3x3 stride 2, 16 -> 32, ReLU ---
    xs = _space_to_depth2(jnp.pad(d1, ((0, 0), (1, 1), (1, 1), (0, 0))))
    hi, wi = h4 + 1, w4 + 1
    o = tap_conv(xs.reshape(b * hi * wi, -1), wi,
                 packed["conv2_w"], packed["conv2_b"], relu=True)
    d2 = o.reshape(b, hi, wi, 32)[:, :h4, :w4, :]

    # --- up1: stride-2 up-conv 32 -> 16, ReLU, fused skip add of d1 ---
    hi, wi = h4 + 1, w4 + 1
    z = jnp.pad(d2, ((0, 0), (0, 1), (0, 1), (0, 0)))
    skip = jnp.pad(_space_to_depth2(d1),                   # parity-split d1
                   ((0, 0), (0, 1), (0, 1), (0, 0))).reshape(b * hi * wi, 64)
    o = tap_conv(z.reshape(b * hi * wi, 32), wi,
                 packed["up1_w"], packed["up1_b"], relu=True, skip=skip)
    u1 = o.reshape(b, hi, wi, 2, 2, 16)[:, :h4, :w4]
    u1 = u1.transpose(0, 1, 3, 2, 4, 5).reshape(b, h2, w2, 16)

    # --- up2: stride-2 up-conv 16 -> 16, ReLU, fused 1x1 head -> 5 classes ---
    hi, wi = h2 + 1, w2 + 1
    z = jnp.pad(u1, ((0, 0), (0, 1), (0, 1), (0, 0)))
    o = tap_conv(z.reshape(b * hi * wi, 16), wi,
                 packed["up2_w"], packed["up2_b"], relu=True,
                 head_w=packed["head_w"], head_b=packed["head_b"],
                 out_dtype=jnp.float32)
    yp = o.reshape(b, hi, wi, 2, 2, 8)[:, :h2, :w2, :, :, :5]
    y = yp.transpose(0, 1, 3, 2, 4, 5).reshape(b, h, w, 5)
    return y.transpose(0, 3, 1, 2)                         # (B, 5, H, W)


if __name__ == "__main__":
    key = jax.random.PRNGKey(0)
    k_param, k_input = jax.random.split(key)
    params = init_fcn_params(k_param)
    packed = pack_fcn_params(params)       # one-time repack, outside forward
    x = jax.random.normal(k_input, (2, 3, 16, 16), jnp.float32)

    fwd = jax.jit(fcn_forward)
    out = jax.block_until_ready(fwd(packed, x))
    assert out.shape == (2, 5, 16, 16), out.shape
    assert out.dtype == jnp.float32
    assert bool(jnp.all(jnp.isfinite(out)))
    print("KERNEL_OK")
</pallas_src>

<mosaic_0001>
module attributes {stable_mosaic.version = 11 : i64} {
  func.func @_tap_conv_kernel(%arg0: i32, %arg1: memref<1x184x16xbf16, #tpu.memory_space<vmem>>, %arg2: memref<4x16x16xbf16, #tpu.memory_space<vmem>>, %arg3: memref<1x16xf32, #tpu.memory_space<vmem>>, %arg4: memref<168x16xbf16, #tpu.memory_space<vmem>>) attributes {dimension_semantics = [#tpu.dimension_semantics<parallel>], iteration_bounds = array<i64: 1>, scalar_prefetch = 0 : i64, scratch_operands = 0 : i64, tpu.core_type = #tpu.core_type<tc>, window_params = [{transform_indices = @transform_0, window_bounds = array<i64: 1, 184, 16>}, {pipeline_mode = #tpu.pipeline_mode<synchronous>, transform_indices = @transform_1, window_bounds = array<i64: 4, 16, 16>}, {pipeline_mode = #tpu.pipeline_mode<synchronous>, transform_indices = @transform_2, window_bounds = array<i64: 1, 16>}, {transform_indices = @transform_3, window_bounds = array<i64: 168, 16>}]} {
    %c0 = arith.constant 0 : index
    %c0_0 = arith.constant 0 : index
    %c0_1 = arith.constant 0 : index
    %0 = vector.load %arg1[%c0, %c0_0, %c0_1] : memref<1x184x16xbf16, #tpu.memory_space<vmem>>, vector<1x168x16xbf16>
    %1 = vector.shape_cast %0 : vector<1x168x16xbf16> to vector<168x16xbf16>
    %c0_2 = arith.constant 0 : index
    %c0_3 = arith.constant 0 : index
    %c0_4 = arith.constant 0 : index
    %2 = vector.load %arg2[%c0_2, %c0_3, %c0_4] : memref<4x16x16xbf16, #tpu.memory_space<vmem>>, vector<1x16x16xbf16>
    %3 = vector.shape_cast %2 : vector<1x16x16xbf16> to vector<16x16xbf16>
    %cst = arith.constant dense<0.000000e+00> : vector<168x16xf32>
    %4 = tpu.matmul %1, %3, %cst {dimension_numbers = #tpu.dot_dimension_numbers<[1], [0], [0], [1], [0, 0, 1, 1], [], []>} : vector<168x16xbf16>, vector<16x16xbf16>, vector<168x16xf32> -> vector<168x16xf32>
    %c0_5 = arith.constant 0 : index
    %c1 = arith.constant 1 : index
    %c0_6 = arith.constant 0 : index
    %5 = vector.load %arg1[%c0_5, %c1, %c0_6] : memref<1x184x16xbf16, #tpu.memory_space<vmem>>, vector<1x168x16xbf16>
    %6 = vector.shape_cast %5 : vector<1x168x16xbf16> to vector<168x16xbf16>
    %c1_7 = arith.constant 1 : index
    %c0_8 = arith.constant 0 : index
    %c0_9 = arith.constant 0 : index
    %7 = vector.load %arg2[%c1_7, %c0_8, %c0_9] : memref<4x16x16xbf16, #tpu.memory_space<vmem>>, vector<1x16x16xbf16>
    %8 = vector.shape_cast %7 : vector<1x16x16xbf16> to vector<16x16xbf16>
    %cst_10 = arith.constant dense<0.000000e+00> : vector<168x16xf32>
    %9 = tpu.matmul %6, %8, %cst_10 {dimension_numbers = #tpu.dot_dimension_numbers<[1], [0], [0], [1], [0, 0, 1, 1], [], []>} : vector<168x16xbf16>, vector<16x16xbf16>, vector<168x16xf32> -> vector<168x16xf32>
    %10 = arith.addf %4, %9 : vector<168x16xf32>
    %c0_11 = arith.constant 0 : index
    %c9 = arith.constant 9 : index
    %c0_12 = arith.constant 0 : index
    %11 = vector.load %arg1[%c0_11, %c9, %c0_12] : memref<1x184x16xbf16, #tpu.memory_space<vmem>>, vector<1x168x16xbf16>
    %12 = vector.shape_cast %11 : vector<1x168x16xbf16> to vector<168x16xbf16>
    %c2 = arith.constant 2 : index
    %c0_13 = arith.constant 0 : index
    %c0_14 = arith.constant 0 : index
    %13 = vector.load %arg2[%c2, %c0_13, %c0_14] : memref<4x16x16xbf16, #tpu.memory_space<vmem>>, vector<1x16x16xbf16>
    %14 = vector.shape_cast %13 : vector<1x16x16xbf16> to vector<16x16xbf16>
    %cst_15 = arith.constant dense<0.000000e+00> : vector<168x16xf32>
    %15 = tpu.matmul %12, %14, %cst_15 {dimension_numbers = #tpu.dot_dimension_numbers<[1], [0], [0], [1], [0, 0, 1, 1], [], []>} : vector<168x16xbf16>, vector<16x16xbf16>, vector<168x16xf32> -> vector<168x16xf32>
    %16 = arith.addf %10, %15 : vector<168x16xf32>
    %c0_16 = arith.constant 0 : index
    %c10 = arith.constant 10 : index
    %c0_17 = arith.constant 0 : index
    %17 = vector.load %arg1[%c0_16, %c10, %c0_17] : memref<1x184x16xbf16, #tpu.memory_space<vmem>>, vector<1x168x16xbf16>
    %18 = vector.shape_cast %17 : vector<1x168x16xbf16> to vector<168x16xbf16>
    %c3 = arith.constant 3 : index
    %c0_18 = arith.constant 0 : index
    %c0_19 = arith.constant 0 : index
    %19 = vector.load %arg2[%c3, %c0_18, %c0_19] : memref<4x16x16xbf16, #tpu.memory_space<vmem>>, vector<1x16x16xbf16>
    %20 = vector.shape_cast %19 : vector<1x16x16xbf16> to vector<16x16xbf16>
    %cst_20 = arith.constant dense<0.000000e+00> : vector<168x16xf32>
    %21 = tpu.matmul %18, %20, %cst_20 {dimension_numbers = #tpu.dot_dimension_numbers<[1], [0], [0], [1], [0, 0, 1, 1], [], []>} : vector<168x16xbf16>, vector<16x16xbf16>, vector<168x16xf32> -> vector<168x16xf32>
    %22 = arith.addf %16, %21 : vector<168x16xf32>
    %c0_21 = arith.constant 0 : index
    %c0_22 = arith.constant 0 : index
    %23 = vector.load %arg3[%c0_21, %c0_22] : memref<1x16xf32, #tpu.memory_space<vmem>>, vector<1x16xf32>
    %24 = vector.broadcast %23 : vector<1x16xf32> to vector<168x16xf32>
    %25 = arith.addf %22, %24 : vector<168x16xf32>
    %cst_23 = arith.constant 0.000000e+00 : f32
    %26 = vector.broadcast %cst_23 : f32 to vector<168x16xf32>
    %27 = arith.maximumf %25, %26 : vector<168x16xf32>
    %28 = arith.truncf %27 : vector<168x16xf32> to vector<168x16xbf16>
    %c0_24 = arith.constant 0 : index
    %c0_25 = arith.constant 0 : index
    %29 = vector.load %arg4[%c0_24, %c0_25] : memref<168x16xbf16, #tpu.memory_space<vmem>>, vector<168x16xbf16>
    tpu.vector_store %arg4[%c0_24, %c0_25], %28 {strides = array<i32>} : memref<168x16xbf16, #tpu.memory_space<vmem>>, vector<168x16xbf16>,
    return
  }
  func.func @transform_0(%arg0: i32) -> (i32, i32, i32) {
    %c0_i32 = arith.constant 0 : i32
    %c0_i32_0 = arith.constant 0 : i32
    %c0_i32_1 = arith.constant 0 : i32
    return %arg0, %c0_i32, %c0_i32_0 : i32, i32, i32
  }
  func.func @transform_1(%arg0: i32) -> (i32, i32, i32) {
    %c0_i32 = arith.constant 0 : i32
    %c0_i32_0 = arith.constant 0 : i32
    %c0_i32_1 = arith.constant 0 : i32
    %c0_i32_2 = arith.constant 0 : i32
    return %c0_i32, %c0_i32_0, %c0_i32_1 : i32, i32, i32
  }
  func.func @transform_2(%arg0: i32) -> (i32, i32) {
    %c0_i32 = arith.constant 0 : i32
    %c0_i32_0 = arith.constant 0 : i32
    %c0_i32_1 = arith.constant 0 : i32
    return %c0_i32, %c0_i32_0 : i32, i32
  }
  func.func @transform_3(%arg0: i32) -> (i32, i32) {
    %c0_i32 = arith.constant 0 : i32
    %c0_i32_0 = arith.constant 0 : i32
    return %arg0, %c0_i32 : i32, i32
  }
}

module attributes {stable_mosaic.version = 11 : i64} {
  func.func @_tap_conv_kernel(%arg0: i32, %arg1: memref<1x64x64xbf16, #tpu.memory_space<vmem>>, %arg2: memref<4x64x32xbf16, #tpu.memory_space<vmem>>, %arg3: memref<1x32xf32, #tpu.memory_space<vmem>>, %arg4: memref<56x32xbf16, #tpu.memory_space<vmem>>) attributes {dimension_semantics = [#tpu.dimension_semantics<parallel>], iteration_bounds = array<i64: 1>, scalar_prefetch = 0 : i64, scratch_operands = 0 : i64, tpu.core_type = #tpu.core_type<tc>, window_params = [{transform_indices = @transform_0, window_bounds = array<i64: 1, 64, 64>}, {pipeline_mode = #tpu.pipeline_mode<synchronous>, transform_indices = @transform_1, window_bounds = array<i64: 4, 64, 32>}, {pipeline_mode = #tpu.pipeline_mode<synchronous>, transform_indices = @transform_2, window_bounds = array<i64: 1, 32>}, {transform_indices = @transform_3, window_bounds = array<i64: 56, 32>}]} {
    %c0 = arith.constant 0 : index
    %c0_0 = arith.constant 0 : index
    %c0_1 = arith.constant 0 : index
    %0 = vector.load %arg1[%c0, %c0_0, %c0_1] : memref<1x64x64xbf16, #tpu.memory_space<vmem>>, vector<1x56x64xbf16>
    %1 = vector.shape_cast %0 : vector<1x56x64xbf16> to vector<56x64xbf16>
    %c0_2 = arith.constant 0 : index
    %c0_3 = arith.constant 0 : index
    %c0_4 = arith.constant 0 : index
    %2 = vector.load %arg2[%c0_2, %c0_3, %c0_4] : memref<4x64x32xbf16, #tpu.memory_space<vmem>>, vector<1x64x32xbf16>
    %3 = vector.shape_cast %2 : vector<1x64x32xbf16> to vector<64x32xbf16>
    %cst = arith.constant dense<0.000000e+00> : vector<56x32xf32>
    %4 = tpu.matmul %1, %3, %cst {dimension_numbers = #tpu.dot_dimension_numbers<[1], [0], [0], [1], [0, 0, 1, 1], [], []>} : vector<56x64xbf16>, vector<64x32xbf16>, vector<56x32xf32> -> vector<56x32xf32>
    %c0_5 = arith.constant 0 : index
    %c1 = arith.constant 1 : index
    %c0_6 = arith.constant 0 : index
    %5 = vector.load %arg1[%c0_5, %c1, %c0_6] : memref<1x64x64xbf16, #tpu.memory_space<vmem>>, vector<1x56x64xbf16>
    %6 = vector.shape_cast %5 : vector<1x56x64xbf16> to vector<56x64xbf16>
    %c1_7 = arith.constant 1 : index
    %c0_8 = arith.constant 0 : index
    %c0_9 = arith.constant 0 : index
    %7 = vector.load %arg2[%c1_7, %c0_8, %c0_9] : memref<4x64x32xbf16, #tpu.memory_space<vmem>>, vector<1x64x32xbf16>
    %8 = vector.shape_cast %7 : vector<1x64x32xbf16> to vector<64x32xbf16>
    %cst_10 = arith.constant dense<0.000000e+00> : vector<56x32xf32>
    %9 = tpu.matmul %6, %8, %cst_10 {dimension_numbers = #tpu.dot_dimension_numbers<[1], [0], [0], [1], [0, 0, 1, 1], [], []>} : vector<56x64xbf16>, vector<64x32xbf16>, vector<56x32xf32> -> vector<56x32xf32>
    %10 = arith.addf %4, %9 : vector<56x32xf32>
    %c0_11 = arith.constant 0 : index
    %c5 = arith.constant 5 : index
    %c0_12 = arith.constant 0 : index
    %11 = vector.load %arg1[%c0_11, %c5, %c0_12] : memref<1x64x64xbf16, #tpu.memory_space<vmem>>, vector<1x56x64xbf16>
    %12 = vector.shape_cast %11 : vector<1x56x64xbf16> to vector<56x64xbf16>
    %c2 = arith.constant 2 : index
    %c0_13 = arith.constant 0 : index
    %c0_14 = arith.constant 0 : index
    %13 = vector.load %arg2[%c2, %c0_13, %c0_14] : memref<4x64x32xbf16, #tpu.memory_space<vmem>>, vector<1x64x32xbf16>
    %14 = vector.shape_cast %13 : vector<1x64x32xbf16> to vector<64x32xbf16>
    %cst_15 = arith.constant dense<0.000000e+00> : vector<56x32xf32>
    %15 = tpu.matmul %12, %14, %cst_15 {dimension_numbers = #tpu.dot_dimension_numbers<[1], [0], [0], [1], [0, 0, 1, 1], [], []>} : vector<56x64xbf16>, vector<64x32xbf16>, vector<56x32xf32> -> vector<56x32xf32>
    %16 = arith.addf %10, %15 : vector<56x32xf32>
    %c0_16 = arith.constant 0 : index
    %c6 = arith.constant 6 : index
    %c0_17 = arith.constant 0 : index
    %17 = vector.load %arg1[%c0_16, %c6, %c0_17] : memref<1x64x64xbf16, #tpu.memory_space<vmem>>, vector<1x56x64xbf16>
    %18 = vector.shape_cast %17 : vector<1x56x64xbf16> to vector<56x64xbf16>
    %c3 = arith.constant 3 : index
    %c0_18 = arith.constant 0 : index
    %c0_19 = arith.constant 0 : index
    %19 = vector.load %arg2[%c3, %c0_18, %c0_19] : memref<4x64x32xbf16, #tpu.memory_space<vmem>>, vector<1x64x32xbf16>
    %20 = vector.shape_cast %19 : vector<1x64x32xbf16> to vector<64x32xbf16>
    %cst_20 = arith.constant dense<0.000000e+00> : vector<56x32xf32>
    %21 = tpu.matmul %18, %20, %cst_20 {dimension_numbers = #tpu.dot_dimension_numbers<[1], [0], [0], [1], [0, 0, 1, 1], [], []>} : vector<56x64xbf16>, vector<64x32xbf16>, vector<56x32xf32> -> vector<56x32xf32>
    %22 = arith.addf %16, %21 : vector<56x32xf32>
    %c0_21 = arith.constant 0 : index
    %c0_22 = arith.constant 0 : index
    %23 = vector.load %arg3[%c0_21, %c0_22] : memref<1x32xf32, #tpu.memory_space<vmem>>, vector<1x32xf32>
    %24 = vector.broadcast %23 : vector<1x32xf32> to vector<56x32xf32>
    %25 = arith.addf %22, %24 : vector<56x32xf32>
    %cst_23 = arith.constant 0.000000e+00 : f32
    %26 = vector.broadcast %cst_23 : f32 to vector<56x32xf32>
    %27 = arith.maximumf %25, %26 : vector<56x32xf32>
    %28 = arith.truncf %27 : vector<56x32xf32> to vector<56x32xbf16>
    %c0_24 = arith.constant 0 : index
    %c0_25 = arith.constant 0 : index
    %29 = vector.load %arg4[%c0_24, %c0_25] : memref<56x32xbf16, #tpu.memory_space<vmem>>, vector<56x32xbf16>
    tpu.vector_store %arg4[%c0_24, %c0_25], %28 {strides = array<i32>} : memref<56x32xbf16, #tpu.memory_space<vmem>>, vector<56x32xbf16>,
    return
  }
  func.func @transform_0(%arg0: i32) -> (i32, i32, i32) {
    %c0_i32 = arith.constant 0 : i32
    %c0_i32_0 = arith.constant 0 : i32
    %c0_i32_1 = arith.constant 0 : i32
    return %arg0, %c0_i32, %c0_i32_0 : i32, i32, i32
  }
  func.func @transform_1(%arg0: i32) -> (i32, i32, i32) {
    %c0_i32 = arith.constant 0 : i32
    %c0_i32_0 = arith.constant 0 : i32
    %c0_i32_1 = arith.constant 0 : i32
    %c0_i32_2 = arith.constant 0 : i32
    return %c0_i32, %c0_i32_0, %c0_i32_1 : i32, i32, i32
  }
  func.func @transform_2(%arg0: i32) -> (i32, i32) {
    %c0_i32 = arith.constant 0 : i32
    %c0_i32_0 = arith.constant 0 : i32
    %c0_i32_1 = arith.constant 0 : i32
    return %c0_i32, %c0_i32_0 : i32, i32
  }
  func.func @transform_3(%arg0: i32) -> (i32, i32) {
    %c0_i32 = arith.constant 0 : i32
    %c0_i32_0 = arith.constant 0 : i32
    return %arg0, %c0_i32 : i32, i32
  }
}

module attributes {stable_mosaic.version = 11 : i64} {
  func.func @_tap_conv_kernel(%arg0: i32, %arg1: memref<1x64x32xbf16, #tpu.memory_space<vmem>>, %arg2: memref<4x32x64xbf16, #tpu.memory_space<vmem>>, %arg3: memref<1x64xf32, #tpu.memory_space<vmem>>, %arg4: memref<56x64xbf16, #tpu.memory_space<vmem>>, %arg5: memref<56x64xbf16, #tpu.memory_space<vmem>>) attributes {dimension_semantics = [#tpu.dimension_semantics<parallel>], iteration_bounds = array<i64: 1>, scalar_prefetch = 0 : i64, scratch_operands = 0 : i64, tpu.core_type = #tpu.core_type<tc>, window_params = [{transform_indices = @transform_0, window_bounds = array<i64: 1, 64, 32>}, {pipeline_mode = #tpu.pipeline_mode<synchronous>, transform_indices = @transform_1, window_bounds = array<i64: 4, 32, 64>}, {pipeline_mode = #tpu.pipeline_mode<synchronous>, transform_indices = @transform_2, window_bounds = array<i64: 1, 64>}, {transform_indices = @transform_3, window_bounds = array<i64: 56, 64>}, {transform_indices = @transform_4, window_bounds = array<i64: 56, 64>}]} {
    %c0 = arith.constant 0 : index
    %c0_0 = arith.constant 0 : index
    %c0_1 = arith.constant 0 : index
    %0 = vector.load %arg1[%c0, %c0_0, %c0_1] : memref<1x64x32xbf16, #tpu.memory_space<vmem>>, vector<1x56x32xbf16>
    %1 = vector.shape_cast %0 : vector<1x56x32xbf16> to vector<56x32xbf16>
    %c0_2 = arith.constant 0 : index
    %c0_3 = arith.constant 0 : index
    %c0_4 = arith.constant 0 : index
    %2 = vector.load %arg2[%c0_2, %c0_3, %c0_4] : memref<4x32x64xbf16, #tpu.memory_space<vmem>>, vector<1x32x64xbf16>
    %3 = vector.shape_cast %2 : vector<1x32x64xbf16> to vector<32x64xbf16>
    %cst = arith.constant dense<0.000000e+00> : vector<56x64xf32>
    %4 = tpu.matmul %1, %3, %cst {dimension_numbers = #tpu.dot_dimension_numbers<[1], [0], [0], [1], [0, 0, 1, 1], [], []>} : vector<56x32xbf16>, vector<32x64xbf16>, vector<56x64xf32> -> vector<56x64xf32>
    %c0_5 = arith.constant 0 : index
    %c1 = arith.constant 1 : index
    %c0_6 = arith.constant 0 : index
    %5 = vector.load %arg1[%c0_5, %c1, %c0_6] : memref<1x64x32xbf16, #tpu.memory_space<vmem>>, vector<1x56x32xbf16>
    %6 = vector.shape_cast %5 : vector<1x56x32xbf16> to vector<56x32xbf16>
    %c1_7 = arith.constant 1 : index
    %c0_8 = arith.constant 0 : index
    %c0_9 = arith.constant 0 : index
    %7 = vector.load %arg2[%c1_7, %c0_8, %c0_9] : memref<4x32x64xbf16, #tpu.memory_space<vmem>>, vector<1x32x64xbf16>
    %8 = vector.shape_cast %7 : vector<1x32x64xbf16> to vector<32x64xbf16>
    %cst_10 = arith.constant dense<0.000000e+00> : vector<56x64xf32>
    %9 = tpu.matmul %6, %8, %cst_10 {dimension_numbers = #tpu.dot_dimension_numbers<[1], [0], [0], [1], [0, 0, 1, 1], [], []>} : vector<56x32xbf16>, vector<32x64xbf16>, vector<56x64xf32> -> vector<56x64xf32>
    %10 = arith.addf %4, %9 : vector<56x64xf32>
    %c0_11 = arith.constant 0 : index
    %c5 = arith.constant 5 : index
    %c0_12 = arith.constant 0 : index
    %11 = vector.load %arg1[%c0_11, %c5, %c0_12] : memref<1x64x32xbf16, #tpu.memory_space<vmem>>, vector<1x56x32xbf16>
    %12 = vector.shape_cast %11 : vector<1x56x32xbf16> to vector<56x32xbf16>
    %c2 = arith.constant 2 : index
    %c0_13 = arith.constant 0 : index
    %c0_14 = arith.constant 0 : index
    %13 = vector.load %arg2[%c2, %c0_13, %c0_14] : memref<4x32x64xbf16, #tpu.memory_space<vmem>>, vector<1x32x64xbf16>
    %14 = vector.shape_cast %13 : vector<1x32x64xbf16> to vector<32x64xbf16>
    %cst_15 = arith.constant dense<0.000000e+00> : vector<56x64xf32>
    %15 = tpu.matmul %12, %14, %cst_15 {dimension_numbers = #tpu.dot_dimension_numbers<[1], [0], [0], [1], [0, 0, 1, 1], [], []>} : vector<56x32xbf16>, vector<32x64xbf16>, vector<56x64xf32> -> vector<56x64xf32>
    %16 = arith.addf %10, %15 : vector<56x64xf32>
    %c0_16 = arith.constant 0 : index
    %c6 = arith.constant 6 : index
    %c0_17 = arith.constant 0 : index
    %17 = vector.load %arg1[%c0_16, %c6, %c0_17] : memref<1x64x32xbf16, #tpu.memory_space<vmem>>, vector<1x56x32xbf16>
    %18 = vector.shape_cast %17 : vector<1x56x32xbf16> to vector<56x32xbf16>
    %c3 = arith.constant 3 : index
    %c0_18 = arith.constant 0 : index
    %c0_19 = arith.constant 0 : index
    %19 = vector.load %arg2[%c3, %c0_18, %c0_19] : memref<4x32x64xbf16, #tpu.memory_space<vmem>>, vector<1x32x64xbf16>
    %20 = vector.shape_cast %19 : vector<1x32x64xbf16> to vector<32x64xbf16>
    %cst_20 = arith.constant dense<0.000000e+00> : vector<56x64xf32>
    %21 = tpu.matmul %18, %20, %cst_20 {dimension_numbers = #tpu.dot_dimension_numbers<[1], [0], [0], [1], [0, 0, 1, 1], [], []>} : vector<56x32xbf16>, vector<32x64xbf16>, vector<56x64xf32> -> vector<56x64xf32>
    %22 = arith.addf %16, %21 : vector<56x64xf32>
    %c0_21 = arith.constant 0 : index
    %c0_22 = arith.constant 0 : index
    %23 = vector.load %arg3[%c0_21, %c0_22] : memref<1x64xf32, #tpu.memory_space<vmem>>, vector<1x64xf32>
    %24 = vector.broadcast %23 : vector<1x64xf32> to vector<56x64xf32>
    %25 = arith.addf %22, %24 : vector<56x64xf32>
    %cst_23 = arith.constant 0.000000e+00 : f32
    %26 = vector.broadcast %cst_23 : f32 to vector<56x64xf32>
    %27 = arith.maximumf %25, %26 : vector<56x64xf32>
    %c0_24 = arith.constant 0 : index
    %c0_25 = arith.constant 0 : index
    %28 = vector.load %arg4[%c0_24, %c0_25] : memref<56x64xbf16, #tpu.memory_space<vmem>>, vector<56x64xbf16>
    %29 = arith.extf %28 : vector<56x64xbf16> to vector<56x64xf32>
    %30 = arith.addf %27, %29 : vector<56x64xf32>
    %31 = arith.truncf %30 : vector<56x64xf32> to vector<56x64xbf16>
    %c0_26 = arith.constant 0 : index
    %c0_27 = arith.constant 0 : index
    %32 = vector.load %arg5[%c0_26, %c0_27] : memref<56x64xbf16, #tpu.memory_space<vmem>>, vector<56x64xbf16>
    tpu.vector_store %arg5[%c0_26, %c0_27], %31 {strides = array<i32>} : memref<56x64xbf16, #tpu.memory_space<vmem>>, vector<56x64xbf16>,
    return
  }
  func.func @transform_0(%arg0: i32) -> (i32, i32, i32) {
    %c0_i32 = arith.constant 0 : i32
    %c0_i32_0 = arith.constant 0 : i32
    %c0_i32_1 = arith.constant 0 : i32
    return %arg0, %c0_i32, %c0_i32_0 : i32, i32, i32
  }
  func.func @transform_1(%arg0: i32) -> (i32, i32, i32) {
    %c0_i32 = arith.constant 0 : i32
    %c0_i32_0 = arith.constant 0 : i32
    %c0_i32_1 = arith.constant 0 : i32
    %c0_i32_2 = arith.constant 0 : i32
    return %c0_i32, %c0_i32_0, %c0_i32_1 : i32, i32, i32
  }
  func.func @transform_2(%arg0: i32) -> (i32, i32) {
    %c0_i32 = arith.constant 0 : i32
    %c0_i32_0 = arith.constant 0 : i32
    %c0_i32_1 = arith.constant 0 : i32
    return %c0_i32, %c0_i32_0 : i32, i32
  }
  func.func @transform_3(%arg0: i32) -> (i32, i32) {
    %c0_i32 = arith.constant 0 : i32
    %c0_i32_0 = arith.constant 0 : i32
    return %arg0, %c0_i32 : i32, i32
  }
  func.func @transform_4(%arg0: i32) -> (i32, i32) {
    %c0_i32 = arith.constant 0 : i32
    %c0_i32_0 = arith.constant 0 : i32
    return %arg0, %c0_i32 : i32, i32
  }
}

module attributes {stable_mosaic.version = 11 : i64} {
  func.func @_tap_conv_kernel(%arg0: i32, %arg1: memref<1x184x16xbf16, #tpu.memory_space<vmem>>, %arg2: memref<4x16x64xbf16, #tpu.memory_space<vmem>>, %arg3: memref<1x64xf32, #tpu.memory_space<vmem>>, %arg4: memref<64x32xbf16, #tpu.memory_space<vmem>>, %arg5: memref<1x32xf32, #tpu.memory_space<vmem>>, %arg6: memref<168x32xf32, #tpu.memory_space<vmem>>) attributes {dimension_semantics = [#tpu.dimension_semantics<parallel>], iteration_bounds = array<i64: 1>, scalar_prefetch = 0 : i64, scratch_operands = 0 : i64, tpu.core_type = #tpu.core_type<tc>, window_params = [{transform_indices = @transform_0, window_bounds = array<i64: 1, 184, 16>}, {pipeline_mode = #tpu.pipeline_mode<synchronous>, transform_indices = @transform_1, window_bounds = array<i64: 4, 16, 64>}, {pipeline_mode = #tpu.pipeline_mode<synchronous>, transform_indices = @transform_2, window_bounds = array<i64: 1, 64>}, {pipeline_mode = #tpu.pipeline_mode<synchronous>, transform_indices = @transform_3, window_bounds = array<i64: 64, 32>}, {pipeline_mode = #tpu.pipeline_mode<synchronous>, transform_indices = @transform_4, window_bounds = array<i64: 1, 32>}, {transform_indices = @transform_5, window_bounds = array<i64: 168, 32>}]} {
    %c0 = arith.constant 0 : index
    %c0_0 = arith.constant 0 : index
    %c0_1 = arith.constant 0 : index
    %0 = vector.load %arg1[%c0, %c0_0, %c0_1] : memref<1x184x16xbf16, #tpu.memory_space<vmem>>, vector<1x168x16xbf16>
    %1 = vector.shape_cast %0 : vector<1x168x16xbf16> to vector<168x16xbf16>
    %c0_2 = arith.constant 0 : index
    %c0_3 = arith.constant 0 : index
    %c0_4 = arith.constant 0 : index
    %2 = vector.load %arg2[%c0_2, %c0_3, %c0_4] : memref<4x16x64xbf16, #tpu.memory_space<vmem>>, vector<1x16x64xbf16>
    %3 = vector.shape_cast %2 : vector<1x16x64xbf16> to vector<16x64xbf16>
    %cst = arith.constant dense<0.000000e+00> : vector<168x64xf32>
    %4 = tpu.matmul %1, %3, %cst {dimension_numbers = #tpu.dot_dimension_numbers<[1], [0], [0], [1], [0, 0, 1, 1], [], []>} : vector<168x16xbf16>, vector<16x64xbf16>, vector<168x64xf32> -> vector<168x64xf32>
    %c0_5 = arith.constant 0 : index
    %c1 = arith.constant 1 : index
    %c0_6 = arith.constant 0 : index
    %5 = vector.load %arg1[%c0_5, %c1, %c0_6] : memref<1x184x16xbf16, #tpu.memory_space<vmem>>, vector<1x168x16xbf16>
    %6 = vector.shape_cast %5 : vector<1x168x16xbf16> to vector<168x16xbf16>
    %c1_7 = arith.constant 1 : index
    %c0_8 = arith.constant 0 : index
    %c0_9 = arith.constant 0 : index
    %7 = vector.load %arg2[%c1_7, %c0_8, %c0_9] : memref<4x16x64xbf16, #tpu.memory_space<vmem>>, vector<1x16x64xbf16>
    %8 = vector.shape_cast %7 : vector<1x16x64xbf16> to vector<16x64xbf16>
    %cst_10 = arith.constant dense<0.000000e+00> : vector<168x64xf32>
    %9 = tpu.matmul %6, %8, %cst_10 {dimension_numbers = #tpu.dot_dimension_numbers<[1], [0], [0], [1], [0, 0, 1, 1], [], []>} : vector<168x16xbf16>, vector<16x64xbf16>, vector<168x64xf32> -> vector<168x64xf32>
    %10 = arith.addf %4, %9 : vector<168x64xf32>
    %c0_11 = arith.constant 0 : index
    %c9 = arith.constant 9 : index
    %c0_12 = arith.constant 0 : index
    %11 = vector.load %arg1[%c0_11, %c9, %c0_12] : memref<1x184x16xbf16, #tpu.memory_space<vmem>>, vector<1x168x16xbf16>
    %12 = vector.shape_cast %11 : vector<1x168x16xbf16> to vector<168x16xbf16>
    %c2 = arith.constant 2 : index
    %c0_13 = arith.constant 0 : index
    %c0_14 = arith.constant 0 : index
    %13 = vector.load %arg2[%c2, %c0_13, %c0_14] : memref<4x16x64xbf16, #tpu.memory_space<vmem>>, vector<1x16x64xbf16>
    %14 = vector.shape_cast %13 : vector<1x16x64xbf16> to vector<16x64xbf16>
    %cst_15 = arith.constant dense<0.000000e+00> : vector<168x64xf32>
    %15 = tpu.matmul %12, %14, %cst_15 {dimension_numbers = #tpu.dot_dimension_numbers<[1], [0], [0], [1], [0, 0, 1, 1], [], []>} : vector<168x16xbf16>, vector<16x64xbf16>, vector<168x64xf32> -> vector<168x64xf32>
    %16 = arith.addf %10, %15 : vector<168x64xf32>
    %c0_16 = arith.constant 0 : index
    %c10 = arith.constant 10 : index
    %c0_17 = arith.constant 0 : index
    %17 = vector.load %arg1[%c0_16, %c10, %c0_17] : memref<1x184x16xbf16, #tpu.memory_space<vmem>>, vector<1x168x16xbf16>
    %18 = vector.shape_cast %17 : vector<1x168x16xbf16> to vector<168x16xbf16>
    %c3 = arith.constant 3 : index
    %c0_18 = arith.constant 0 : index
    %c0_19 = arith.constant 0 : index
    %19 = vector.load %arg2[%c3, %c0_18, %c0_19] : memref<4x16x64xbf16, #tpu.memory_space<vmem>>, vector<1x16x64xbf16>
    %20 = vector.shape_cast %19 : vector<1x16x64xbf16> to vector<16x64xbf16>
    %cst_20 = arith.constant dense<0.000000e+00> : vector<168x64xf32>
    %21 = tpu.matmul %18, %20, %cst_20 {dimension_numbers = #tpu.dot_dimension_numbers<[1], [0], [0], [1], [0, 0, 1, 1], [], []>} : vector<168x16xbf16>, vector<16x64xbf16>, vector<168x64xf32> -> vector<168x64xf32>
    %22 = arith.addf %16, %21 : vector<168x64xf32>
    %c0_21 = arith.constant 0 : index
    %c0_22 = arith.constant 0 : index
    %23 = vector.load %arg3[%c0_21, %c0_22] : memref<1x64xf32, #tpu.memory_space<vmem>>, vector<1x64xf32>
    %24 = vector.broadcast %23 : vector<1x64xf32> to vector<168x64xf32>
    %25 = arith.addf %22, %24 : vector<168x64xf32>
    %cst_23 = arith.constant 0.000000e+00 : f32
    %26 = vector.broadcast %cst_23 : f32 to vector<168x64xf32>
    %27 = arith.maximumf %25, %26 : vector<168x64xf32>
    %28 = arith.truncf %27 : vector<168x64xf32> to vector<168x64xbf16>
    %c0_24 = arith.constant 0 : index
    %c0_25 = arith.constant 0 : index
    %29 = vector.load %arg4[%c0_24, %c0_25] : memref<64x32xbf16, #tpu.memory_space<vmem>>, vector<64x32xbf16>
    %cst_26 = arith.constant dense<0.000000e+00> : vector<168x32xf32>
    %30 = tpu.matmul %28, %29, %cst_26 {dimension_numbers = #tpu.dot_dimension_numbers<[1], [0], [0], [1], [0, 0, 1, 1], [], []>} : vector<168x64xbf16>, vector<64x32xbf16>, vector<168x32xf32> -> vector<168x32xf32>
    %c0_27 = arith.constant 0 : index
    %c0_28 = arith.constant 0 : index
    %31 = vector.load %arg5[%c0_27, %c0_28] : memref<1x32xf32, #tpu.memory_space<vmem>>, vector<1x32xf32>
    %32 = vector.broadcast %31 : vector<1x32xf32> to vector<168x32xf32>
    %33 = arith.addf %30, %32 : vector<168x32xf32>
    %c0_29 = arith.constant 0 : index
    %c0_30 = arith.constant 0 : index
    %34 = vector.load %arg6[%c0_29, %c0_30] : memref<168x32xf32, #tpu.memory_space<vmem>>, vector<168x32xf32>
    tpu.vector_store %arg6[%c0_29, %c0_30], %33 {strides = array<i32>} : memref<168x32xf32, #tpu.memory_space<vmem>>, vector<168x32xf32>,
    return
  }
  func.func @transform_0(%arg0: i32) -> (i32, i32, i32) {
    %c0_i32 = arith.constant 0 : i32
    %c0_i32_0 = arith.constant 0 : i32
    %c0_i32_1 = arith.constant 0 : i32
    return %arg0, %c0_i32, %c0_i32_0 : i32, i32, i32
  }
  func.func @transform_1(%arg0: i32) -> (i32, i32, i32) {
    %c0_i32 = arith.constant 0 : i32
    %c0_i32_0 = arith.constant 0 : i32
    %c0_i32_1 = arith.constant 0 : i32
    %c0_i32_2 = arith.constant 0 : i32
    return %c0_i32, %c0_i32_0, %c0_i32_1 : i32, i32, i32
  }
  func.func @transform_2(%arg0: i32) -> (i32, i32) {
    %c0_i32 = arith.constant 0 : i32
    %c0_i32_0 = arith.constant 0 : i32
    %c0_i32_1 = arith.constant 0 : i32
    return %c0_i32, %c0_i32_0 : i32, i32
  }
  func.func @transform_3(%arg0: i32) -> (i32, i32) {
    %c0_i32 = arith.constant 0 : i32
    %c0_i32_0 = arith.constant 0 : i32
    %c0_i32_1 = arith.constant 0 : i32
    return %c0_i32, %c0_i32_0 : i32, i32
  }
  func.func @transform_4(%arg0: i32) -> (i32, i32) {
    %c0_i32 = arith.constant 0 : i32
    %c0_i32_0 = arith.constant 0 : i32
    %c0_i32_1 = arith.constant 0 : i32
    return %c0_i32, %c0_i32_0 : i32, i32
  }
  func.func @transform_5(%arg0: i32) -> (i32, i32) {
    %c0_i32 = arith.constant 0 : i32
    %c0_i32_0 = arith.constant 0 : i32
    return %arg0, %c0_i32 : i32, i32
  }
}

</mosaic_0001>

<llo_original>
// kernel: fcn_forward.4
$region0: #{fcn_forward.4}
  #allocation0 [shape = 'u32[]', space=smem, size = 0x4, offset = 0x4, fixed_abs, tag = 'smem constant byte address 0x4 - core index']
  #allocation1 [shape = 'u32[144,128]{1,0:T(1,128)}', space=vmem, size = 0x12000, scoped, tag = 'internal scratch']
  %s0 = inlined_call_operand.vmem [shape: bf16[1,184,16], index: 0, kind: input, shape index: {}]
  %s1 = inlined_call_operand.vmem [shape: bf16[4,16,16], index: 1, kind: input, shape index: {}]
  %s2 = inlined_call_operand.vmem [shape: f32[1,16], index: 2, kind: input, shape index: {}]
  %s3 = inlined_call_operand.vmem [shape: bf16[168,16], index: 3, kind: output, shape index: {}]
  %s4 = sld [smem:[#allocation0]]
  $region22: #{fcn_forward.4} parent=0
    _
  %s6 = ssub.s32 1, %s4
  %s7 = scalar_select 0, %s6, %s4
  // Predicated region
  $region2: #{fcn_forward.4} parent=0 // pred_check
    _
  $region3: #{fcn_forward.4} parent=0 // pred_check_branch
    %9 = sbr.rel (0) target = $region5
  $region4: #{fcn_forward.4} parent=0 // pred_region
    _
  $region5: #{fcn_forward.4} parent=0 // pred_fallthru
    _
  // Predicated region
  $region6: #{fcn_forward.4} parent=0 // pred_check
    _
  $region7: #{fcn_forward.4} parent=0 // pred_check_branch
    %11 = sbr.rel (0) target = $region9
  $region8: #{fcn_forward.4} parent=0 // pred_region
    _
  $region9: #{fcn_forward.4} parent=0 // pred_fallthru
    _
  // Predicated region
  $region10: #{fcn_forward.4} parent=0 // pred_check
    _
  $region11: #{fcn_forward.4} parent=0 // pred_check_branch
    %13 = sbr.rel (0) target = $region13
  $region12: #{fcn_forward.4} parent=0 // pred_region
    _
  $region13: #{fcn_forward.4} parent=0 // pred_fallthru
    _
  %v15 = vld [vmem:[%s0] sm:$0xf]
  %v16 = vld [vmem:[%s0 + $0x4] sm:$0xf]
  %v17 = vld [vmem:[%s0 + $0x8] sm:$0xf]
  %v18 = vld [vmem:[%s0 + $0xc] sm:$0xf]
  %v19 = vld [vmem:[%s0 + $0x10] sm:$0xf]
  %v20 = vld [vmem:[%s0 + $0x14] sm:$0xf]
  %v21 = vld [vmem:[%s0 + $0x18] sm:$0xf]
  %v22 = vld [vmem:[%s0 + $0x1c] sm:$0xf]
  %v23 = vld [vmem:[%s0 + $0x20] sm:$0xf]
  %v24 = vld [vmem:[%s0 + $0x24] sm:$0xf]
  %v25 = vld [vmem:[%s0 + $0x28] sm:$0xf]
  %v26 = vld [vmem:[%s0 + $0x2c] sm:$0xf]
  %v27 = vld [vmem:[%s0 + $0x30] sm:$0xf]
  %v28 = vld [vmem:[%s0 + $0x34] sm:$0xf]
  %v29 = vld [vmem:[%s0 + $0x38] sm:$0xf]
  %v30 = vld [vmem:[%s0 + $0x3c] sm:$0xf]
  %v31 = vld [vmem:[%s0 + $0x40] sm:$0xf]
  %v32 = vld [vmem:[%s0 + $0x44] sm:$0xf]
  %v33 = vld [vmem:[%s0 + $0x48] sm:$0xf]
  %v34 = vld [vmem:[%s0 + $0x4c] sm:$0xf]
  %v35 = vld [vmem:[%s0 + $0x50] sm:$0xf]
  %v36 = vld [vmem:[%s1] sm:$0xf]
  %v37 = vld [vmem:[%s1 + $0x4] sm:$0xf]
  %v38 = vld [vmem:[%s0 + $0x54] sm:$0x1]
  %s39 = scalar_lea.vmem %s1, 8
  %v40 = vld [vmem:[%s39] sm:$0xf]
  %v41 = vld [vmem:[%s39 + $0x4] sm:$0xf]
  %v64 = vunpack.c.l.b16 %v15
  %v65 = vunpack.c.l.b16 %v16
  %v66 = vunpack.c.l.b16 %v17
  %v67 = vunpack.c.l.b16 %v18
  %v68 = vunpack.c.l.b16 %v19
  %v69 = vunpack.c.l.b16 %v20
  %v70 = vunpack.c.l.b16 %v21
  %v71 = vunpack.c.l.b16 %v22
  %v72 = vunpack.c.l.b16 %v23
  %v73 = vunpack.c.l.b16 %v24
  %v74 = vunpack.c.l.b16 %v25
  %v75 = vunpack.c.l.b16 %v26
  %v76 = vunpack.c.l.b16 %v27
  %v77 = vunpack.c.l.b16 %v28
  %v78 = vunpack.c.l.b16 %v29
  %v79 = vunpack.c.l.b16 %v30
  %v80 = vunpack.c.l.b16 %v31
  %v81 = vunpack.c.l.b16 %v32
  %v82 = vunpack.c.l.b16 %v33
  %v83 = vunpack.c.l.b16 %v34
  %v84 = vunpack.c.l.b16 %v35
  %v85 = vunpack.c.l.b16 %v38
  %v86 = vpack.c.b16 %v65, %v64
  %v87 = vpack.c.b16 %v67, %v66
  %v88 = vpack.c.b16 %v69, %v68
  %v89 = vpack.c.b16 %v71, %v70
  %v90 = vpack.c.b16 %v73, %v72
  %v91 = vpack.c.b16 %v75, %v74
  %v92 = vpack.c.b16 %v77, %v76
  %v93 = vpack.c.b16 %v79, %v78
  %v94 = vpack.c.b16 %v81, %v80
  %v95 = vpack.c.b16 %v83, %v82
  %v96 = vpack.c.b16 %v85, %v84
  %vm97 = vsmask.f32 7424
  %v99 = vshrl.u32 %v86, 16
  %v101 = vshll.u32 %v86, 16
  %v103 = vrot.slane %v101, 1
  %v104 = vor.u32 %v99, %v103
  %v106 = vshll.u32 %v87, 16
  %v108 = vrot.slane %v106, 1
  %v109 = vsel %vm97, %v104, %v108
  %v110 = vshrl.u32 %v87, 16
  %v112 = vor.u32 %v110, %v108
  %v114 = vshll.u32 %v88, 16
  %v116 = vrot.slane %v114, 1
  %v117 = vsel %vm97, %v112, %v116
  %v118 = vshrl.u32 %v88, 16
  %v120 = vor.u32 %v118, %v116
  %v122 = vshll.u32 %v89, 16
  %v124 = vrot.slane %v122, 1
  %v125 = vsel %vm97, %v120, %v124
  %v126 = vshrl.u32 %v89, 16
  %v128 = vor.u32 %v126, %v124
  %v130 = vshll.u32 %v90, 16
  %v132 = vrot.slane %v130, 1
  %v133 = vsel %vm97, %v128, %v132
  %v134 = vshrl.u32 %v90, 16
  %v136 = vor.u32 %v134, %v132
  %v138 = vshll.u32 %v91, 16
  %v140 = vrot.slane %v138, 1
  %v141 = vsel %vm97, %v136, %v140
  %v142 = vshrl.u32 %v91, 16
  %v144 = vor.u32 %v142, %v140
  %v146 = vshll.u32 %v92, 16
  %v148 = vrot.slane %v146, 1
  %v149 = vsel %vm97, %v144, %v148
  %v150 = vshrl.u32 %v92, 16
  %v152 = vor.u32 %v150, %v148
  %v154 = vshll.u32 %v93, 16
  %v156 = vrot.slane %v154, 1
  %v157 = vsel %vm97, %v152, %v156
  %v158 = vshrl.u32 %v93, 16
  %v160 = vor.u32 %v158, %v156
  %v162 = vshll.u32 %v94, 16
  %v164 = vrot.slane %v162, 1
  %v165 = vsel %vm97, %v160, %v164
  %v166 = vshrl.u32 %v94, 16
  %v168 = vor.u32 %v166, %v164
  %v170 = vshll.u32 %v95, 16
  %v172 = vrot.slane %v170, 1
  %v173 = vsel %vm97, %v168, %v172
  %v174 = vshrl.u32 %v95, 16
  %v176 = vor.u32 %v174, %v172
  %v178 = vshll.u32 %v96, 16
  %v180 = vrot.slane %v178, 1
  %v181 = vsel %vm97, %v176, %v180
  %v182 = vshrl.u32 %v96, 16
  %v184 = vor.u32 %v182, %v180
  %v187 = vunpack.c.l.b16 %v40
  %v188 = vunpack.c.l.b16 %v41
  %v189 = vpack.c.b16 %v188, %v187
  %vm191 = vcmask 130048
  %v193 = vsel %vm191, %v109, 0
  %v196 = vsel %vm191, %v117, 0
  %v199 = vsel %vm191, %v125, 0
  %v202 = vsel %vm191, %v133, 0
  %v205 = vsel %vm191, %v141, 0
  %v208 = vsel %vm191, %v149, 0
  %v211 = vsel %vm191, %v157, 0
  %v214 = vsel %vm191, %v165, 0
  %v217 = vsel %vm191, %v173, 0
  %v220 = vsel %vm191, %v181, 0
  %v223 = vsel %vm191, %v184, 0
  %225 = vmatprep.subr.bf16.mxu0 0
  %226 = vmatpush1.bf16.msra.mxu0 %v189
  %227 = vmatprep.subr.bf16.mxu0 0
  %228 = vmatpush1.bf16.msra.mxu0 0
  %229 = vmatprep.subr.bf16.mxu0 0
  %230 = vmatpush1.bf16.msra.mxu0 0
  %231 = vmatprep.subr.bf16.mxu0 0
  %232 = vmatpush1.bf16.msra.mxu0 0
  %233 = vmatprep.subr.bf16.mxu0 0
  %234 = vmatpush1.bf16.msra.mxu0 0
  %235 = vmatprep.subr.bf16.mxu0 0
  %236 = vmatpush1.bf16.msra.mxu0 0
  %237 = vmatprep.subr.bf16.mxu0 0
  %238 = vmatpush1.bf16.msra.mxu0 0
  %239 = vmatprep.subr.bf16.mxu0 0
  %240 = vmatpush1.bf16.msra.mxu0 0
  %241 = vmatprep.subr.bf16.mxu0 0
  %242 = vmatpush1.bf16.msra.mxu0 0
  %243 = vmatprep.subr.bf16.mxu0 0
  %244 = vmatpush1.bf16.msra.mxu0 0
  %245 = vmatprep.subr.bf16.mxu0 0
  %246 = vmatpush1.bf16.msra.mxu0 0
  %247 = vmatprep.subr.bf16.mxu0 0
  %248 = vmatpush1.bf16.msra.mxu0 0
  %249 = vmatprep.subr.bf16.mxu0 0
  %250 = vmatpush1.bf16.msra.mxu0 0
  %251 = vmatprep.subr.bf16.mxu0 0
  %252 = vmatpush1.bf16.msra.mxu0 0
  %253 = vmatprep.subr.bf16.mxu0 0
  %254 = vmatpush1.bf16.msra.mxu0 0
  %255 = vmatprep.subr.bf16.mxu0 0
  %256 = vmatpush1.bf16.msra.mxu0 0
  %257 = vmatprep.mubr.bf16.mxu0 0
  %258 = vmatmul.mubr.bf16.gmra.mrb[0].mxu0 %v193
  %v259 = vpop.f32.mrb[0].mxu0
  %v260 = vadd.f32 0.0, %v259
  %v261 = vpop.f32.mrb[0].mxu0
  %v262 = vpop.f32.mrb[0].mxu0
  %v263 = vadd.f32 0.0, %v262
  %v264 = vpop.f32.mrb[0].mxu0
  %265 = vmatprep.mubr.bf16.mxu0 0
  %266 = vmatmul.mubr.bf16.gmra.mrb[0].mxu0 %v196
  %v267 = vpop.f32.mrb[0].mxu0
  %v268 = vadd.f32 0.0, %v267
  %v269 = vpop.f32.mrb[0].mxu0
  %v270 = vpop.f32.mrb[0].mxu0
  %v271 = vadd.f32 0.0, %v270
  %v272 = vpop.f32.mrb[0].mxu0
  %273 = vmatprep.mubr.bf16.mxu0 0
  %274 = vmatmul.mubr.bf16.gmra.mrb[0].mxu0 %v199
  %v275 = vpop.f32.mrb[0].mxu0
  %v276 = vadd.f32 0.0, %v275
  %v277 = vpop.f32.mrb[0].mxu0
  %v278 = vpop.f32.mrb[0].mxu0
  %v279 = vadd.f32 0.0, %v278
  %v280 = vpop.f32.mrb[0].mxu0
  %281 = vmatprep.mubr.bf16.mxu0 0
  %282 = vmatmul.mubr.bf16.gmra.mrb[0].mxu0 %v202
  %v283 = vpop.f32.mrb[0].mxu0
  %v284 = vadd.f32 0.0, %v283
  %v285 = vpop.f32.mrb[0].mxu0
  %v286 = vpop.f32.mrb[0].mxu0
  %v287 = vadd.f32 0.0, %v286
  %v288 = vpop.f32.mrb[0].mxu0
  %289 = vmatprep.mubr.bf16.mxu0 0
  %290 = vmatmul.mubr.bf16.gmra.mrb[0].mxu0 %v205
  %v291 = vpop.f32.mrb[0].mxu0
  %v292 = vadd.f32 0.0, %v291
  %v293 = vpop.f32.mrb[0].mxu0
  %v294 = vpop.f32.mrb[0].mxu0
  %v295 = vadd.f32 0.0, %v294
  %v296 = vpop.f32.mrb[0].mxu0
  %297 = vmatprep.mubr.bf16.mxu0 0
  %298 = vmatmul.mubr.bf16.gmra.mrb[0].mxu0 %v208
  %v299 = vpop.f32.mrb[0].mxu0
  %v300 = vadd.f32 0.0, %v299
  %v301 = vpop.f32.mrb[0].mxu0
  %v302 = vpop.f32.mrb[0].mxu0
  %v303 = vadd.f32 0.0, %v302
  %v304 = vpop.f32.mrb[0].mxu0
  %305 = vmatprep.mubr.bf16.mxu0 0
  %306 = vmatmul.mubr.bf16.gmra.mrb[0].mxu0 %v211
  %v307 = vpop.f32.mrb[0].mxu0
  %v308 = vadd.f32 0.0, %v307
  %v309 = vpop.f32.mrb[0].mxu0
  %v310 = vpop.f32.mrb[0].mxu0
  %v311 = vadd.f32 0.0, %v310
  %v312 = vpop.f32.mrb[0].mxu0
  %313 = vmatprep.mubr.bf16.mxu0 0
  %314 = vmatmul.mubr.bf16.gmra.mrb[0].mxu0 %v214
  %v315 = vpop.f32.mrb[0].mxu0
  %v316 = vadd.f32 0.0, %v315
  %v317 = vpop.f32.mrb[0].mxu0
  %v318 = vpop.f32.mrb[0].mxu0
  %v319 = vadd.f32 0.0, %v318
  %v320 = vpop.f32.mrb[0].mxu0
  %321 = vmatprep.mubr.bf16.mxu0 0
  %322 = vmatmul.mubr.bf16.gmra.mrb[0].mxu0 %v217
  %v323 = vpop.f32.mrb[0].mxu0
  %v324 = vadd.f32 0.0, %v323
  %v325 = vpop.f32.mrb[0].mxu0
  %v326 = vpop.f32.mrb[0].mxu0
  %v327 = vadd.f32 0.0, %v326
  %v328 = vpop.f32.mrb[0].mxu0
  %329 = vmatprep.mubr.bf16.mxu0 0
  %330 = vmatmul.mubr.bf16.gmra.mrb[0].mxu0 %v220
  %v331 = vpop.f32.mrb[0].mxu0
  %v332 = vadd.f32 0.0, %v331
  %v333 = vpop.f32.mrb[0].mxu0
  %v334 = vpop.f32.mrb[0].mxu0
  %v335 = vadd.f32 0.0, %v334
  %v336 = vpop.f32.mrb[0].mxu0
  %337 = vmatprep.mubr.bf16.mxu0 0
  %338 = vmatmul.mubr.bf16.gmra.mrb[0].mxu0 %v223
  %v339 = vpop.f32.mrb[0].mxu0
  %v340 = vadd.f32 0.0, %v339
  %v341 = vpop.f32.mrb[0].mxu0
  %v342 = vpop.f32.mrb[0].mxu0
  %v343 = vpop.f32.mrb[0].mxu0
  %344 = vdwg.mxu0
  %v345 = vpack.c.b16 %v84, %v84
  %v348 = vunpack.c.l.b16 %v36
  %v349 = vunpack.c.l.b16 %v37
  %v350 = vpack.c.b16 %v349, %v348
  %v352 = vsel %vm191, %v86, 0
  %v354 = vsel %vm191, %v87, 0
  %v356 = vsel %vm191, %v88, 0
  %v358 = vsel %vm191, %v89, 0
  %v360 = vsel %vm191, %v90, 0
  %v362 = vsel %vm191, %v91, 0
  %v364 = vsel %vm191, %v92, 0
  %v366 = vsel %vm191, %v93, 0
  %v368 = vsel %vm191, %v94, 0
  %v370 = vsel %vm191, %v95, 0
  %v373 = vsel %vm191, %v345, 0
  %375 = vmatprep.subr.bf16.mxu0 0
  %376 = vmatpush1.bf16.msra.mxu0 %v350
  %377 = vmatprep.subr.bf16.mxu0 0
  %378 = vmatpush1.bf16.msra.mxu0 0
  %379 = vmatprep.subr.bf16.mxu0 0
  %380 = vmatpush1.bf16.msra.mxu0 0
  %381 = vmatprep.subr.bf16.mxu0 0
  %382 = vmatpush1.bf16.msra.mxu0 0
  %383 = vmatprep.subr.bf16.mxu0 0
  %384 = vmatpush1.bf16.msra.mxu0 0
  %385 = vmatprep.subr.bf16.mxu0 0
  %386 = vmatpush1.bf16.msra.mxu0 0
  %387 = vmatprep.subr.bf16.mxu0 0
  %388 = vmatpush1.bf16.msra.mxu0 0
  %389 = vmatprep.subr.bf16.mxu0 0
  %390 = vmatpush1.bf16.msra.mxu0 0
  %391 = vmatprep.subr.bf16.mxu0 0
  %392 = vmatpush1.bf16.msra.mxu0 0
  %393 = vmatprep.subr.bf16.mxu0 0
  %394 = vmatpush1.bf16.msra.mxu0 0
  %395 = vmatprep.subr.bf16.mxu0 0
  %396 = vmatpush1.bf16.msra.mxu0 0
  %397 = vmatprep.subr.bf16.mxu0 0
  %398 = vmatpush1.bf16.msra.mxu0 0
  %399 = vmatprep.subr.bf16.mxu0 0
  %400 = vmatpush1.bf16.msra.mxu0 0
  %401 = vmatprep.subr.bf16.mxu0 0
  %402 = vmatpush1.bf16.msra.mxu0 0
  %403 = vmatprep.subr.bf16.mxu0 0
  %404 = vmatpush1.bf16.msra.mxu0 0
  %405 = vmatprep.subr.bf16.mxu0 0
  %406 = vmatpush1.bf16.msra.mxu0 0
  %407 = vmatprep.mubr.bf16.mxu0 0
  %408 = vmatmul.mubr.bf16.gmra.mrb[0].mxu0 %v352
  %v409 = vpop.f32.mrb[0].mxu0
  %v410 = vadd.f32 %v260, %v409
  %v411 = vpop.f32.mrb[0].mxu0
  %v412 = vpop.f32.mrb[0].mxu0
  %v413 = vadd.f32 %v263, %v412
  %v414 = vpop.f32.mrb[0].mxu0
  %415 = vmatprep.mubr.bf16.mxu0 0
  %416 = vmatmul.mubr.bf16.gmra.mrb[0].mxu0 %v354
  %v417 = vpop.f32.mrb[0].mxu0
  %v418 = vadd.f32 %v268, %v417
  %v419 = vpop.f32.mrb[0].mxu0
  %v420 = vpop.f32.mrb[0].mxu0
  %v421 = vadd.f32 %v271, %v420
  %v422 = vpop.f32.mrb[0].mxu0
  %423 = vmatprep.mubr.bf16.mxu0 0
  %424 = vmatmul.mubr.bf16.gmra.mrb[0].mxu0 %v356
  %v425 = vpop.f32.mrb[0].mxu0
  %v426 = vadd.f32 %v276, %v425
  %v427 = vpop.f32.mrb[0].mxu0
  %v428 = vpop.f32.mrb[0].mxu0
  %v429 = vadd.f32 %v279, %v428
  %v430 = vpop.f32.mrb[0].mxu0
  %431 = vmatprep.mubr.bf16.mxu0 0
  %432 = vmatmul.mubr.bf16.gmra.mrb[0].mxu0 %v358
  %v433 = vpop.f32.mrb[0].mxu0
  %v434 = vadd.f32 %v284, %v433
  %v435 = vpop.f32.mrb[0].mxu0
  %v436 = vpop.f32.mrb[0].mxu0
  %v437 = vadd.f32 %v287, %v436
  %v438 = vpop.f32.mrb[0].mxu0
  %439 = vmatprep.mubr.bf16.mxu0 0
  %440 = vmatmul.mubr.bf16.gmra.mrb[0].mxu0 %v360
  %v441 = vpop.f32.mrb[0].mxu0
  %v442 = vadd.f32 %v292, %v441
  %v443 = vpop.f32.mrb[0].mxu0
  %v444 = vpop.f32.mrb[0].mxu0
  %v445 = vadd.f32 %v295, %v444
  %v446 = vpop.f32.mrb[0].mxu0
  %447 = vmatprep.mubr.bf16.mxu0 0
  %448 = vmatmul.mubr.bf16.gmra.mrb[0].mxu0 %v362
  %v449 = vpop.f32.mrb[0].mxu0
  %v450 = vadd.f32 %v300, %v449
  %v451 = vpop.f32.mrb[0].mxu0
  %v452 = vpop.f32.mrb[0].mxu0
  %v453 = vadd.f32 %v303, %v452
  %v454 = vpop.f32.mrb[0].mxu0
  %455 = vmatprep.mubr.bf16.mxu0 0
  %456 = vmatmul.mubr.bf16.gmra.mrb[0].mxu0 %v364
  %v457 = vpop.f32.mrb[0].mxu0
  %v458 = vadd.f32 %v308, %v457
  %v459 = vpop.f32.mrb[0].mxu0
  %v460 = vpop.f32.mrb[0].mxu0
  %v461 = vadd.f32 %v311, %v460
  %v462 = vpop.f32.mrb[0].mxu0
  %463 = vmatprep.mubr.bf16.mxu0 0
  %464 = vmatmul.mubr.bf16.gmra.mrb[0].mxu0 %v366
  %v465 = vpop.f32.mrb[0].mxu0
  %v466 = vadd.f32 %v316, %v465
  %v467 = vpop.f32.mrb[0].mxu0
  %v468 = vpop.f32.mrb[0].mxu0
  %v469 = vadd.f32 %v319, %v468
  %v470 = vpop.f32.mrb[0].mxu0
  %471 = vmatprep.mubr.bf16.mxu0 0
  %472 = vmatmul.mubr.bf16.gmra.mrb[0].mxu0 %v368
  %v473 = vpop.f32.mrb[0].mxu0
  %v474 = vadd.f32 %v324, %v473
  %v475 = vpop.f32.mrb[0].mxu0
  %v476 = vpop.f32.mrb[0].mxu0
  %v477 = vadd.f32 %v327, %v476
  %v478 = vpop.f32.mrb[0].mxu0
  %479 = vmatprep.mubr.bf16.mxu0 0
  %480 = vmatmul.mubr.bf16.gmra.mrb[0].mxu0 %v370
  %v481 = vpop.f32.mrb[0].mxu0
  %v482 = vadd.f32 %v332, %v481
  %v483 = vpop.f32.mrb[0].mxu0
  %v484 = vpop.f32.mrb[0].mxu0
  %v485 = vadd.f32 %v335, %v484
  %v486 = vpop.f32.mrb[0].mxu0
  %487 = vmatprep.mubr.bf16.mxu0 0
  %488 = vmatmul.mubr.bf16.gmra.mrb[0].mxu0 %v373
  %v489 = vpop.f32.mrb[0].mxu0
  %v490 = vadd.f32 %v340, %v489
  %v491 = vpop.f32.mrb[0].mxu0
  %v492 = vpop.f32.mrb[0].mxu0
  %v493 = vpop.f32.mrb[0].mxu0
  %494 = vdwg.mxu0
  %v495 = vld [vmem:[%s0 + $0x4] sm:$0xf]
  %v496 = vld [vmem:[%s0 + $0x8] sm:$0xf]
  %v497 = vld [vmem:[%s0 + $0xc] sm:$0xf]
  %v498 = vld [vmem:[%s0 + $0x10] sm:$0xf]
  %v499 = vld [vmem:[%s0 + $0x14] sm:$0xf]
  %v500 = vld [vmem:[%s0 + $0x18] sm:$0xf]
  %v501 = vld [vmem:[%s0 + $0x1c] sm:$0xf]
  %v502 = vld [vmem:[%s0 + $0x20] sm:$0xf]
  %v503 = vld [vmem:[%s0 + $0x24] sm:$0xf]
  %v504 = vld [vmem:[%s0 + $0x28] sm:$0xf]
  %v505 = vld [vmem:[%s0 + $0x2c] sm:$0xf]
  %v506 = vld [vmem:[%s0 + $0x30] sm:$0xf]
  %v507 = vld [vmem:[%s0 + $0x34] sm:$0xf]
  %v508 = vld [vmem:[%s0 + $0x38] sm:$0xf]
  %v509 = vld [vmem:[%s0 + $0x3c] sm:$0xf]
  %v510 = vld [vmem:[%s0 + $0x40] sm:$0xf]
  %v511 = vld [vmem:[%s0 + $0x44] sm:$0xf]
  %v512 = vld [vmem:[%s0 + $0x48] sm:$0xf]
  %v513 = vld [vmem:[%s0 + $0x4c] sm:$0xf]
  %v514 = vld [vmem:[%s0 + $0x50] sm:$0xf]
  %v515 = vld [vmem:[%s0 + $0x54] sm:$0xf]
  %v516 = vld [vmem:[%s0 + $0x58] sm:$0x1]
  %s517 = scalar_lea.vmem %s1, 16
  %v518 = vld [vmem:[%s517] sm:$0xf]
  %v519 = vld [vmem:[%s517 + $0x4] sm:$0xf]
  %v542 = vunpack.c.l.b16 %v495
  %v543 = vunpack.c.l.b16 %v496
  %v544 = vunpack.c.l.b16 %v497
  %v545 = vunpack.c.l.b16 %v498
  %v546 = vunpack.c.l.b16 %v499
  %v547 = vunpack.c.l.b16 %v500
  %v548 = vunpack.c.l.b16 %v501
  %v549 = vunpack.c.l.b16 %v502
  %v550 = vunpack.c.l.b16 %v503
  %v551 = vunpack.c.l.b16 %v504
  %v552 = vunpack.c.l.b16 %v505
  %v553 = vunpack.c.l.b16 %v506
  %v554 = vunpack.c.l.b16 %v507
  %v555 = vunpack.c.l.b16 %v508
  %v556 = vunpack.c.l.b16 %v509
  %v557 = vunpack.c.l.b16 %v510
  %v558 = vunpack.c.l.b16 %v511
  %v559 = vunpack.c.l.b16 %v512
  %v560 = vunpack.c.l.b16 %v513
  %v561 = vunpack.c.l.b16 %v514
  %v562 = vunpack.c.l.b16 %v515
  %v563 = vunpack.c.l.b16 %v516
  %v564 = vpack.c.b16 %v543, %v542
  %v565 = vpack.c.b16 %v545, %v544
  %v566 = vpack.c.b16 %v547, %v546
  %v567 = vpack.c.b16 %v549, %v548
  %v568 = vpack.c.b16 %v551, %v550
  %v569 = vpack.c.b16 %v553, %v552
  %v570 = vpack.c.b16 %v555, %v554
  %v571 = vpack.c.b16 %v557, %v556
  %v572 = vpack.c.b16 %v559, %v558
  %v573 = vpack.c.b16 %v561, %v560
  %v574 = vpack.c.b16 %v563, %v562
  %v576 = vshrl.u32 %v564, 16
  %v578 = vshll.u32 %v564, 16
  %v580 = vrot.slane %v578, 1
  %v581 = vor.u32 %v576, %v580
  %v583 = vshll.u32 %v565, 16
  %v585 = vrot.slane %v583, 1
  %v586 = vsel %vm97, %v581, %v585
  %v587 = vshrl.u32 %v565, 16
  %v589 = vor.u32 %v587, %v585
  %v591 = vshll.u32 %v566, 16
  %v593 = vrot.slane %v591, 1
  %v594 = vsel %vm97, %v589, %v593
  %v595 = vshrl.u32 %v566, 16
  %v597 = vor.u32 %v595, %v593
  %v599 = vshll.u32 %v567, 16
  %v601 = vrot.slane %v599, 1
  %v602 = vsel %vm97, %v597, %v601
  %v603 = vshrl.u32 %v567, 16
  %v605 = vor.u32 %v603, %v601
  %v607 = vshll.u32 %v568, 16
  %v609 = vrot.slane %v607, 1
  %v610 = vsel %vm97, %v605, %v609
  %v611 = vshrl.u32 %v568, 16
  %v613 = vor.u32 %v611, %v609
  %v615 = vshll.u32 %v569, 16
  %v617 = vrot.slane %v615, 1
  %v618 = vsel %vm97, %v613, %v617
  %v619 = vshrl.u32 %v569, 16
  %v621 = vor.u32 %v619, %v617
  %v623 = vshll.u32 %v570, 16
  %v625 = vrot.slane %v623, 1
  %v626 = vsel %vm97, %v621, %v625
  %v627 = vshrl.u32 %v570, 16
  %v629 = vor.u32 %v627, %v625
  %v631 = vshll.u32 %v571, 16
  %v633 = vrot.slane %v631, 1
  %v634 = vsel %vm97, %v629, %v633
  %v635 = vshrl.u32 %v571, 16
  %v637 = vor.u32 %v635, %v633
  %v639 = vshll.u32 %v572, 16
  %v641 = vrot.slane %v639, 1
  %v642 = vsel %vm97, %v637, %v641
  %v643 = vshrl.u32 %v572, 16
  %v645 = vor.u32 %v643, %v641
  %v647 = vshll.u32 %v573, 16
  %v649 = vrot.slane %v647, 1
  %v650 = vsel %vm97, %v645, %v649
  %v651 = vshrl.u32 %v573, 16
  %v653 = vor.u32 %v651, %v649
  %v655 = vshll.u32 %v574, 16
  %v657 = vrot.slane %v655, 1
  %v658 = vsel %vm97, %v653, %v657
  %v659 = vshrl.u32 %v574, 16
  %v661 = vor.u32 %v659, %v657
  %v664 = vunpack.c.l.b16 %v518
  %v665 = vunpack.c.l.b16 %v519
  %v666 = vpack.c.b16 %v665, %v664
  %v669 = vsel %vm191, %v586, 0
  %v672 = vsel %vm191, %v594, 0
  %v675 = vsel %vm191, %v602, 0
  %v678 = vsel %vm191, %v610, 0
  %v681 = vsel %vm191, %v618, 0
  %v684 = vsel %vm191, %v626, 0
  %v687 = vsel %vm191, %v634, 0
  %v690 = vsel %vm191, %v642, 0
  %v693 = vsel %vm191, %v650, 0
  %v696 = vsel %vm191, %v658, 0
  %v699 = vsel %vm191, %v661, 0
  %701 = vmatprep.subr.bf16.mxu0 0
  %702 = vmatpush1.bf16.msra.mxu0 %v666
  %703 = vmatprep.subr.bf16.mxu0 0
  %704 = vmatpush1.bf16.msra.mxu0 0
  %705 = vmatprep.subr.bf16.mxu0 0
  %706 = vmatpush1.bf16.msra.mxu0 0
  %707 = vmatprep.subr.bf16.mxu0 0
  %708 = vmatpush1.bf16.msra.mxu0 0
  %709 = vmatprep.subr.bf16.mxu0 0
  %710 = vmatpush1.bf16.msra.mxu0 0
  %711 = vmatprep.subr.bf16.mxu0 0
  %712 = vmatpush1.bf16.msra.mxu0 0
  %713 = vmatprep.subr.bf16.mxu0 0
  %714 = vmatpush1.bf16.msra.mxu0 0
  %715 = vmatprep.subr.bf16.mxu0 0
  %716 = vmatpush1.bf16.msra.mxu0 0
  %717 = vmatprep.subr.bf16.mxu0 0
  %718 = vmatpush1.bf16.msra.mxu0 0
  %719 = vmatprep.subr.bf16.mxu0 0
  %720 = vmatpush1.bf16.msra.mxu0 0
  %721 = vmatprep.subr.bf16.mxu0 0
  %722 = vmatpush1.bf16.msra.mxu0 0
  %723 = vmatprep.subr.bf16.mxu0 0
  %724 = vmatpush1.bf16.msra.mxu0 0
  %725 = vmatprep.subr.bf16.mxu0 0
  %726 = vmatpush1.bf16.msra.mxu0 0
  %727 = vmatprep.subr.bf16.mxu0 0
  %728 = vmatpush1.bf16.msra.mxu0 0
  %729 = vmatprep.subr.bf16.mxu0 0
  %730 = vmatpush1.bf16.msra.mxu0 0
  %731 = vmatprep.subr.bf16.mxu0 0
  %732 = vmatpush1.bf16.msra.mxu0 0
  %733 = vmatprep.mubr.bf16.mxu0 0
  %734 = vmatmul.mubr.bf16.gmra.mrb[0].mxu0 %v669
  %v735 = vpop.f32.mrb[0].mxu0
  %v736 = vadd.f32 0.0, %v735
  %v737 = vpop.f32.mrb[0].mxu0
  %v738 = vpop.f32.mrb[0].mxu0
  %v739 = vadd.f32 0.0, %v738
  %v740 = vpop.f32.mrb[0].mxu0
  %741 = vmatprep.mubr.bf16.mxu0 0
  %742 = vmatmul.mubr.bf16.gmra.mrb[0].mxu0 %v672
  %v743 = vpop.f32.mrb[0].mxu0
  %v744 = vadd.f32 0.0, %v743
  %v745 = vpop.f32.mrb[0].mxu0
  %v746 = vpop.f32.mrb[0].mxu0
  %v747 = vadd.f32 0.0, %v746
  %v748 = vpop.f32.mrb[0].mxu0
  %749 = vmatprep.mubr.bf16.mxu0 0
  %750 = vmatmul.mubr.bf16.gmra.mrb[0].mxu0 %v675
  %v751 = vpop.f32.mrb[0].mxu0
  %v752 = vadd.f32 0.0, %v751
  %v753 = vpop.f32.mrb[0].mxu0
  %v754 = vpop.f32.mrb[0].mxu0
  %v755 = vadd.f32 0.0, %v754
  %v756 = vpop.f32.mrb[0].mxu0
  %757 = vmatprep.mubr.bf16.mxu0 0
  %758 = vmatmul.mubr.bf16.gmra.mrb[0].mxu0 %v678
  %v759 = vpop.f32.mrb[0].mxu0
  %v760 = vadd.f32 0.0, %v759
  %v761 = vpop.f32.mrb[0].mxu0
  %v762 = vpop.f32.mrb[0].mxu0
  %v763 = vadd.f32 0.0, %v762
  %v764 = vpop.f32.mrb[0].mxu0
  %765 = vmatprep.mubr.bf16.mxu0 0
  %766 = vmatmul.mubr.bf16.gmra.mrb[0].mxu0 %v681
  %v767 = vpop.f32.mrb[0].mxu0
  %v768 = vadd.f32 0.0, %v767
  %v769 = vpop.f32.mrb[0].mxu0
  %v770 = vpop.f32.mrb[0].mxu0
  %v771 = vadd.f32 0.0, %v770
  %v772 = vpop.f32.mrb[0].mxu0
  %773 = vmatprep.mubr.bf16.mxu0 0
  %774 = vmatmul.mubr.bf16.gmra.mrb[0].mxu0 %v684
  %v775 = vpop.f32.mrb[0].mxu0
  %v776 = vadd.f32 0.0, %v775
  %v777 = vpop.f32.mrb[0].mxu0
  %v778 = vpop.f32.mrb[0].mxu0
  %v779 = vadd.f32 0.0, %v778
  %v780 = vpop.f32.mrb[0].mxu0
  %781 = vmatprep.mubr.bf16.mxu0 0
  %782 = vmatmul.mubr.bf16.gmra.mrb[0].mxu0 %v687
  %v783 = vpop.f32.mrb[0].mxu0
  %v784 = vadd.f32 0.0, %v783
  %v785 = vpop.f32.mrb[0].mxu0
  %v786 = vpop.f32.mrb[0].mxu0
  %v787 = vadd.f32 0.0, %v786
  %v788 = vpop.f32.mrb[0].mxu0
  %789 = vmatprep.mubr.bf16.mxu0 0
  %790 = vmatmul.mubr.bf16.gmra.mrb[0].mxu0 %v690
  %v791 = vpop.f32.mrb[0].mxu0
  %v792 = vadd.f32 0.0, %v791
  %v793 = vpop.f32.mrb[0].mxu0
  %v794 = vpop.f32.mrb[0].mxu0
  %v795 = vadd.f32 0.0, %v794
  %v796 = vpop.f32.mrb[0].mxu0
  %797 = vmatprep.mubr.bf16.mxu0 0
  %798 = vmatmul.mubr.bf16.gmra.mrb[0].mxu0 %v693
  %v799 = vpop.f32.mrb[0].mxu0
  %v800 = vadd.f32 0.0, %v799
  %v801 = vpop.f32.mrb[0].mxu0
  %v802 = vpop.f32.mrb[0].mxu0
  %v803 = vadd.f32 0.0, %v802
  %v804 = vpop.f32.mrb[0].mxu0
  %805 = vmatprep.mubr.bf16.mxu0 0
  %806 = vmatmul.mubr.bf16.gmra.mrb[0].mxu0 %v696
  %v807 = vpop.f32.mrb[0].mxu0
  %v808 = vadd.f32 0.0, %v807
  %v809 = vpop.f32.mrb[0].mxu0
  %v810 = vpop.f32.mrb[0].mxu0
  %v811 = vadd.f32 0.0, %v810
  %v812 = vpop.f32.mrb[0].mxu0
  %813 = vmatprep.mubr.bf16.mxu0 0
  %814 = vmatmul.mubr.bf16.gmra.mrb[0].mxu0 %v699
  %v815 = vpop.f32.mrb[0].mxu0
  %v816 = vadd.f32 0.0, %v815
  %v817 = vpop.f32.mrb[0].mxu0
  %v818 = vpop.f32.mrb[0].mxu0
  %v819 = vpop.f32.mrb[0].mxu0
  %820 = vdwg.mxu0
  %v821 = vadd.f32 %v410, %v736
  %v822 = vadd.f32 %v413, %v739
  %v823 = vadd.f32 %v418, %v744
  %v824 = vadd.f32 %v421, %v747
  %v825 = vadd.f32 %v426, %v752
  %v826 = vadd.f32 %v429, %v755
  %v827 = vadd.f32 %v434, %v760
  %v828 = vadd.f32 %v437, %v763
  %v829 = vadd.f32 %v442, %v768
  %v830 = vadd.f32 %v445, %v771
  %v831 = vadd.f32 %v450, %v776
  %v832 = vadd.f32 %v453, %v779
  %v833 = vadd.f32 %v458, %v784
  %v834 = vadd.f32 %v461, %v787
  %v835 = vadd.f32 %v466, %v792
  %v836 = vadd.f32 %v469, %v795
  %v837 = vadd.f32 %v474, %v800
  %v838 = vadd.f32 %v477, %v803
  %v839 = vadd.f32 %v482, %v808
  %v840 = vadd.f32 %v485, %v811
  %v841 = vadd.f32 %v490, %v816
  %v842 = vld [vmem:[%s0 + $0x4] sm:$0xe]
  %s843 = scalar_lea.vmem %s1, 24
  %v844 = vld [vmem:[%s843] sm:$0xf]
  %v845 = vld [vmem:[%s843 + $0x4] sm:$0xf]
  %v847 = vunpack.c.l.b16 %v842
  %v848 = vpack.c.b16 %v543, %v847
  %vm849 = vcmask 1046528
  %v850 = vrot.slane %v848, 1
  %v851 = vrot.slane %v565, 1
  %v852 = vsel %vm849, %v850, %v851
  %v853 = vrot.slane %v566, 1
  %v854 = vsel %vm849, %v851, %v853
  %v855 = vrot.slane %v567, 1
  %v856 = vsel %vm849, %v853, %v855
  %v857 = vrot.slane %v568, 1
  %v858 = vsel %vm849, %v855, %v857
  %v859 = vrot.slane %v569, 1
  %v860 = vsel %vm849, %v857, %v859
  %v861 = vrot.slane %v570, 1
  %v862 = vsel %vm849, %v859, %v861
  %v863 = vrot.slane %v571, 1
  %v864 = vsel %vm849, %v861, %v863
  %v865 = vrot.slane %v572, 1
  %v866 = vsel %vm849, %v863, %v865
  %v867 = vrot.slane %v573, 1
  %v868 = vsel %vm849, %v865, %v867
  %v869 = vrot.slane %v574, 1
  %v870 = vsel %vm849, %v867, %v869
  %v873 = vunpack.c.l.b16 %v844
  %v874 = vunpack.c.l.b16 %v845
  %v875 = vpack.c.b16 %v874, %v873
  %v878 = vsel %vm191, %v852, 0
  %v881 = vsel %vm191, %v854, 0
  %v884 = vsel %vm191, %v856, 0
  %v887 = vsel %vm191, %v858, 0
  %v890 = vsel %vm191, %v860, 0
  %v893 = vsel %vm191, %v862, 0
  %v896 = vsel %vm191, %v864, 0
  %v899 = vsel %vm191, %v866, 0
  %v902 = vsel %vm191, %v868, 0
  %v905 = vsel %vm191, %v870, 0
  %v908 = vsel %vm191, %v869, 0
  %910 = vmatprep.subr.bf16.mxu0 0
  %911 = vmatpush1.bf16.msra.mxu0 %v875
  %912 = vmatprep.subr.bf16.mxu0 0
  %913 = vmatpush1.bf16.msra.mxu0 0
  %914 = vmatprep.subr.bf16.mxu0 0
  %915 = vmatpush1.bf16.msra.mxu0 0
  %916 = vmatprep.subr.bf16.mxu0 0
  %917 = vmatpush1.bf16.msra.mxu0 0
  %918 = vmatprep.subr.bf16.mxu0 0
  %919 = vmatpush1.bf16.msra.mxu0 0
  %920 = vmatprep.subr.bf16.mxu0 0
  %921 = vmatpush1.bf16.msra.mxu0 0
  %922 = vmatprep.subr.bf16.mxu0 0
  %923 = vmatpush1.bf16.msra.mxu0 0
  %924 = vmatprep.subr.bf16.mxu0 0
  %925 = vmatpush1.bf16.msra.mxu0 0
  %926 = vmatprep.subr.bf16.mxu0 0
  %927 = vmatpush1.bf16.msra.mxu0 0
  %928 = vmatprep.subr.bf16.mxu0 0
  %929 = vmatpush1.bf16.msra.mxu0 0
  %930 = vmatprep.subr.bf16.mxu0 0
  %931 = vmatpush1.bf16.msra.mxu0 0
  %932 = vmatprep.subr.bf16.mxu0 0
  %933 = vmatpush1.bf16.msra.mxu0 0
  %934 = vmatprep.subr.bf16.mxu0 0
  %935 = vmatpush1.bf16.msra.mxu0 0
  %936 = vmatprep.subr.bf16.mxu0 0
  %937 = vmatpush1.bf16.msra.mxu0 0
  %938 = vmatprep.subr.bf16.mxu0 0
  %939 = vmatpush1.bf16.msra.mxu0 0
  %940 = vmatprep.subr.bf16.mxu0 0
  %941 = vmatpush1.bf16.msra.mxu0 0
  %942 = vmatprep.mubr.bf16.mxu0 0
  %943 = vmatmul.mubr.bf16.gmra.mrb[0].mxu0 %v878
  %v944 = vpop.f32.mrb[0].mxu0
  %v945 = vadd.f32 0.0, %v944
  %v946 = vpop.f32.mrb[0].mxu0
  %v947 = vpop.f32.mrb[0].mxu0
  %v948 = vadd.f32 0.0, %v947
  %v949 = vpop.f32.mrb[0].mxu0
  %950 = vmatprep.mubr.bf16.mxu0 0
  %951 = vmatmul.mubr.bf16.gmra.mrb[0].mxu0 %v881
  %v952 = vpop.f32.mrb[0].mxu0
  %v953 = vadd.f32 0.0, %v952
  %v954 = vpop.f32.mrb[0].mxu0
  %v955 = vpop.f32.mrb[0].mxu0
  %v956 = vadd.f32 0.0, %v955
  %v957 = vpop.f32.mrb[0].mxu0
  %958 = vmatprep.mubr.bf16.mxu0 0
  %959 = vmatmul.mubr.bf16.gmra.mrb[0].mxu0 %v884
  %v960 = vpop.f32.mrb[0].mxu0
  %v961 = vadd.f32 0.0, %v960
  %v962 = vpop.f32.mrb[0].mxu0
  %v963 = vpop.f32.mrb[0].mxu0
  %v964 = vadd.f32 0.0, %v963
  %v965 = vpop.f32.mrb[0].mxu0
  %966 = vmatprep.mubr.bf16.mxu0 0
  %967 = vmatmul.mubr.bf16.gmra.mrb[0].mxu0 %v887
  %v968 = vpop.f32.mrb[0].mxu0
  %v969 = vadd.f32 0.0, %v968
  %v970 = vpop.f32.mrb[0].mxu0
  %v971 = vpop.f32.mrb[0].mxu0
  %v972 = vadd.f32 0.0, %v971
  %v973 = vpop.f32.mrb[0].mxu0
  %974 = vmatprep.mubr.bf16.mxu0 0
  %975 = vmatmul.mubr.bf16.gmra.mrb[0].mxu0 %v890
  %v976 = vpop.f32.mrb[0].mxu0
  %v977 = vadd.f32 0.0, %v976
  %v978 = vpop.f32.mrb[0].mxu0
  %v979 = vpop.f32.mrb[0].mxu0
  %v980 = vadd.f32 0.0, %v979
  %v981 = vpop.f32.mrb[0].mxu0
  %982 = vmatprep.mubr.bf16.mxu0 0
  %983 = vmatmul.mubr.bf16.gmra.mrb[0].mxu0 %v893
  %v984 = vpop.f32.mrb[0].mxu0
  %v985 = vadd.f32 0.0, %v984
  %v986 = vpop.f32.mrb[0].mxu0
  %v987 = vpop.f32.mrb[0].mxu0
  %v988 = vadd.f32 0.0, %v987
  %v989 = vpop.f32.mrb[0].mxu0
  %990 = vmatprep.mubr.bf16.mxu0 0
  %991 = vmatmul.mubr.bf16.gmra.mrb[0].mxu0 %v896
  %v992 = vpop.f32.mrb[0].mxu0
  %v993 = vadd.f32 0.0, %v992
  %v994 = vpop.f32.mrb[0].mxu0
  %v995 = vpop.f32.mrb[0].mxu0
  %v996 = vadd.f32 0.0, %v995
  %v997 = vpop.f32.mrb[0].mxu0
  %998 = vmatprep.mubr.bf16.mxu0 0
  %999 = vmatmul.mubr.bf16.gmra.mrb[0].mxu0 %v899
  %v1000 = vpop.f32.mrb[0].mxu0
  %v1001 = vadd.f32 0.0, %v1000
  %v1002 = vpop.f32.mrb[0].mxu0
  %v1003 = vpop.f32.mrb[0].mxu0
  %v1004 = vadd.f32 0.0, %v1003
  %v1005 = vpop.f32.mrb[0].mxu0
  %1006 = vmatprep.mubr.bf16.mxu0 0
  %1007 = vmatmul.mubr.bf16.gmra.mrb[0].mxu0 %v902
  %v1008 = vpop.f32.mrb[0].mxu0
  %v1009 = vadd.f32 0.0, %v1008
  %v1010 = vpop.f32.mrb[0].mxu0
  %v1011 = vpop.f32.mrb[0].mxu0
  %v1012 = vadd.f32 0.0, %v1011
  %v1013 = vpop.f32.mrb[0].mxu0
  %1014 = vmatprep.mubr.bf16.mxu0 0
  %1015 = vmatmul.mubr.bf16.gmra.mrb[0].mxu0 %v905
  %v1016 = vpop.f32.mrb[0].mxu0
  %v1017 = vadd.f32 0.0, %v1016
  %v1018 = vpop.f32.mrb[0].mxu0
  %v1019 = vpop.f32.mrb[0].mxu0
  %v1020 = vadd.f32 0.0, %v1019
  %v1021 = vpop.f32.mrb[0].mxu0
  %1022 = vmatprep.mubr.bf16.mxu0 0
  %1023 = vmatmul.mubr.bf16.gmra.mrb[0].mxu0 %v908
  %v1024 = vpop.f32.mrb[0].mxu0
  %v1025 = vadd.f32 0.0, %v1024
  %v1026 = vpop.f32.mrb[0].mxu0
  %v1027 = vpop.f32.mrb[0].mxu0
  %v1028 = vpop.f32.mrb[0].mxu0
  %1029 = vdwg.mxu0
  %v1030 = vadd.f32 %v821, %v945
  %v1031 = vadd.f32 %v822, %v948
  %v1032 = vadd.f32 %v823, %v953
  %v1033 = vadd.f32 %v824, %v956
  %v1034 = vadd.f32 %v825, %v961
  %v1035 = vadd.f32 %v826, %v964
  %v1036 = vadd.f32 %v827, %v969
  %v1037 = vadd.f32 %v828, %v972
  %v1038 = vadd.f32 %v829, %v977
  %v1039 = vadd.f32 %v830, %v980
  %v1040 = vadd.f32 %v831, %v985
  %v1041 = vadd.f32 %v832, %v988
  %v1042 = vadd.f32 %v833, %v993
  %v1043 = vadd.f32 %v834, %v996
  %v1044 = vadd.f32 %v835, %v1001
  %v1045 = vadd.f32 %v836, %v1004
  %v1046 = vadd.f32 %v837, %v1009
  %v1047 = vadd.f32 %v838, %v1012
  %v1048 = vadd.f32 %v839, %v1017
  %v1049 = vadd.f32 %v840, %v1020
  %v1050 = vadd.f32 %v841, %v1025
  %v1051 = vld [vmem:[%s2] sm:$0x1]
  %v1053 = vlaneseq
  %v1054 = vshrl.u32 %v1053, 7
  %v1055 = vsub.s32 0, %v1054
  %v1056 = vrot.slane %v1051, %v1055
  %v1058 = vadd.f32 %v1030, %v1056
  %v1059 = vadd.f32 %v1031, %v1056
  %v1060 = vadd.f32 %v1032, %v1056
  %v1061 = vadd.f32 %v1033, %v1056
  %v1062 = vadd.f32 %v1034, %v1056
  %v1063 = vadd.f32 %v1035, %v1056
  %v1064 = vadd.f32 %v1036, %v1056
  %v1065 = vadd.f32 %v1037, %v1056
  %v1066 = vadd.f32 %v1038, %v1056
  %v1067 = vadd.f32 %v1039, %v1056
  %v1068 = vadd.f32 %v1040, %v1056
  %v1069 = vadd.f32 %v1041, %v1056
  %v1070 = vadd.f32 %v1042, %v1056
  %v1071 = vadd.f32 %v1043, %v1056
  %v1072 = vadd.f32 %v1044, %v1056
  %v1073 = vadd.f32 %v1045, %v1056
  %v1074 = vadd.f32 %v1046, %v1056
  %v1075 = vadd.f32 %v1047, %v1056
  %v1076 = vadd.f32 %v1048, %v1056
  %v1077 = vadd.f32 %v1049, %v1056
  %v1078 = vadd.f32 %v1050, %v1056
  %v1079 = vmax.f32 %v1058, 0.0
  %v1080 = vmax.f32 %v1059, 0.0
  %v1081 = vmax.f32 %v1060, 0.0
  %v1082 = vmax.f32 %v1061, 0.0
  %v1083 = vmax.f32 %v1062, 0.0
  %v1084 = vmax.f32 %v1063, 0.0
  %v1085 = vmax.f32 %v1064, 0.0
  %v1086 = vmax.f32 %v1065, 0.0
  %v1087 = vmax.f32 %v1066, 0.0
  %v1088 = vmax.f32 %v1067, 0.0
  %v1089 = vmax.f32 %v1068, 0.0
  %v1090 = vmax.f32 %v1069, 0.0
  %v1091 = vmax.f32 %v1070, 0.0
  %v1092 = vmax.f32 %v1071, 0.0
  %v1093 = vmax.f32 %v1072, 0.0
  %v1094 = vmax.f32 %v1073, 0.0
  %v1095 = vmax.f32 %v1074, 0.0
  %v1096 = vmax.f32 %v1075, 0.0
  %v1097 = vmax.f32 %v1076, 0.0
  %v1098 = vmax.f32 %v1077, 0.0
  %v1099 = vmax.f32 %v1078, 0.0
  %v1100 = vpack.c.bf16 %v1080, %v1079
  %v1101 = vpack.c.bf16 %v1082, %v1081
  %v1102 = vpack.c.bf16 %v1084, %v1083
  %v1103 = vpack.c.bf16 %v1086, %v1085
  %v1104 = vpack.c.bf16 %v1088, %v1087
  %v1105 = vpack.c.bf16 %v1090, %v1089
  %v1106 = vpack.c.bf16 %v1092, %v1091
  %v1107 = vpack.c.bf16 %v1094, %v1093
  %v1108 = vpack.c.bf16 %v1096, %v1095
  %v1109 = vpack.c.bf16 %v1098, %v1097
  %v1110 = vpack.c.bf16 %v1099, %v1099
  %v1122 = vunpack.c.l.b16 %v1100
  %v1123 = vunpack.c.h.b16 %v1100
  %v1124 = vunpack.c.l.b16 %v1101
  %v1125 = vunpack.c.h.b16 %v1101
  %v1126 = vunpack.c.l.b16 %v1102
  %v1127 = vunpack.c.h.b16 %v1102
  %v1128 = vunpack.c.l.b16 %v1103
  %v1129 = vunpack.c.h.b16 %v1103
  %v1130 = vunpack.c.l.b16 %v1104
  %v1131 = vunpack.c.h.b16 %v1104
  %v1132 = vunpack.c.l.b16 %v1105
  %v1133 = vunpack.c.h.b16 %v1105
  %v1134 = vunpack.c.l.b16 %v1106
  %v1135 = vunpack.c.h.b16 %v1106
  %v1136 = vunpack.c.l.b16 %v1107
  %v1137 = vunpack.c.h.b16 %v1107
  %v1138 = vunpack.c.l.b16 %v1108
  %v1139 = vunpack.c.h.b16 %v1108
  %v1140 = vunpack.c.l.b16 %v1109
  %v1141 = vunpack.c.h.b16 %v1109
  %v1142 = vunpack.c.l.b16 %v1110
  %v1143 = vpack.c.b16 %v1122, %v1122
  %v1144 = vpack.c.b16 %v1123, %v1123
  %v1145 = vpack.c.b16 %v1124, %v1124
  %v1146 = vpack.c.b16 %v1125, %v1125
  %v1147 = vpack.c.b16 %v1126, %v1126
  %v1148 = vpack.c.b16 %v1127, %v1127
  %v1149 = vpack.c.b16 %v1128, %v1128
  %v1150 = vpack.c.b16 %v1129, %v1129
  %v1151 = vpack.c.b16 %v1130, %v1130
  %v1152 = vpack.c.b16 %v1131, %v1131
  %v1153 = vpack.c.b16 %v1132, %v1132
  %v1154 = vpack.c.b16 %v1133, %v1133
  %v1155 = vpack.c.b16 %v1134, %v1134
  %v1156 = vpack.c.b16 %v1135, %v1135
  %v1157 = vpack.c.b16 %v1136, %v1136
  %v1158 = vpack.c.b16 %v1137, %v1137
  %v1159 = vpack.c.b16 %v1138, %v1138
  %v1160 = vpack.c.b16 %v1139, %v1139
  %v1161 = vpack.c.b16 %v1140, %v1140
  %v1162 = vpack.c.b16 %v1141, %v1141
  %v1163 = vpack.c.b16 %v1142, %v1142
  %vm1185 = vcmask 125952
  %1186 = vst.msk [vmem:[%s3] sm:$0xf] %vm1185, %v1143
  %1187 = vst.msk [vmem:[%s3 + $0x4] sm:$0xf] %vm1185, %v1144
  %1188 = vst.msk [vmem:[%s3 + $0x8] sm:$0xf] %vm1185, %v1145
  %1189 = vst.msk [vmem:[%s3 + $0xc] sm:$0xf] %vm1185, %v1146
  %1190 = vst.msk [vmem:[%s3 + $0x10] sm:$0xf] %vm1185, %v1147
  %1191 = vst.msk [vmem:[%s3 + $0x14] sm:$0xf] %vm1185, %v1148
  %1192 = vst.msk [vmem:[%s3 + $0x18] sm:$0xf] %vm1185, %v1149
  %1193 = vst.msk [vmem:[%s3 + $0x1c] sm:$0xf] %vm1185, %v1150
  %1194 = vst.msk [vmem:[%s3 + $0x20] sm:$0xf] %vm1185, %v1151
  %1195 = vst.msk [vmem:[%s3 + $0x24] sm:$0xf] %vm1185, %v1152
  %1196 = vst.msk [vmem:[%s3 + $0x28] sm:$0xf] %vm1185, %v1153
  %1197 = vst.msk [vmem:[%s3 + $0x2c] sm:$0xf] %vm1185, %v1154
  %1198 = vst.msk [vmem:[%s3 + $0x30] sm:$0xf] %vm1185, %v1155
  %1199 = vst.msk [vmem:[%s3 + $0x34] sm:$0xf] %vm1185, %v1156
  %1200 = vst.msk [vmem:[%s3 + $0x38] sm:$0xf] %vm1185, %v1157
  %1201 = vst.msk [vmem:[%s3 + $0x3c] sm:$0xf] %vm1185, %v1158
  %1202 = vst.msk [vmem:[%s3 + $0x40] sm:$0xf] %vm1185, %v1159
  %1203 = vst.msk [vmem:[%s3 + $0x44] sm:$0xf] %vm1185, %v1160
  %1204 = vst.msk [vmem:[%s3 + $0x48] sm:$0xf] %vm1185, %v1161
  %1205 = vst.msk [vmem:[%s3 + $0x4c] sm:$0xf] %vm1185, %v1162
  %1206 = vst.msk [vmem:[%s3 + $0x50] sm:$0xf] %vm1185, %v1163
  // Predicated region
  $region14: #{fcn_forward.4} parent=0 // pred_check
    _
  $region15: #{fcn_forward.4} parent=0 // pred_check_branch
    %1208 = sbr.rel (0) target = $region17
  $region16: #{fcn_forward.4} parent=0 // pred_region
    _
  $region17: #{fcn_forward.4} parent=0 // pred_fallthru
    _
  // Predicated region
  $region18: #{fcn_forward.4} parent=0 // pred_check
    _
  $region19: #{fcn_forward.4} parent=0 // pred_check_branch
    %1210 = sbr.rel (0) target = $region21
  $region20: #{fcn_forward.4} parent=0 // pred_region
    _
  $region21: #{fcn_forward.4} parent=0 // pred_fallthru
    _

// kernel: fcn_forward.5
$region0: #{fcn_forward.5}
  #allocation0 [shape = 'u32[]', space=smem, size = 0x4, offset = 0x4, fixed_abs, tag = 'smem constant byte address 0x4 - core index']
  #allocation1 [shape = 'u32[144,128]{1,0:T(1,128)}', space=vmem, size = 0x12000, scoped, tag = 'internal scratch']
  %s0 = inlined_call_operand.vmem [shape: bf16[1,64,64], index: 0, kind: input, shape index: {}]
  %s1 = inlined_call_operand.vmem [shape: bf16[4,64,32], index: 1, kind: input, shape index: {}]
  %s2 = inlined_call_operand.vmem [shape: f32[1,32], index: 2, kind: input, shape index: {}]
  %s3 = inlined_call_operand.vmem [shape: bf16[56,32], index: 3, kind: output, shape index: {}]
  %s4 = sld [smem:[#allocation0]]
  $region22: #{fcn_forward.5} parent=0
    _
  %s6 = ssub.s32 1, %s4
  %s7 = scalar_select 0, %s6, %s4
  // Predicated region
  $region2: #{fcn_forward.5} parent=0 // pred_check
    _
  $region3: #{fcn_forward.5} parent=0 // pred_check_branch
    %9 = sbr.rel (0) target = $region5
  $region4: #{fcn_forward.5} parent=0 // pred_region
    _
  $region5: #{fcn_forward.5} parent=0 // pred_fallthru
    _
  // Predicated region
  $region6: #{fcn_forward.5} parent=0 // pred_check
    _
  $region7: #{fcn_forward.5} parent=0 // pred_check_branch
    %11 = sbr.rel (0) target = $region9
  $region8: #{fcn_forward.5} parent=0 // pred_region
    _
  $region9: #{fcn_forward.5} parent=0 // pred_fallthru
    _
  // Predicated region
  $region10: #{fcn_forward.5} parent=0 // pred_check
    _
  $region11: #{fcn_forward.5} parent=0 // pred_check_branch
    %13 = sbr.rel (0) target = $region13
  $region12: #{fcn_forward.5} parent=0 // pred_region
    _
  $region13: #{fcn_forward.5} parent=0 // pred_fallthru
    _
  %v15 = vld [vmem:[%s0] sm:$0xf]
  %v16 = vld [vmem:[%s0 + $0x4] sm:$0xf]
  %v17 = vld [vmem:[%s0 + $0x8] sm:$0xf]
  %v18 = vld [vmem:[%s0 + $0xc] sm:$0xf]
  %v19 = vld [vmem:[%s0 + $0x10] sm:$0xf]
  %v20 = vld [vmem:[%s0 + $0x14] sm:$0xf]
  %v21 = vld [vmem:[%s0 + $0x18] sm:$0xf]
  %v22 = vld [vmem:[%s1] sm:$0xf]
  %v23 = vld [vmem:[%s1 + $0x4] sm:$0xf]
  %v24 = vld [vmem:[%s1 + $0x8] sm:$0xf]
  %v25 = vld [vmem:[%s1 + $0xc] sm:$0xf]
  %v26 = vld [vmem:[%s1 + $0x10] sm:$0xf]
  %v27 = vld [vmem:[%s1 + $0x14] sm:$0xf]
  %v28 = vld [vmem:[%s1 + $0x18] sm:$0xf]
  %v29 = vld [vmem:[%s1 + $0x1c] sm:$0xf]
  %v30 = vld [vmem:[%s0 + $0x1c] sm:$0x1]
  %s31 = scalar_lea.vmem %s1, 32
  %v32 = vld [vmem:[%s31] sm:$0xf]
  %v33 = vld [vmem:[%s31 + $0x4] sm:$0xf]
  %v34 = vld [vmem:[%s31 + $0x8] sm:$0xf]
  %v35 = vld [vmem:[%s31 + $0xc] sm:$0xf]
  %v36 = vld [vmem:[%s31 + $0x10] sm:$0xf]
  %v37 = vld [vmem:[%s31 + $0x14] sm:$0xf]
  %v38 = vld [vmem:[%s31 + $0x18] sm:$0xf]
  %v39 = vld [vmem:[%s31 + $0x1c] sm:$0xf]
  %v48 = vunpack.c.l.b16 %v15
  %v49 = vunpack.c.l.b16 %v16
  %v50 = vunpack.c.l.b16 %v17
  %v51 = vunpack.c.l.b16 %v18
  %v52 = vunpack.c.l.b16 %v19
  %v53 = vunpack.c.l.b16 %v20
  %v54 = vunpack.c.l.b16 %v21
  %v55 = vunpack.c.l.b16 %v30
  %v56 = vpack.c.b16 %v49, %v48
  %v57 = vpack.c.b16 %v51, %v50
  %v58 = vpack.c.b16 %v53, %v52
  %v59 = vpack.c.b16 %v55, %v54
  %vm60 = vsmask.f32 7424
  %v62 = vshrl.u32 %v56, 16
  %v64 = vshll.u32 %v56, 16
  %v66 = vrot.slane %v64, 1
  %v67 = vor.u32 %v62, %v66
  %v69 = vshll.u32 %v57, 16
  %v71 = vrot.slane %v69, 1
  %v72 = vsel %vm60, %v67, %v71
  %v73 = vshrl.u32 %v57, 16
  %v75 = vor.u32 %v73, %v71
  %v77 = vshll.u32 %v58, 16
  %v79 = vrot.slane %v77, 1
  %v80 = vsel %vm60, %v75, %v79
  %v81 = vshrl.u32 %v58, 16
  %v83 = vor.u32 %v81, %v79
  %v85 = vshll.u32 %v59, 16
  %v87 = vrot.slane %v85, 1
  %v88 = vsel %vm60, %v83, %v87
  %v89 = vshrl.u32 %v59, 16
  %v91 = vor.u32 %v89, %v87
  %v100 = vunpack.c.l.b16 %v32
  %v101 = vunpack.c.l.b16 %v33
  %v102 = vunpack.c.l.b16 %v34
  %v103 = vunpack.c.l.b16 %v35
  %v104 = vunpack.c.l.b16 %v36
  %v105 = vunpack.c.l.b16 %v37
  %v106 = vunpack.c.l.b16 %v38
  %v107 = vunpack.c.l.b16 %v39
  %v108 = vpack.c.b16 %v101, %v100
  %v109 = vpack.c.b16 %v103, %v102
  %v110 = vpack.c.b16 %v105, %v104
  %v111 = vpack.c.b16 %v107, %v106
  %vm116 = vcmask 523264
  %v118 = vsel %vm116, %v72, 0
  %v121 = vsel %vm116, %v80, 0
  %v124 = vsel %vm116, %v88, 0
  %v127 = vsel %vm116, %v91, 0
  %129 = vmatprep.subr.bf16.mxu0 0
  %130 = vmatpush1.bf16.msra.mxu0 %v108
  %131 = vmatprep.subr.bf16.mxu0 0
  %132 = vmatpush1.bf16.msra.mxu0 %v109
  %133 = vmatprep.subr.bf16.mxu0 0
  %134 = vmatpush1.bf16.msra.mxu0 %v110
  %135 = vmatprep.subr.bf16.mxu0 0
  %136 = vmatpush1.bf16.msra.mxu0 %v111
  %137 = vmatprep.subr.bf16.mxu0 0
  %138 = vmatpush1.bf16.msra.mxu0 0
  %139 = vmatprep.subr.bf16.mxu0 0
  %140 = vmatpush1.bf16.msra.mxu0 0
  %141 = vmatprep.subr.bf16.mxu0 0
  %142 = vmatpush1.bf16.msra.mxu0 0
  %143 = vmatprep.subr.bf16.mxu0 0
  %144 = vmatpush1.bf16.msra.mxu0 0
  %145 = vmatprep.subr.bf16.mxu0 0
  %146 = vmatpush1.bf16.msra.mxu0 0
  %147 = vmatprep.subr.bf16.mxu0 0
  %148 = vmatpush1.bf16.msra.mxu0 0
  %149 = vmatprep.subr.bf16.mxu0 0
  %150 = vmatpush1.bf16.msra.mxu0 0
  %151 = vmatprep.subr.bf16.mxu0 0
  %152 = vmatpush1.bf16.msra.mxu0 0
  %153 = vmatprep.subr.bf16.mxu0 0
  %154 = vmatpush1.bf16.msra.mxu0 0
  %155 = vmatprep.subr.bf16.mxu0 0
  %156 = vmatpush1.bf16.msra.mxu0 0
  %157 = vmatprep.subr.bf16.mxu0 0
  %158 = vmatpush1.bf16.msra.mxu0 0
  %159 = vmatprep.subr.bf16.mxu0 0
  %160 = vmatpush1.bf16.msra.mxu0 0
  %161 = vmatprep.mubr.bf16.mxu0 0
  %162 = vmatmul.mubr.bf16.gmra.mrb[0].mxu0 %v118
  %v163 = vpop.f32.mrb[0].mxu0
  %v164 = vadd.f32 0.0, %v163
  %v165 = vpop.f32.mrb[0].mxu0
  %v166 = vpop.f32.mrb[0].mxu0
  %v167 = vadd.f32 0.0, %v166
  %v168 = vpop.f32.mrb[0].mxu0
  %169 = vmatprep.mubr.bf16.mxu0 0
  %170 = vmatmul.mubr.bf16.gmra.mrb[0].mxu0 %v121
  %v171 = vpop.f32.mrb[0].mxu0
  %v172 = vadd.f32 0.0, %v171
  %v173 = vpop.f32.mrb[0].mxu0
  %v174 = vpop.f32.mrb[0].mxu0
  %v175 = vadd.f32 0.0, %v174
  %v176 = vpop.f32.mrb[0].mxu0
  %177 = vmatprep.mubr.bf16.mxu0 0
  %178 = vmatmul.mubr.bf16.gmra.mrb[0].mxu0 %v124
  %v179 = vpop.f32.mrb[0].mxu0
  %v180 = vadd.f32 0.0, %v179
  %v181 = vpop.f32.mrb[0].mxu0
  %v182 = vpop.f32.mrb[0].mxu0
  %v183 = vadd.f32 0.0, %v182
  %v184 = vpop.f32.mrb[0].mxu0
  %185 = vmatprep.mubr.bf16.mxu0 0
  %186 = vmatmul.mubr.bf16.gmra.mrb[0].mxu0 %v127
  %v187 = vpop.f32.mrb[0].mxu0
  %v188 = vadd.f32 0.0, %v187
  %v189 = vpop.f32.mrb[0].mxu0
  %v190 = vpop.f32.mrb[0].mxu0
  %v191 = vpop.f32.mrb[0].mxu0
  %192 = vdwg.mxu0
  %v193 = vpack.c.b16 %v54, %v54
  %v202 = vunpack.c.l.b16 %v22
  %v203 = vunpack.c.l.b16 %v23
  %v204 = vunpack.c.l.b16 %v24
  %v205 = vunpack.c.l.b16 %v25
  %v206 = vunpack.c.l.b16 %v26
  %v207 = vunpack.c.l.b16 %v27
  %v208 = vunpack.c.l.b16 %v28
  %v209 = vunpack.c.l.b16 %v29
  %v210 = vpack.c.b16 %v203, %v202
  %v211 = vpack.c.b16 %v205, %v204
  %v212 = vpack.c.b16 %v207, %v206
  %v213 = vpack.c.b16 %v209, %v208
  %v218 = vsel %vm116, %v56, 0
  %v220 = vsel %vm116, %v57, 0
  %v222 = vsel %vm116, %v58, 0
  %v225 = vsel %vm116, %v193, 0
  %227 = vmatprep.subr.bf16.mxu0 0
  %228 = vmatpush1.bf16.msra.mxu0 %v210
  %229 = vmatprep.subr.bf16.mxu0 0
  %230 = vmatpush1.bf16.msra.mxu0 %v211
  %231 = vmatprep.subr.bf16.mxu0 0
  %232 = vmatpush1.bf16.msra.mxu0 %v212
  %233 = vmatprep.subr.bf16.mxu0 0
  %234 = vmatpush1.bf16.msra.mxu0 %v213
  %235 = vmatprep.subr.bf16.mxu0 0
  %236 = vmatpush1.bf16.msra.mxu0 0
  %237 = vmatprep.subr.bf16.mxu0 0
  %238 = vmatpush1.bf16.msra.mxu0 0
  %239 = vmatprep.subr.bf16.mxu0 0
  %240 = vmatpush1.bf16.msra.mxu0 0
  %241 = vmatprep.subr.bf16.mxu0 0
  %242 = vmatpush1.bf16.msra.mxu0 0
  %243 = vmatprep.subr.bf16.mxu0 0
  %244 = vmatpush1.bf16.msra.mxu0 0
  %245 = vmatprep.subr.bf16.mxu0 0
  %246 = vmatpush1.bf16.msra.mxu0 0
  %247 = vmatprep.subr.bf16.mxu0 0
  %248 = vmatpush1.bf16.msra.mxu0 0
  %249 = vmatprep.subr.bf16.mxu0 0
  %250 = vmatpush1.bf16.msra.mxu0 0
  %251 = vmatprep.subr.bf16.mxu0 0
  %252 = vmatpush1.bf16.msra.mxu0 0
  %253 = vmatprep.subr.bf16.mxu0 0
  %254 = vmatpush1.bf16.msra.mxu0 0
  %255 = vmatprep.subr.bf16.mxu0 0
  %256 = vmatpush1.bf16.msra.mxu0 0
  %257 = vmatprep.subr.bf16.mxu0 0
  %258 = vmatpush1.bf16.msra.mxu0 0
  %259 = vmatprep.mubr.bf16.mxu0 0
  %260 = vmatmul.mubr.bf16.gmra.mrb[0].mxu0 %v218
  %v261 = vpop.f32.mrb[0].mxu0
  %v262 = vadd.f32 %v164, %v261
  %v263 = vpop.f32.mrb[0].mxu0
  %v264 = vpop.f32.mrb[0].mxu0
  %v265 = vadd.f32 %v167, %v264
  %v266 = vpop.f32.mrb[0].mxu0
  %267 = vmatprep.mubr.bf16.mxu0 0
  %268 = vmatmul.mubr.bf16.gmra.mrb[0].mxu0 %v220
  %v269 = vpop.f32.mrb[0].mxu0
  %v270 = vadd.f32 %v172, %v269
  %v271 = vpop.f32.mrb[0].mxu0
  %v272 = vpop.f32.mrb[0].mxu0
  %v273 = vadd.f32 %v175, %v272
  %v274 = vpop.f32.mrb[0].mxu0
  %275 = vmatprep.mubr.bf16.mxu0 0
  %276 = vmatmul.mubr.bf16.gmra.mrb[0].mxu0 %v222
  %v277 = vpop.f32.mrb[0].mxu0
  %v278 = vadd.f32 %v180, %v277
  %v279 = vpop.f32.mrb[0].mxu0
  %v280 = vpop.f32.mrb[0].mxu0
  %v281 = vadd.f32 %v183, %v280
  %v282 = vpop.f32.mrb[0].mxu0
  %283 = vmatprep.mubr.bf16.mxu0 0
  %284 = vmatmul.mubr.bf16.gmra.mrb[0].mxu0 %v225
  %v285 = vpop.f32.mrb[0].mxu0
  %v286 = vadd.f32 %v188, %v285
  %v287 = vpop.f32.mrb[0].mxu0
  %v288 = vpop.f32.mrb[0].mxu0
  %v289 = vpop.f32.mrb[0].mxu0
  %290 = vdwg.mxu0
  %v291 = vld [vmem:[%s0] sm:$0xc]
  %v292 = vld [vmem:[%s0 + $0x1c] sm:$0x7]
  %s293 = scalar_lea.vmem %s1, 64
  %v294 = vld [vmem:[%s293] sm:$0xf]
  %v295 = vld [vmem:[%s293 + $0x4] sm:$0xf]
  %v296 = vld [vmem:[%s293 + $0x8] sm:$0xf]
  %v297 = vld [vmem:[%s293 + $0xc] sm:$0xf]
  %v298 = vld [vmem:[%s293 + $0x10] sm:$0xf]
  %v299 = vld [vmem:[%s293 + $0x14] sm:$0xf]
  %v300 = vld [vmem:[%s293 + $0x18] sm:$0xf]
  %v301 = vld [vmem:[%s293 + $0x1c] sm:$0xf]
  %v304 = vunpack.c.l.b16 %v291
  %v305 = vunpack.c.l.b16 %v292
  %v306 = vpack.c.b16 %v49, %v304
  %v307 = vpack.c.b16 %v305, %v54
  %vm308 = vsmask.f32 5376
  %v310 = vshrl.u32 %v306, 16
  %v312 = vrot.slane %v310, 2
  %v313 = vshll.u32 %v306, 16
  %v315 = vrot.slane %v313, 3
  %v316 = vor.u32 %v312, %v315
  %v317 = vrot.slane %v73, 2
  %v318 = vrot.slane %v69, 3
  %v319 = vor.u32 %v317, %v318
  %v320 = vsel %vm308, %v316, %v319
  %v321 = vrot.slane %v81, 2
  %v322 = vrot.slane %v77, 3
  %v323 = vor.u32 %v321, %v322
  %v324 = vsel %vm308, %v319, %v323
  %v326 = vshrl.u32 %v307, 16
  %v328 = vrot.slane %v326, 2
  %v329 = vshll.u32 %v307, 16
  %v331 = vrot.slane %v329, 3
  %v332 = vor.u32 %v328, %v331
  %v333 = vsel %vm308, %v323, %v332
  %v342 = vunpack.c.l.b16 %v294
  %v343 = vunpack.c.l.b16 %v295
  %v344 = vunpack.c.l.b16 %v296
  %v345 = vunpack.c.l.b16 %v297
  %v346 = vunpack.c.l.b16 %v298
  %v347 = vunpack.c.l.b16 %v299
  %v348 = vunpack.c.l.b16 %v300
  %v349 = vunpack.c.l.b16 %v301
  %v350 = vpack.c.b16 %v343, %v342
  %v351 = vpack.c.b16 %v345, %v344
  %v352 = vpack.c.b16 %v347, %v346
  %v353 = vpack.c.b16 %v349, %v348
  %v359 = vsel %vm116, %v320, 0
  %v362 = vsel %vm116, %v324, 0
  %v365 = vsel %vm116, %v333, 0
  %v368 = vsel %vm116, %v332, 0
  %370 = vmatprep.subr.bf16.mxu0 0
  %371 = vmatpush1.bf16.msra.mxu0 %v350
  %372 = vmatprep.subr.bf16.mxu0 0
  %373 = vmatpush1.bf16.msra.mxu0 %v351
  %374 = vmatprep.subr.bf16.mxu0 0
  %375 = vmatpush1.bf16.msra.mxu0 %v352
  %376 = vmatprep.subr.bf16.mxu0 0
  %377 = vmatpush1.bf16.msra.mxu0 %v353
  %378 = vmatprep.subr.bf16.mxu0 0
  %379 = vmatpush1.bf16.msra.mxu0 0
  %380 = vmatprep.subr.bf16.mxu0 0
  %381 = vmatpush1.bf16.msra.mxu0 0
  %382 = vmatprep.subr.bf16.mxu0 0
  %383 = vmatpush1.bf16.msra.mxu0 0
  %384 = vmatprep.subr.bf16.mxu0 0
  %385 = vmatpush1.bf16.msra.mxu0 0
  %386 = vmatprep.subr.bf16.mxu0 0
  %387 = vmatpush1.bf16.msra.mxu0 0
  %388 = vmatprep.subr.bf16.mxu0 0
  %389 = vmatpush1.bf16.msra.mxu0 0
  %390 = vmatprep.subr.bf16.mxu0 0
  %391 = vmatpush1.bf16.msra.mxu0 0
  %392 = vmatprep.subr.bf16.mxu0 0
  %393 = vmatpush1.bf16.msra.mxu0 0
  %394 = vmatprep.subr.bf16.mxu0 0
  %395 = vmatpush1.bf16.msra.mxu0 0
  %396 = vmatprep.subr.bf16.mxu0 0
  %397 = vmatpush1.bf16.msra.mxu0 0
  %398 = vmatprep.subr.bf16.mxu0 0
  %399 = vmatpush1.bf16.msra.mxu0 0
  %400 = vmatprep.subr.bf16.mxu0 0
  %401 = vmatpush1.bf16.msra.mxu0 0
  %402 = vmatprep.mubr.bf16.mxu0 0
  %403 = vmatmul.mubr.bf16.gmra.mrb[0].mxu0 %v359
  %v404 = vpop.f32.mrb[0].mxu0
  %v405 = vadd.f32 0.0, %v404
  %v406 = vpop.f32.mrb[0].mxu0
  %v407 = vpop.f32.mrb[0].mxu0
  %v408 = vadd.f32 0.0, %v407
  %v409 = vpop.f32.mrb[0].mxu0
  %410 = vmatprep.mubr.bf16.mxu0 0
  %411 = vmatmul.mubr.bf16.gmra.mrb[0].mxu0 %v362
  %v412 = vpop.f32.mrb[0].mxu0
  %v413 = vadd.f32 0.0, %v412
  %v414 = vpop.f32.mrb[0].mxu0
  %v415 = vpop.f32.mrb[0].mxu0
  %v416 = vadd.f32 0.0, %v415
  %v417 = vpop.f32.mrb[0].mxu0
  %418 = vmatprep.mubr.bf16.mxu0 0
  %419 = vmatmul.mubr.bf16.gmra.mrb[0].mxu0 %v365
  %v420 = vpop.f32.mrb[0].mxu0
  %v421 = vadd.f32 0.0, %v420
  %v422 = vpop.f32.mrb[0].mxu0
  %v423 = vpop.f32.mrb[0].mxu0
  %v424 = vadd.f32 0.0, %v423
  %v425 = vpop.f32.mrb[0].mxu0
  %426 = vmatprep.mubr.bf16.mxu0 0
  %427 = vmatmul.mubr.bf16.gmra.mrb[0].mxu0 %v368
  %v428 = vpop.f32.mrb[0].mxu0
  %v429 = vadd.f32 0.0, %v428
  %v430 = vpop.f32.mrb[0].mxu0
  %v431 = vpop.f32.mrb[0].mxu0
  %v432 = vpop.f32.mrb[0].mxu0
  %433 = vdwg.mxu0
  %v434 = vadd.f32 %v262, %v405
  %v435 = vadd.f32 %v265, %v408
  %v436 = vadd.f32 %v270, %v413
  %v437 = vadd.f32 %v273, %v416
  %v438 = vadd.f32 %v278, %v421
  %v439 = vadd.f32 %v281, %v424
  %v440 = vadd.f32 %v286, %v429
  %v441 = vld [vmem:[%s0] sm:$0x8]
  %s442 = scalar_lea.vmem %s1, 96
  %v443 = vld [vmem:[%s442] sm:$0xf]
  %v444 = vld [vmem:[%s442 + $0x4] sm:$0xf]
  %v445 = vld [vmem:[%s442 + $0x8] sm:$0xf]
  %v446 = vld [vmem:[%s442 + $0xc] sm:$0xf]
  %v447 = vld [vmem:[%s442 + $0x10] sm:$0xf]
  %v448 = vld [vmem:[%s442 + $0x14] sm:$0xf]
  %v449 = vld [vmem:[%s442 + $0x18] sm:$0xf]
  %v450 = vld [vmem:[%s442 + $0x1c] sm:$0xf]
  %v452 = vunpack.c.l.b16 %v441
  %v453 = vpack.c.b16 %v49, %v452
  %vm454 = vcmask 1044480
  %v455 = vrot.slane %v453, 3
  %v456 = vrot.slane %v57, 3
  %v457 = vsel %vm454, %v455, %v456
  %v458 = vrot.slane %v58, 3
  %v459 = vsel %vm454, %v456, %v458
  %v460 = vrot.slane %v307, 3
  %v461 = vsel %vm454, %v458, %v460
  %v470 = vunpack.c.l.b16 %v443
  %v471 = vunpack.c.l.b16 %v444
  %v472 = vunpack.c.l.b16 %v445
  %v473 = vunpack.c.l.b16 %v446
  %v474 = vunpack.c.l.b16 %v447
  %v475 = vunpack.c.l.b16 %v448
  %v476 = vunpack.c.l.b16 %v449
  %v477 = vunpack.c.l.b16 %v450
  %v478 = vpack.c.b16 %v471, %v470
  %v479 = vpack.c.b16 %v473, %v472
  %v480 = vpack.c.b16 %v475, %v474
  %v481 = vpack.c.b16 %v477, %v476
  %v487 = vsel %vm116, %v457, 0
  %v490 = vsel %vm116, %v459, 0
  %v493 = vsel %vm116, %v461, 0
  %v496 = vsel %vm116, %v460, 0
  %498 = vmatprep.subr.bf16.mxu0 0
  %499 = vmatpush1.bf16.msra.mxu0 %v478
  %500 = vmatprep.subr.bf16.mxu0 0
  %501 = vmatpush1.bf16.msra.mxu0 %v479
  %502 = vmatprep.subr.bf16.mxu0 0
  %503 = vmatpush1.bf16.msra.mxu0 %v480
  %504 = vmatprep.subr.bf16.mxu0 0
  %505 = vmatpush1.bf16.msra.mxu0 %v481
  %506 = vmatprep.subr.bf16.mxu0 0
  %507 = vmatpush1.bf16.msra.mxu0 0
  %508 = vmatprep.subr.bf16.mxu0 0
  %509 = vmatpush1.bf16.msra.mxu0 0
  %510 = vmatprep.subr.bf16.mxu0 0
  %511 = vmatpush1.bf16.msra.mxu0 0
  %512 = vmatprep.subr.bf16.mxu0 0
  %513 = vmatpush1.bf16.msra.mxu0 0
  %514 = vmatprep.subr.bf16.mxu0 0
  %515 = vmatpush1.bf16.msra.mxu0 0
  %516 = vmatprep.subr.bf16.mxu0 0
  %517 = vmatpush1.bf16.msra.mxu0 0
  %518 = vmatprep.subr.bf16.mxu0 0
  %519 = vmatpush1.bf16.msra.mxu0 0
  %520 = vmatprep.subr.bf16.mxu0 0
  %521 = vmatpush1.bf16.msra.mxu0 0
  %522 = vmatprep.subr.bf16.mxu0 0
  %523 = vmatpush1.bf16.msra.mxu0 0
  %524 = vmatprep.subr.bf16.mxu0 0
  %525 = vmatpush1.bf16.msra.mxu0 0
  %526 = vmatprep.subr.bf16.mxu0 0
  %527 = vmatpush1.bf16.msra.mxu0 0
  %528 = vmatprep.subr.bf16.mxu0 0
  %529 = vmatpush1.bf16.msra.mxu0 0
  %530 = vmatprep.mubr.bf16.mxu0 0
  %531 = vmatmul.mubr.bf16.gmra.mrb[0].mxu0 %v487
  %v532 = vpop.f32.mrb[0].mxu0
  %v533 = vadd.f32 0.0, %v532
  %v534 = vpop.f32.mrb[0].mxu0
  %v535 = vpop.f32.mrb[0].mxu0
  %v536 = vadd.f32 0.0, %v535
  %v537 = vpop.f32.mrb[0].mxu0
  %538 = vmatprep.mubr.bf16.mxu0 0
  %539 = vmatmul.mubr.bf16.gmra.mrb[0].mxu0 %v490
  %v540 = vpop.f32.mrb[0].mxu0
  %v541 = vadd.f32 0.0, %v540
  %v542 = vpop.f32.mrb[0].mxu0
  %v543 = vpop.f32.mrb[0].mxu0
  %v544 = vadd.f32 0.0, %v543
  %v545 = vpop.f32.mrb[0].mxu0
  %546 = vmatprep.mubr.bf16.mxu0 0
  %547 = vmatmul.mubr.bf16.gmra.mrb[0].mxu0 %v493
  %v548 = vpop.f32.mrb[0].mxu0
  %v549 = vadd.f32 0.0, %v548
  %v550 = vpop.f32.mrb[0].mxu0
  %v551 = vpop.f32.mrb[0].mxu0
  %v552 = vadd.f32 0.0, %v551
  %v553 = vpop.f32.mrb[0].mxu0
  %554 = vmatprep.mubr.bf16.mxu0 0
  %555 = vmatmul.mubr.bf16.gmra.mrb[0].mxu0 %v496
  %v556 = vpop.f32.mrb[0].mxu0
  %v557 = vadd.f32 0.0, %v556
  %v558 = vpop.f32.mrb[0].mxu0
  %v559 = vpop.f32.mrb[0].mxu0
  %v560 = vpop.f32.mrb[0].mxu0
  %561 = vdwg.mxu0
  %v562 = vadd.f32 %v434, %v533
  %v563 = vadd.f32 %v435, %v536
  %v564 = vadd.f32 %v436, %v541
  %v565 = vadd.f32 %v437, %v544
  %v566 = vadd.f32 %v438, %v549
  %v567 = vadd.f32 %v439, %v552
  %v568 = vadd.f32 %v440, %v557
  %v569 = vld [vmem:[%s2] sm:$0x1]
  %v571 = vlaneseq
  %v572 = vshrl.u32 %v571, 7
  %v573 = vsub.s32 0, %v572
  %v574 = vrot.slane %v569, %v573
  %v576 = vadd.f32 %v562, %v574
  %v577 = vadd.f32 %v563, %v574
  %v578 = vadd.f32 %v564, %v574
  %v579 = vadd.f32 %v565, %v574
  %v580 = vadd.f32 %v566, %v574
  %v581 = vadd.f32 %v567, %v574
  %v582 = vadd.f32 %v568, %v574
  %v583 = vmax.f32 %v576, 0.0
  %v584 = vmax.f32 %v577, 0.0
  %v585 = vmax.f32 %v578, 0.0
  %v586 = vmax.f32 %v579, 0.0
  %v587 = vmax.f32 %v580, 0.0
  %v588 = vmax.f32 %v581, 0.0
  %v589 = vmax.f32 %v582, 0.0
  %v590 = vpack.c.bf16 %v584, %v583
  %v591 = vpack.c.bf16 %v586, %v585
  %v592 = vpack.c.bf16 %v588, %v587
  %v593 = vpack.c.bf16 %v589, %v589
  %v598 = vunpack.c.l.b16 %v590
  %v599 = vunpack.c.h.b16 %v590
  %v600 = vunpack.c.l.b16 %v591
  %v601 = vunpack.c.h.b16 %v591
  %v602 = vunpack.c.l.b16 %v592
  %v603 = vunpack.c.h.b16 %v592
  %v604 = vunpack.c.l.b16 %v593
  %v605 = vpack.c.b16 %v598, %v598
  %v606 = vpack.c.b16 %v599, %v599
  %v607 = vpack.c.b16 %v600, %v600
  %v608 = vpack.c.b16 %v601, %v601
  %v609 = vpack.c.b16 %v602, %v602
  %v610 = vpack.c.b16 %v603, %v603
  %v611 = vpack.c.b16 %v604, %v604
  %vm619 = vcmask 257024
  %620 = vst.msk [vmem:[%s3] sm:$0xf] %vm619, %v605
  %621 = vst.msk [vmem:[%s3 + $0x4] sm:$0xf] %vm619, %v606
  %622 = vst.msk [vmem:[%s3 + $0x8] sm:$0xf] %vm619, %v607
  %623 = vst.msk [vmem:[%s3 + $0xc] sm:$0xf] %vm619, %v608
  %624 = vst.msk [vmem:[%s3 + $0x10] sm:$0xf] %vm619, %v609
  %625 = vst.msk [vmem:[%s3 + $0x14] sm:$0xf] %vm619, %v610
  %626 = vst.msk [vmem:[%s3 + $0x18] sm:$0xf] %vm619, %v611
  // Predicated region
  $region14: #{fcn_forward.5} parent=0 // pred_check
    _
  $region15: #{fcn_forward.5} parent=0 // pred_check_branch
    %628 = sbr.rel (0) target = $region17
  $region16: #{fcn_forward.5} parent=0 // pred_region
    _
  $region17: #{fcn_forward.5} parent=0 // pred_fallthru
    _
  // Predicated region
  $region18: #{fcn_forward.5} parent=0 // pred_check
    _
  $region19: #{fcn_forward.5} parent=0 // pred_check_branch
    %630 = sbr.rel (0) target = $region21
  $region20: #{fcn_forward.5} parent=0 // pred_region
    _
  $region21: #{fcn_forward.5} parent=0 // pred_fallthru
    _

// kernel: fcn_forward.6
$region0: #{fcn_forward.6}
  #allocation0 [shape = 'u32[]', space=smem, size = 0x4, offset = 0x4, fixed_abs, tag = 'smem constant byte address 0x4 - core index']
  #allocation1 [shape = 'u32[144,128]{1,0:T(1,128)}', space=vmem, size = 0x12000, scoped, tag = 'internal scratch']
  %s0 = inlined_call_operand.vmem [shape: bf16[1,64,32], index: 0, kind: input, shape index: {}]
  %s1 = inlined_call_operand.vmem [shape: bf16[4,32,64], index: 1, kind: input, shape index: {}]
  %s2 = inlined_call_operand.vmem [shape: f32[1,64], index: 2, kind: input, shape index: {}]
  %s3 = inlined_call_operand.vmem [shape: bf16[56,64], index: 3, kind: input, shape index: {}]
  %s4 = inlined_call_operand.vmem [shape: bf16[56,64], index: 4, kind: output, shape index: {}]
  %s5 = sld [smem:[#allocation0]]
  $region26: #{fcn_forward.6} parent=0
    _
  %s7 = ssub.s32 1, %s5
  %s8 = scalar_select 0, %s7, %s5
  // Predicated region
  $region2: #{fcn_forward.6} parent=0 // pred_check
    _
  $region3: #{fcn_forward.6} parent=0 // pred_check_branch
    %10 = sbr.rel (0) target = $region5
  $region4: #{fcn_forward.6} parent=0 // pred_region
    _
  $region5: #{fcn_forward.6} parent=0 // pred_fallthru
    _
  // Predicated region
  $region6: #{fcn_forward.6} parent=0 // pred_check
    _
  $region7: #{fcn_forward.6} parent=0 // pred_check_branch
    %12 = sbr.rel (0) target = $region9
  $region8: #{fcn_forward.6} parent=0 // pred_region
    _
  $region9: #{fcn_forward.6} parent=0 // pred_fallthru
    _
  // Predicated region
  $region10: #{fcn_forward.6} parent=0 // pred_check
    _
  $region11: #{fcn_forward.6} parent=0 // pred_check_branch
    %14 = sbr.rel (0) target = $region13
  $region12: #{fcn_forward.6} parent=0 // pred_region
    _
  $region13: #{fcn_forward.6} parent=0 // pred_fallthru
    _
  // Predicated region
  $region14: #{fcn_forward.6} parent=0 // pred_check
    _
  $region15: #{fcn_forward.6} parent=0 // pred_check_branch
    %16 = sbr.rel (0) target = $region17
  $region16: #{fcn_forward.6} parent=0 // pred_region
    _
  $region17: #{fcn_forward.6} parent=0 // pred_fallthru
    _
  %v18 = vld [vmem:[%s0] sm:$0xf]
  %v19 = vld [vmem:[%s0 + $0x4] sm:$0xf]
  %v20 = vld [vmem:[%s0 + $0x8] sm:$0xf]
  %v21 = vld [vmem:[%s0 + $0xc] sm:$0xf]
  %v22 = vld [vmem:[%s0 + $0x10] sm:$0xf]
  %v23 = vld [vmem:[%s0 + $0x14] sm:$0xf]
  %v24 = vld [vmem:[%s0 + $0x18] sm:$0xf]
  %v25 = vld [vmem:[%s1] sm:$0xf]
  %v26 = vld [vmem:[%s1 + $0x4] sm:$0xf]
  %v27 = vld [vmem:[%s1 + $0x8] sm:$0xf]
  %v28 = vld [vmem:[%s1 + $0xc] sm:$0xf]
  %v29 = vld [vmem:[%s0 + $0x1c] sm:$0x1]
  %s30 = scalar_lea.vmem %s1, 16
  %v31 = vld [vmem:[%s30] sm:$0xf]
  %v32 = vld [vmem:[%s30 + $0x4] sm:$0xf]
  %v33 = vld [vmem:[%s30 + $0x8] sm:$0xf]
  %v34 = vld [vmem:[%s30 + $0xc] sm:$0xf]
  %v43 = vunpack.c.l.b16 %v18
  %v44 = vunpack.c.l.b16 %v19
  %v45 = vunpack.c.l.b16 %v20
  %v46 = vunpack.c.l.b16 %v21
  %v47 = vunpack.c.l.b16 %v22
  %v48 = vunpack.c.l.b16 %v23
  %v49 = vunpack.c.l.b16 %v24
  %v50 = vunpack.c.l.b16 %v29
  %v51 = vpack.c.b16 %v44, %v43
  %v52 = vpack.c.b16 %v46, %v45
  %v53 = vpack.c.b16 %v48, %v47
  %v54 = vpack.c.b16 %v50, %v49
  %vm55 = vsmask.f32 7424
  %v57 = vshrl.u32 %v51, 16
  %v59 = vshll.u32 %v51, 16
  %v61 = vrot.slane %v59, 1
  %v62 = vor.u32 %v57, %v61
  %v64 = vshll.u32 %v52, 16
  %v66 = vrot.slane %v64, 1
  %v67 = vsel %vm55, %v62, %v66
  %v68 = vshrl.u32 %v52, 16
  %v70 = vor.u32 %v68, %v66
  %v72 = vshll.u32 %v53, 16
  %v74 = vrot.slane %v72, 1
  %v75 = vsel %vm55, %v70, %v74
  %v76 = vshrl.u32 %v53, 16
  %v78 = vor.u32 %v76, %v74
  %v80 = vshll.u32 %v54, 16
  %v82 = vrot.slane %v80, 1
  %v83 = vsel %vm55, %v78, %v82
  %v84 = vshrl.u32 %v54, 16
  %v86 = vor.u32 %v84, %v82
  %v91 = vunpack.c.l.b16 %v31
  %v92 = vunpack.c.l.b16 %v32
  %v93 = vunpack.c.l.b16 %v33
  %v94 = vunpack.c.l.b16 %v34
  %v95 = vpack.c.b16 %v92, %v91
  %v96 = vpack.c.b16 %v94, %v93
  %vm99 = vcmask 261120
  %v101 = vsel %vm99, %v67, 0
  %v104 = vsel %vm99, %v75, 0
  %v107 = vsel %vm99, %v83, 0
  %v110 = vsel %vm99, %v86, 0
  %112 = vmatprep.subr.bf16.mxu0 0
  %113 = vmatpush1.bf16.msra.mxu0 %v95
  %114 = vmatprep.subr.bf16.mxu0 0
  %115 = vmatpush1.bf16.msra.mxu0 %v96
  %116 = vmatprep.subr.bf16.mxu0 0
  %117 = vmatpush1.bf16.msra.mxu0 0
  %118 = vmatprep.subr.bf16.mxu0 0
  %119 = vmatpush1.bf16.msra.mxu0 0
  %120 = vmatprep.subr.bf16.mxu0 0
  %121 = vmatpush1.bf16.msra.mxu0 0
  %122 = vmatprep.subr.bf16.mxu0 0
  %123 = vmatpush1.bf16.msra.mxu0 0
  %124 = vmatprep.subr.bf16.mxu0 0
  %125 = vmatpush1.bf16.msra.mxu0 0
  %126 = vmatprep.subr.bf16.mxu0 0
  %127 = vmatpush1.bf16.msra.mxu0 0
  %128 = vmatprep.subr.bf16.mxu0 0
  %129 = vmatpush1.bf16.msra.mxu0 0
  %130 = vmatprep.subr.bf16.mxu0 0
  %131 = vmatpush1.bf16.msra.mxu0 0
  %132 = vmatprep.subr.bf16.mxu0 0
  %133 = vmatpush1.bf16.msra.mxu0 0
  %134 = vmatprep.subr.bf16.mxu0 0
  %135 = vmatpush1.bf16.msra.mxu0 0
  %136 = vmatprep.subr.bf16.mxu0 0
  %137 = vmatpush1.bf16.msra.mxu0 0
  %138 = vmatprep.subr.bf16.mxu0 0
  %139 = vmatpush1.bf16.msra.mxu0 0
  %140 = vmatprep.subr.bf16.mxu0 0
  %141 = vmatpush1.bf16.msra.mxu0 0
  %142 = vmatprep.subr.bf16.mxu0 0
  %143 = vmatpush1.bf16.msra.mxu0 0
  %144 = vmatprep.mubr.bf16.mxu0 0
  %145 = vmatmul.mubr.bf16.gmra.mrb[0].mxu0 %v101
  %v146 = vpop.f32.mrb[0].mxu0
  %v147 = vadd.f32 0.0, %v146
  %v148 = vpop.f32.mrb[0].mxu0
  %v149 = vpop.f32.mrb[0].mxu0
  %v150 = vadd.f32 0.0, %v149
  %v151 = vpop.f32.mrb[0].mxu0
  %152 = vmatprep.mubr.bf16.mxu0 0
  %153 = vmatmul.mubr.bf16.gmra.mrb[0].mxu0 %v104
  %v154 = vpop.f32.mrb[0].mxu0
  %v155 = vadd.f32 0.0, %v154
  %v156 = vpop.f32.mrb[0].mxu0
  %v157 = vpop.f32.mrb[0].mxu0
  %v158 = vadd.f32 0.0, %v157
  %v159 = vpop.f32.mrb[0].mxu0
  %160 = vmatprep.mubr.bf16.mxu0 0
  %161 = vmatmul.mubr.bf16.gmra.mrb[0].mxu0 %v107
  %v162 = vpop.f32.mrb[0].mxu0
  %v163 = vadd.f32 0.0, %v162
  %v164 = vpop.f32.mrb[0].mxu0
  %v165 = vpop.f32.mrb[0].mxu0
  %v166 = vadd.f32 0.0, %v165
  %v167 = vpop.f32.mrb[0].mxu0
  %168 = vmatprep.mubr.bf16.mxu0 0
  %169 = vmatmul.mubr.bf16.gmra.mrb[0].mxu0 %v110
  %v170 = vpop.f32.mrb[0].mxu0
  %v171 = vadd.f32 0.0, %v170
  %v172 = vpop.f32.mrb[0].mxu0
  %v173 = vpop.f32.mrb[0].mxu0
  %v174 = vpop.f32.mrb[0].mxu0
  %175 = vdwg.mxu0
  %v176 = vpack.c.b16 %v49, %v49
  %v181 = vunpack.c.l.b16 %v25
  %v182 = vunpack.c.l.b16 %v26
  %v183 = vunpack.c.l.b16 %v27
  %v184 = vunpack.c.l.b16 %v28
  %v185 = vpack.c.b16 %v182, %v181
  %v186 = vpack.c.b16 %v184, %v183
  %v189 = vsel %vm99, %v51, 0
  %v191 = vsel %vm99, %v52, 0
  %v193 = vsel %vm99, %v53, 0
  %v196 = vsel %vm99, %v176, 0
  %198 = vmatprep.subr.bf16.mxu0 0
  %199 = vmatpush1.bf16.msra.mxu0 %v185
  %200 = vmatprep.subr.bf16.mxu0 0
  %201 = vmatpush1.bf16.msra.mxu0 %v186
  %202 = vmatprep.subr.bf16.mxu0 0
  %203 = vmatpush1.bf16.msra.mxu0 0
  %204 = vmatprep.subr.bf16.mxu0 0
  %205 = vmatpush1.bf16.msra.mxu0 0
  %206 = vmatprep.subr.bf16.mxu0 0
  %207 = vmatpush1.bf16.msra.mxu0 0
  %208 = vmatprep.subr.bf16.mxu0 0
  %209 = vmatpush1.bf16.msra.mxu0 0
  %210 = vmatprep.subr.bf16.mxu0 0
  %211 = vmatpush1.bf16.msra.mxu0 0
  %212 = vmatprep.subr.bf16.mxu0 0
  %213 = vmatpush1.bf16.msra.mxu0 0
  %214 = vmatprep.subr.bf16.mxu0 0
  %215 = vmatpush1.bf16.msra.mxu0 0
  %216 = vmatprep.subr.bf16.mxu0 0
  %217 = vmatpush1.bf16.msra.mxu0 0
  %218 = vmatprep.subr.bf16.mxu0 0
  %219 = vmatpush1.bf16.msra.mxu0 0
  %220 = vmatprep.subr.bf16.mxu0 0
  %221 = vmatpush1.bf16.msra.mxu0 0
  %222 = vmatprep.subr.bf16.mxu0 0
  %223 = vmatpush1.bf16.msra.mxu0 0
  %224 = vmatprep.subr.bf16.mxu0 0
  %225 = vmatpush1.bf16.msra.mxu0 0
  %226 = vmatprep.subr.bf16.mxu0 0
  %227 = vmatpush1.bf16.msra.mxu0 0
  %228 = vmatprep.subr.bf16.mxu0 0
  %229 = vmatpush1.bf16.msra.mxu0 0
  %230 = vmatprep.mubr.bf16.mxu0 0
  %231 = vmatmul.mubr.bf16.gmra.mrb[0].mxu0 %v189
  %v232 = vpop.f32.mrb[0].mxu0
  %v233 = vadd.f32 %v147, %v232
  %v234 = vpop.f32.mrb[0].mxu0
  %v235 = vpop.f32.mrb[0].mxu0
  %v236 = vadd.f32 %v150, %v235
  %v237 = vpop.f32.mrb[0].mxu0
  %238 = vmatprep.mubr.bf16.mxu0 0
  %239 = vmatmul.mubr.bf16.gmra.mrb[0].mxu0 %v191
  %v240 = vpop.f32.mrb[0].mxu0
  %v241 = vadd.f32 %v155, %v240
  %v242 = vpop.f32.mrb[0].mxu0
  %v243 = vpop.f32.mrb[0].mxu0
  %v244 = vadd.f32 %v158, %v243
  %v245 = vpop.f32.mrb[0].mxu0
  %246 = vmatprep.mubr.bf16.mxu0 0
  %247 = vmatmul.mubr.bf16.gmra.mrb[0].mxu0 %v193
  %v248 = vpop.f32.mrb[0].mxu0
  %v249 = vadd.f32 %v163, %v248
  %v250 = vpop.f32.mrb[0].mxu0
  %v251 = vpop.f32.mrb[0].mxu0
  %v252 = vadd.f32 %v166, %v251
  %v253 = vpop.f32.mrb[0].mxu0
  %254 = vmatprep.mubr.bf16.mxu0 0
  %255 = vmatmul.mubr.bf16.gmra.mrb[0].mxu0 %v196
  %v256 = vpop.f32.mrb[0].mxu0
  %v257 = vadd.f32 %v171, %v256
  %v258 = vpop.f32.mrb[0].mxu0
  %v259 = vpop.f32.mrb[0].mxu0
  %v260 = vpop.f32.mrb[0].mxu0
  %261 = vdwg.mxu0
  %v262 = vld [vmem:[%s0] sm:$0xc]
  %v263 = vld [vmem:[%s0 + $0x1c] sm:$0x7]
  %s264 = scalar_lea.vmem %s1, 32
  %v265 = vld [vmem:[%s264] sm:$0xf]
  %v266 = vld [vmem:[%s264 + $0x4] sm:$0xf]
  %v267 = vld [vmem:[%s264 + $0x8] sm:$0xf]
  %v268 = vld [vmem:[%s264 + $0xc] sm:$0xf]
  %v271 = vunpack.c.l.b16 %v262
  %v272 = vunpack.c.l.b16 %v263
  %v273 = vpack.c.b16 %v44, %v271
  %v274 = vpack.c.b16 %v272, %v49
  %vm275 = vsmask.f32 5376
  %v277 = vshrl.u32 %v273, 16
  %v279 = vrot.slane %v277, 2
  %v280 = vshll.u32 %v273, 16
  %v282 = vrot.slane %v280, 3
  %v283 = vor.u32 %v279, %v282
  %v284 = vrot.slane %v68, 2
  %v285 = vrot.slane %v64, 3
  %v286 = vor.u32 %v284, %v285
  %v287 = vsel %vm275, %v283, %v286
  %v288 = vrot.slane %v76, 2
  %v289 = vrot.slane %v72, 3
  %v290 = vor.u32 %v288, %v289
  %v291 = vsel %vm275, %v286, %v290
  %v293 = vshrl.u32 %v274, 16
  %v295 = vrot.slane %v293, 2
  %v296 = vshll.u32 %v274, 16
  %v298 = vrot.slane %v296, 3
  %v299 = vor.u32 %v295, %v298
  %v300 = vsel %vm275, %v290, %v299
  %v305 = vunpack.c.l.b16 %v265
  %v306 = vunpack.c.l.b16 %v266
  %v307 = vunpack.c.l.b16 %v267
  %v308 = vunpack.c.l.b16 %v268
  %v309 = vpack.c.b16 %v306, %v305
  %v310 = vpack.c.b16 %v308, %v307
  %v314 = vsel %vm99, %v287, 0
  %v317 = vsel %vm99, %v291, 0
  %v320 = vsel %vm99, %v300, 0
  %v323 = vsel %vm99, %v299, 0
  %325 = vmatprep.subr.bf16.mxu0 0
  %326 = vmatpush1.bf16.msra.mxu0 %v309
  %327 = vmatprep.subr.bf16.mxu0 0
  %328 = vmatpush1.bf16.msra.mxu0 %v310
  %329 = vmatprep.subr.bf16.mxu0 0
  %330 = vmatpush1.bf16.msra.mxu0 0
  %331 = vmatprep.subr.bf16.mxu0 0
  %332 = vmatpush1.bf16.msra.mxu0 0
  %333 = vmatprep.subr.bf16.mxu0 0
  %334 = vmatpush1.bf16.msra.mxu0 0
  %335 = vmatprep.subr.bf16.mxu0 0
  %336 = vmatpush1.bf16.msra.mxu0 0
  %337 = vmatprep.subr.bf16.mxu0 0
  %338 = vmatpush1.bf16.msra.mxu0 0
  %339 = vmatprep.subr.bf16.mxu0 0
  %340 = vmatpush1.bf16.msra.mxu0 0
  %341 = vmatprep.subr.bf16.mxu0 0
  %342 = vmatpush1.bf16.msra.mxu0 0
  %343 = vmatprep.subr.bf16.mxu0 0
  %344 = vmatpush1.bf16.msra.mxu0 0
  %345 = vmatprep.subr.bf16.mxu0 0
  %346 = vmatpush1.bf16.msra.mxu0 0
  %347 = vmatprep.subr.bf16.mxu0 0
  %348 = vmatpush1.bf16.msra.mxu0 0
  %349 = vmatprep.subr.bf16.mxu0 0
  %350 = vmatpush1.bf16.msra.mxu0 0
  %351 = vmatprep.subr.bf16.mxu0 0
  %352 = vmatpush1.bf16.msra.mxu0 0
  %353 = vmatprep.subr.bf16.mxu0 0
  %354 = vmatpush1.bf16.msra.mxu0 0
  %355 = vmatprep.subr.bf16.mxu0 0
  %356 = vmatpush1.bf16.msra.mxu0 0
  %357 = vmatprep.mubr.bf16.mxu0 0
  %358 = vmatmul.mubr.bf16.gmra.mrb[0].mxu0 %v314
  %v359 = vpop.f32.mrb[0].mxu0
  %v360 = vadd.f32 0.0, %v359
  %v361 = vpop.f32.mrb[0].mxu0
  %v362 = vpop.f32.mrb[0].mxu0
  %v363 = vadd.f32 0.0, %v362
  %v364 = vpop.f32.mrb[0].mxu0
  %365 = vmatprep.mubr.bf16.mxu0 0
  %366 = vmatmul.mubr.bf16.gmra.mrb[0].mxu0 %v317
  %v367 = vpop.f32.mrb[0].mxu0
  %v368 = vadd.f32 0.0, %v367
  %v369 = vpop.f32.mrb[0].mxu0
  %v370 = vpop.f32.mrb[0].mxu0
  %v371 = vadd.f32 0.0, %v370
  %v372 = vpop.f32.mrb[0].mxu0
  %373 = vmatprep.mubr.bf16.mxu0 0
  %374 = vmatmul.mubr.bf16.gmra.mrb[0].mxu0 %v320
  %v375 = vpop.f32.mrb[0].mxu0
  %v376 = vadd.f32 0.0, %v375
  %v377 = vpop.f32.mrb[0].mxu0
  %v378 = vpop.f32.mrb[0].mxu0
  %v379 = vadd.f32 0.0, %v378
  %v380 = vpop.f32.mrb[0].mxu0
  %381 = vmatprep.mubr.bf16.mxu0 0
  %382 = vmatmul.mubr.bf16.gmra.mrb[0].mxu0 %v323
  %v383 = vpop.f32.mrb[0].mxu0
  %v384 = vadd.f32 0.0, %v383
  %v385 = vpop.f32.mrb[0].mxu0
  %v386 = vpop.f32.mrb[0].mxu0
  %v387 = vpop.f32.mrb[0].mxu0
  %388 = vdwg.mxu0
  %v389 = vadd.f32 %v233, %v360
  %v390 = vadd.f32 %v236, %v363
  %v391 = vadd.f32 %v241, %v368
  %v392 = vadd.f32 %v244, %v371
  %v393 = vadd.f32 %v249, %v376
  %v394 = vadd.f32 %v252, %v379
  %v395 = vadd.f32 %v257, %v384
  %v396 = vld [vmem:[%s0] sm:$0x8]
  %s397 = scalar_lea.vmem %s1, 48
  %v398 = vld [vmem:[%s397] sm:$0xf]
  %v399 = vld [vmem:[%s397 + $0x4] sm:$0xf]
  %v400 = vld [vmem:[%s397 + $0x8] sm:$0xf]
  %v401 = vld [vmem:[%s397 + $0xc] sm:$0xf]
  %v403 = vunpack.c.l.b16 %v396
  %v404 = vpack.c.b16 %v44, %v403
  %vm405 = vcmask 1044480
  %v406 = vrot.slane %v404, 3
  %v407 = vrot.slane %v52, 3
  %v408 = vsel %vm405, %v406, %v407
  %v409 = vrot.slane %v53, 3
  %v410 = vsel %vm405, %v407, %v409
  %v411 = vrot.slane %v274, 3
  %v412 = vsel %vm405, %v409, %v411
  %v417 = vunpack.c.l.b16 %v398
  %v418 = vunpack.c.l.b16 %v399
  %v419 = vunpack.c.l.b16 %v400
  %v420 = vunpack.c.l.b16 %v401
  %v421 = vpack.c.b16 %v418, %v417
  %v422 = vpack.c.b16 %v420, %v419
  %v426 = vsel %vm99, %v408, 0
  %v429 = vsel %vm99, %v410, 0
  %v432 = vsel %vm99, %v412, 0
  %v435 = vsel %vm99, %v411, 0
  %437 = vmatprep.subr.bf16.mxu0 0
  %438 = vmatpush1.bf16.msra.mxu0 %v421
  %439 = vmatprep.subr.bf16.mxu0 0
  %440 = vmatpush1.bf16.msra.mxu0 %v422
  %441 = vmatprep.subr.bf16.mxu0 0
  %442 = vmatpush1.bf16.msra.mxu0 0
  %443 = vmatprep.subr.bf16.mxu0 0
  %444 = vmatpush1.bf16.msra.mxu0 0
  %445 = vmatprep.subr.bf16.mxu0 0
  %446 = vmatpush1.bf16.msra.mxu0 0
  %447 = vmatprep.subr.bf16.mxu0 0
  %448 = vmatpush1.bf16.msra.mxu0 0
  %449 = vmatprep.subr.bf16.mxu0 0
  %450 = vmatpush1.bf16.msra.mxu0 0
  %451 = vmatprep.subr.bf16.mxu0 0
  %452 = vmatpush1.bf16.msra.mxu0 0
  %453 = vmatprep.subr.bf16.mxu0 0
  %454 = vmatpush1.bf16.msra.mxu0 0
  %455 = vmatprep.subr.bf16.mxu0 0
  %456 = vmatpush1.bf16.msra.mxu0 0
  %457 = vmatprep.subr.bf16.mxu0 0
  %458 = vmatpush1.bf16.msra.mxu0 0
  %459 = vmatprep.subr.bf16.mxu0 0
  %460 = vmatpush1.bf16.msra.mxu0 0
  %461 = vmatprep.subr.bf16.mxu0 0
  %462 = vmatpush1.bf16.msra.mxu0 0
  %463 = vmatprep.subr.bf16.mxu0 0
  %464 = vmatpush1.bf16.msra.mxu0 0
  %465 = vmatprep.subr.bf16.mxu0 0
  %466 = vmatpush1.bf16.msra.mxu0 0
  %467 = vmatprep.subr.bf16.mxu0 0
  %468 = vmatpush1.bf16.msra.mxu0 0
  %469 = vmatprep.mubr.bf16.mxu0 0
  %470 = vmatmul.mubr.bf16.gmra.mrb[0].mxu0 %v426
  %v471 = vpop.f32.mrb[0].mxu0
  %v472 = vadd.f32 0.0, %v471
  %v473 = vpop.f32.mrb[0].mxu0
  %v474 = vpop.f32.mrb[0].mxu0
  %v475 = vadd.f32 0.0, %v474
  %v476 = vpop.f32.mrb[0].mxu0
  %477 = vmatprep.mubr.bf16.mxu0 0
  %478 = vmatmul.mubr.bf16.gmra.mrb[0].mxu0 %v429
  %v479 = vpop.f32.mrb[0].mxu0
  %v480 = vadd.f32 0.0, %v479
  %v481 = vpop.f32.mrb[0].mxu0
  %v482 = vpop.f32.mrb[0].mxu0
  %v483 = vadd.f32 0.0, %v482
  %v484 = vpop.f32.mrb[0].mxu0
  %485 = vmatprep.mubr.bf16.mxu0 0
  %486 = vmatmul.mubr.bf16.gmra.mrb[0].mxu0 %v432
  %v487 = vpop.f32.mrb[0].mxu0
  %v488 = vadd.f32 0.0, %v487
  %v489 = vpop.f32.mrb[0].mxu0
  %v490 = vpop.f32.mrb[0].mxu0
  %v491 = vadd.f32 0.0, %v490
  %v492 = vpop.f32.mrb[0].mxu0
  %493 = vmatprep.mubr.bf16.mxu0 0
  %494 = vmatmul.mubr.bf16.gmra.mrb[0].mxu0 %v435
  %v495 = vpop.f32.mrb[0].mxu0
  %v496 = vadd.f32 0.0, %v495
  %v497 = vpop.f32.mrb[0].mxu0
  %v498 = vpop.f32.mrb[0].mxu0
  %v499 = vpop.f32.mrb[0].mxu0
  %500 = vdwg.mxu0
  %v501 = vadd.f32 %v389, %v472
  %v502 = vadd.f32 %v390, %v475
  %v503 = vadd.f32 %v391, %v480
  %v504 = vadd.f32 %v392, %v483
  %v505 = vadd.f32 %v393, %v488
  %v506 = vadd.f32 %v394, %v491
  %v507 = vadd.f32 %v395, %v496
  %v508 = vld [vmem:[%s2] sm:$0x1]
  %v510 = vlaneseq
  %v511 = vshrl.u32 %v510, 7
  %v512 = vsub.s32 0, %v511
  %v513 = vrot.slane %v508, %v512
  %v515 = vadd.f32 %v501, %v513
  %v516 = vadd.f32 %v502, %v513
  %v517 = vadd.f32 %v503, %v513
  %v518 = vadd.f32 %v504, %v513
  %v519 = vadd.f32 %v505, %v513
  %v520 = vadd.f32 %v506, %v513
  %v521 = vadd.f32 %v507, %v513
  %v522 = vmax.f32 %v515, 0.0
  %v523 = vmax.f32 %v516, 0.0
  %v524 = vmax.f32 %v517, 0.0
  %v525 = vmax.f32 %v518, 0.0
  %v526 = vmax.f32 %v519, 0.0
  %v527 = vmax.f32 %v520, 0.0
  %v528 = vmax.f32 %v521, 0.0
  %v529 = vld [vmem:[%s3] sm:$0xf]
  %v530 = vld [vmem:[%s3 + $0x4] sm:$0xf]
  %v531 = vld [vmem:[%s3 + $0x8] sm:$0xf]
  %v532 = vld [vmem:[%s3 + $0xc] sm:$0xf]
  %v533 = vld [vmem:[%s3 + $0x10] sm:$0xf]
  %v534 = vld [vmem:[%s3 + $0x14] sm:$0xf]
  %v535 = vld [vmem:[%s3 + $0x18] sm:$0xf]
  %v536 = vunpack.c.l.bf16 %v529
  %v537 = vunpack.c.l.bf16 %v530
  %v538 = vunpack.c.l.bf16 %v531
  %v539 = vunpack.c.l.bf16 %v532
  %v540 = vunpack.c.l.bf16 %v533
  %v541 = vunpack.c.l.bf16 %v534
  %v542 = vunpack.c.l.bf16 %v535
  %v543 = vadd.f32 %v522, %v536
  %v544 = vadd.f32 %v523, %v537
  %v545 = vadd.f32 %v524, %v538
  %v546 = vadd.f32 %v525, %v539
  %v547 = vadd.f32 %v526, %v540
  %v548 = vadd.f32 %v527, %v541
  %v549 = vadd.f32 %v528, %v542
  %v550 = vpack.c.bf16 %v544, %v543
  %v551 = vpack.c.bf16 %v546, %v545
  %v552 = vpack.c.bf16 %v548, %v547
  %v553 = vpack.c.bf16 %v549, %v549
  %v558 = vunpack.c.l.b16 %v550
  %v559 = vunpack.c.h.b16 %v550
  %v560 = vunpack.c.l.b16 %v551
  %v561 = vunpack.c.h.b16 %v551
  %v562 = vunpack.c.l.b16 %v552
  %v563 = vunpack.c.h.b16 %v552
  %v564 = vunpack.c.l.b16 %v553
  %v565 = vpack.c.b16 %v558, %v558
  %v566 = vpack.c.b16 %v559, %v559
  %v567 = vpack.c.b16 %v560, %v560
  %v568 = vpack.c.b16 %v561, %v561
  %v569 = vpack.c.b16 %v562, %v562
  %v570 = vpack.c.b16 %v563, %v563
  %v571 = vpack.c.b16 %v564, %v564
  %vm579 = vcmask 519168
  %580 = vst.msk [vmem:[%s4] sm:$0xf] %vm579, %v565
  %581 = vst.msk [vmem:[%s4 + $0x4] sm:$0xf] %vm579, %v566
  %582 = vst.msk [vmem:[%s4 + $0x8] sm:$0xf] %vm579, %v567
  %583 = vst.msk [vmem:[%s4 + $0xc] sm:$0xf] %vm579, %v568
  %584 = vst.msk [vmem:[%s4 + $0x10] sm:$0xf] %vm579, %v569
  %585 = vst.msk [vmem:[%s4 + $0x14] sm:$0xf] %vm579, %v570
  %586 = vst.msk [vmem:[%s4 + $0x18] sm:$0xf] %vm579, %v571
  // Predicated region
  $region18: #{fcn_forward.6} parent=0 // pred_check
    _
  $region19: #{fcn_forward.6} parent=0 // pred_check_branch
    %588 = sbr.rel (0) target = $region21
  $region20: #{fcn_forward.6} parent=0 // pred_region
    _
  $region21: #{fcn_forward.6} parent=0 // pred_fallthru
    _
  // Predicated region
  $region22: #{fcn_forward.6} parent=0 // pred_check
    _
  $region23: #{fcn_forward.6} parent=0 // pred_check_branch
    %590 = sbr.rel (0) target = $region25
  $region24: #{fcn_forward.6} parent=0 // pred_region
    _
  $region25: #{fcn_forward.6} parent=0 // pred_fallthru
    _

// kernel: fcn_forward.7
$region0: #{fcn_forward.7}
  #allocation0 [shape = 'u32[]', space=smem, size = 0x4, offset = 0x4, fixed_abs, tag = 'smem constant byte address 0x4 - core index']
  #allocation1 [shape = 'u32[144,128]{1,0:T(1,128)}', space=vmem, size = 0x12000, scoped, tag = 'internal scratch']
  %s0 = inlined_call_operand.vmem [shape: bf16[1,184,16], index: 0, kind: input, shape index: {}]
  %s1 = inlined_call_operand.vmem [shape: bf16[4,16,64], index: 1, kind: input, shape index: {}]
  %s2 = inlined_call_operand.vmem [shape: f32[1,64], index: 2, kind: input, shape index: {}]
  %s3 = inlined_call_operand.vmem [shape: bf16[64,32], index: 3, kind: input, shape index: {}]
  %s4 = inlined_call_operand.vmem [shape: f32[1,32], index: 4, kind: input, shape index: {}]
  %s5 = inlined_call_operand.vmem [shape: f32[168,32], index: 5, kind: output, shape index: {}]
  %s6 = sld [smem:[#allocation0]]
  $region30: #{fcn_forward.7} parent=0
    _
  %s8 = ssub.s32 1, %s6
  %s9 = scalar_select 0, %s8, %s6
  // Predicated region
  $region2: #{fcn_forward.7} parent=0 // pred_check
    _
  $region3: #{fcn_forward.7} parent=0 // pred_check_branch
    %11 = sbr.rel (0) target = $region5
  $region4: #{fcn_forward.7} parent=0 // pred_region
    _
  $region5: #{fcn_forward.7} parent=0 // pred_fallthru
    _
  // Predicated region
  $region6: #{fcn_forward.7} parent=0 // pred_check
    _
  $region7: #{fcn_forward.7} parent=0 // pred_check_branch
    %13 = sbr.rel (0) target = $region9
  $region8: #{fcn_forward.7} parent=0 // pred_region
    _
  $region9: #{fcn_forward.7} parent=0 // pred_fallthru
    _
  // Predicated region
  $region10: #{fcn_forward.7} parent=0 // pred_check
    _
  $region11: #{fcn_forward.7} parent=0 // pred_check_branch
    %15 = sbr.rel (0) target = $region13
  $region12: #{fcn_forward.7} parent=0 // pred_region
    _
  $region13: #{fcn_forward.7} parent=0 // pred_fallthru
    _
  // Predicated region
  $region14: #{fcn_forward.7} parent=0 // pred_check
    _
  $region15: #{fcn_forward.7} parent=0 // pred_check_branch
    %17 = sbr.rel (0) target = $region17
  $region16: #{fcn_forward.7} parent=0 // pred_region
    _
  $region17: #{fcn_forward.7} parent=0 // pred_fallthru
    _
  // Predicated region
  $region18: #{fcn_forward.7} parent=0 // pred_check
    _
  $region19: #{fcn_forward.7} parent=0 // pred_check_branch
    %19 = sbr.rel (0) target = $region21
  $region20: #{fcn_forward.7} parent=0 // pred_region
    _
  $region21: #{fcn_forward.7} parent=0 // pred_fallthru
    _
  %v21 = vld [vmem:[%s0] sm:$0xf]
  %v22 = vld [vmem:[%s0 + $0x4] sm:$0xf]
  %v23 = vld [vmem:[%s0 + $0x8] sm:$0xf]
  %v24 = vld [vmem:[%s0 + $0xc] sm:$0xf]
  %v25 = vld [vmem:[%s0 + $0x10] sm:$0xf]
  %v26 = vld [vmem:[%s0 + $0x14] sm:$0xf]
  %v27 = vld [vmem:[%s0 + $0x18] sm:$0xf]
  %v28 = vld [vmem:[%s0 + $0x1c] sm:$0xf]
  %v29 = vld [vmem:[%s0 + $0x20] sm:$0xf]
  %v30 = vld [vmem:[%s0 + $0x24] sm:$0xf]
  %v31 = vld [vmem:[%s0 + $0x28] sm:$0xf]
  %v32 = vld [vmem:[%s0 + $0x2c] sm:$0xf]
  %v33 = vld [vmem:[%s0 + $0x30] sm:$0xf]
  %v34 = vld [vmem:[%s0 + $0x34] sm:$0xf]
  %v35 = vld [vmem:[%s0 + $0x38] sm:$0xf]
  %v36 = vld [vmem:[%s0 + $0x3c] sm:$0xf]
  %v37 = vld [vmem:[%s0 + $0x40] sm:$0xf]
  %v38 = vld [vmem:[%s0 + $0x44] sm:$0xf]
  %v39 = vld [vmem:[%s0 + $0x48] sm:$0xf]
  %v40 = vld [vmem:[%s0 + $0x4c] sm:$0xf]
  %v41 = vld [vmem:[%s0 + $0x50] sm:$0xf]
  %v42 = vld [vmem:[%s1] sm:$0xf]
  %v43 = vld [vmem:[%s1 + $0x4] sm:$0xf]
  %v44 = vld [vmem:[%s0 + $0x54] sm:$0x1]
  %s45 = scalar_lea.vmem %s1, 8
  %v46 = vld [vmem:[%s45] sm:$0xf]
  %v47 = vld [vmem:[%s45 + $0x4] sm:$0xf]
  %v70 = vunpack.c.l.b16 %v21
  %v71 = vunpack.c.l.b16 %v22
  %v72 = vunpack.c.l.b16 %v23
  %v73 = vunpack.c.l.b16 %v24
  %v74 = vunpack.c.l.b16 %v25
  %v75 = vunpack.c.l.b16 %v26
  %v76 = vunpack.c.l.b16 %v27
  %v77 = vunpack.c.l.b16 %v28
  %v78 = vunpack.c.l.b16 %v29
  %v79 = vunpack.c.l.b16 %v30
  %v80 = vunpack.c.l.b16 %v31
  %v81 = vunpack.c.l.b16 %v32
  %v82 = vunpack.c.l.b16 %v33
  %v83 = vunpack.c.l.b16 %v34
  %v84 = vunpack.c.l.b16 %v35
  %v85 = vunpack.c.l.b16 %v36
  %v86 = vunpack.c.l.b16 %v37
  %v87 = vunpack.c.l.b16 %v38
  %v88 = vunpack.c.l.b16 %v39
  %v89 = vunpack.c.l.b16 %v40
  %v90 = vunpack.c.l.b16 %v41
  %v91 = vunpack.c.l.b16 %v44
  %v92 = vpack.c.b16 %v71, %v70
  %v93 = vpack.c.b16 %v73, %v72
  %v94 = vpack.c.b16 %v75, %v74
  %v95 = vpack.c.b16 %v77, %v76
  %v96 = vpack.c.b16 %v79, %v78
  %v97 = vpack.c.b16 %v81, %v80
  %v98 = vpack.c.b16 %v83, %v82
  %v99 = vpack.c.b16 %v85, %v84
  %v100 = vpack.c.b16 %v87, %v86
  %v101 = vpack.c.b16 %v89, %v88
  %v102 = vpack.c.b16 %v91, %v90
  %vm103 = vsmask.f32 7424
  %v105 = vshrl.u32 %v92, 16
  %v107 = vshll.u32 %v92, 16
  %v109 = vrot.slane %v107, 1
  %v110 = vor.u32 %v105, %v109
  %v112 = vshll.u32 %v93, 16
  %v114 = vrot.slane %v112, 1
  %v115 = vsel %vm103, %v110, %v114
  %v116 = vshrl.u32 %v93, 16
  %v118 = vor.u32 %v116, %v114
  %v120 = vshll.u32 %v94, 16
  %v122 = vrot.slane %v120, 1
  %v123 = vsel %vm103, %v118, %v122
  %v124 = vshrl.u32 %v94, 16
  %v126 = vor.u32 %v124, %v122
  %v128 = vshll.u32 %v95, 16
  %v130 = vrot.slane %v128, 1
  %v131 = vsel %vm103, %v126, %v130
  %v132 = vshrl.u32 %v95, 16
  %v134 = vor.u32 %v132, %v130
  %v136 = vshll.u32 %v96, 16
  %v138 = vrot.slane %v136, 1
  %v139 = vsel %vm103, %v134, %v138
  %v140 = vshrl.u32 %v96, 16
  %v142 = vor.u32 %v140, %v138
  %v144 = vshll.u32 %v97, 16
  %v146 = vrot.slane %v144, 1
  %v147 = vsel %vm103, %v142, %v146
  %v148 = vshrl.u32 %v97, 16
  %v150 = vor.u32 %v148, %v146
  %v152 = vshll.u32 %v98, 16
  %v154 = vrot.slane %v152, 1
  %v155 = vsel %vm103, %v150, %v154
  %v156 = vshrl.u32 %v98, 16
  %v158 = vor.u32 %v156, %v154
  %v160 = vshll.u32 %v99, 16
  %v162 = vrot.slane %v160, 1
  %v163 = vsel %vm103, %v158, %v162
  %v164 = vshrl.u32 %v99, 16
  %v166 = vor.u32 %v164, %v162
  %v168 = vshll.u32 %v100, 16
  %v170 = vrot.slane %v168, 1
  %v171 = vsel %vm103, %v166, %v170
  %v172 = vshrl.u32 %v100, 16
  %v174 = vor.u32 %v172, %v170
  %v176 = vshll.u32 %v101, 16
  %v178 = vrot.slane %v176, 1
  %v179 = vsel %vm103, %v174, %v178
  %v180 = vshrl.u32 %v101, 16
  %v182 = vor.u32 %v180, %v178
  %v184 = vshll.u32 %v102, 16
  %v186 = vrot.slane %v184, 1
  %v187 = vsel %vm103, %v182, %v186
  %v188 = vshrl.u32 %v102, 16
  %v190 = vor.u32 %v188, %v186
  %v193 = vunpack.c.l.b16 %v46
  %v194 = vunpack.c.l.b16 %v47
  %v195 = vpack.c.b16 %v194, %v193
  %vm197 = vcmask 130048
  %v199 = vsel %vm197, %v115, 0
  %v202 = vsel %vm197, %v123, 0
  %v205 = vsel %vm197, %v131, 0
  %v208 = vsel %vm197, %v139, 0
  %v211 = vsel %vm197, %v147, 0
  %v214 = vsel %vm197, %v155, 0
  %v217 = vsel %vm197, %v163, 0
  %v220 = vsel %vm197, %v171, 0
  %v223 = vsel %vm197, %v179, 0
  %v226 = vsel %vm197, %v187, 0
  %v229 = vsel %vm197, %v190, 0
  %231 = vmatprep.subr.bf16.mxu0 0
  %232 = vmatpush1.bf16.msra.mxu0 %v195
  %233 = vmatprep.subr.bf16.mxu0 0
  %234 = vmatpush1.bf16.msra.mxu0 0
  %235 = vmatprep.subr.bf16.mxu0 0
  %236 = vmatpush1.bf16.msra.mxu0 0
  %237 = vmatprep.subr.bf16.mxu0 0
  %238 = vmatpush1.bf16.msra.mxu0 0
  %239 = vmatprep.subr.bf16.mxu0 0
  %240 = vmatpush1.bf16.msra.mxu0 0
  %241 = vmatprep.subr.bf16.mxu0 0
  %242 = vmatpush1.bf16.msra.mxu0 0
  %243 = vmatprep.subr.bf16.mxu0 0
  %244 = vmatpush1.bf16.msra.mxu0 0
  %245 = vmatprep.subr.bf16.mxu0 0
  %246 = vmatpush1.bf16.msra.mxu0 0
  %247 = vmatprep.subr.bf16.mxu0 0
  %248 = vmatpush1.bf16.msra.mxu0 0
  %249 = vmatprep.subr.bf16.mxu0 0
  %250 = vmatpush1.bf16.msra.mxu0 0
  %251 = vmatprep.subr.bf16.mxu0 0
  %252 = vmatpush1.bf16.msra.mxu0 0
  %253 = vmatprep.subr.bf16.mxu0 0
  %254 = vmatpush1.bf16.msra.mxu0 0
  %255 = vmatprep.subr.bf16.mxu0 0
  %256 = vmatpush1.bf16.msra.mxu0 0
  %257 = vmatprep.subr.bf16.mxu0 0
  %258 = vmatpush1.bf16.msra.mxu0 0
  %259 = vmatprep.subr.bf16.mxu0 0
  %260 = vmatpush1.bf16.msra.mxu0 0
  %261 = vmatprep.subr.bf16.mxu0 0
  %262 = vmatpush1.bf16.msra.mxu0 0
  %263 = vmatprep.mubr.bf16.mxu0 0
  %264 = vmatmul.mubr.bf16.gmra.mrb[0].mxu0 %v199
  %v265 = vpop.f32.mrb[0].mxu0
  %v266 = vadd.f32 0.0, %v265
  %v267 = vpop.f32.mrb[0].mxu0
  %v268 = vpop.f32.mrb[0].mxu0
  %v269 = vadd.f32 0.0, %v268
  %v270 = vpop.f32.mrb[0].mxu0
  %271 = vmatprep.mubr.bf16.mxu0 0
  %272 = vmatmul.mubr.bf16.gmra.mrb[0].mxu0 %v202
  %v273 = vpop.f32.mrb[0].mxu0
  %v274 = vadd.f32 0.0, %v273
  %v275 = vpop.f32.mrb[0].mxu0
  %v276 = vpop.f32.mrb[0].mxu0
  %v277 = vadd.f32 0.0, %v276
  %v278 = vpop.f32.mrb[0].mxu0
  %279 = vmatprep.mubr.bf16.mxu0 0
  %280 = vmatmul.mubr.bf16.gmra.mrb[0].mxu0 %v205
  %v281 = vpop.f32.mrb[0].mxu0
  %v282 = vadd.f32 0.0, %v281
  %v283 = vpop.f32.mrb[0].mxu0
  %v284 = vpop.f32.mrb[0].mxu0
  %v285 = vadd.f32 0.0, %v284
  %v286 = vpop.f32.mrb[0].mxu0
  %287 = vmatprep.mubr.bf16.mxu0 0
  %288 = vmatmul.mubr.bf16.gmra.mrb[0].mxu0 %v208
  %v289 = vpop.f32.mrb[0].mxu0
  %v290 = vadd.f32 0.0, %v289
  %v291 = vpop.f32.mrb[0].mxu0
  %v292 = vpop.f32.mrb[0].mxu0
  %v293 = vadd.f32 0.0, %v292
  %v294 = vpop.f32.mrb[0].mxu0
  %295 = vmatprep.mubr.bf16.mxu0 0
  %296 = vmatmul.mubr.bf16.gmra.mrb[0].mxu0 %v211
  %v297 = vpop.f32.mrb[0].mxu0
  %v298 = vadd.f32 0.0, %v297
  %v299 = vpop.f32.mrb[0].mxu0
  %v300 = vpop.f32.mrb[0].mxu0
  %v301 = vadd.f32 0.0, %v300
  %v302 = vpop.f32.mrb[0].mxu0
  %303 = vmatprep.mubr.bf16.mxu0 0
  %304 = vmatmul.mubr.bf16.gmra.mrb[0].mxu0 %v214
  %v305 = vpop.f32.mrb[0].mxu0
  %v306 = vadd.f32 0.0, %v305
  %v307 = vpop.f32.mrb[0].mxu0
  %v308 = vpop.f32.mrb[0].mxu0
  %v309 = vadd.f32 0.0, %v308
  %v310 = vpop.f32.mrb[0].mxu0
  %311 = vmatprep.mubr.bf16.mxu0 0
  %312 = vmatmul.mubr.bf16.gmra.mrb[0].mxu0 %v217
  %v313 = vpop.f32.mrb[0].mxu0
  %v314 = vadd.f32 0.0, %v313
  %v315 = vpop.f32.mrb[0].mxu0
  %v316 = vpop.f32.mrb[0].mxu0
  %v317 = vadd.f32 0.0, %v316
  %v318 = vpop.f32.mrb[0].mxu0
  %319 = vmatprep.mubr.bf16.mxu0 0
  %320 = vmatmul.mubr.bf16.gmra.mrb[0].mxu0 %v220
  %v321 = vpop.f32.mrb[0].mxu0
  %v322 = vadd.f32 0.0, %v321
  %v323 = vpop.f32.mrb[0].mxu0
  %v324 = vpop.f32.mrb[0].mxu0
  %v325 = vadd.f32 0.0, %v324
  %v326 = vpop.f32.mrb[0].mxu0
  %327 = vmatprep.mubr.bf16.mxu0 0
  %328 = vmatmul.mubr.bf16.gmra.mrb[0].mxu0 %v223
  %v329 = vpop.f32.mrb[0].mxu0
  %v330 = vadd.f32 0.0, %v329
  %v331 = vpop.f32.mrb[0].mxu0
  %v332 = vpop.f32.mrb[0].mxu0
  %v333 = vadd.f32 0.0, %v332
  %v334 = vpop.f32.mrb[0].mxu0
  %335 = vmatprep.mubr.bf16.mxu0 0
  %336 = vmatmul.mubr.bf16.gmra.mrb[0].mxu0 %v226
  %v337 = vpop.f32.mrb[0].mxu0
  %v338 = vadd.f32 0.0, %v337
  %v339 = vpop.f32.mrb[0].mxu0
  %v340 = vpop.f32.mrb[0].mxu0
  %v341 = vadd.f32 0.0, %v340
  %v342 = vpop.f32.mrb[0].mxu0
  %343 = vmatprep.mubr.bf16.mxu0 0
  %344 = vmatmul.mubr.bf16.gmra.mrb[0].mxu0 %v229
  %v345 = vpop.f32.mrb[0].mxu0
  %v346 = vadd.f32 0.0, %v345
  %v347 = vpop.f32.mrb[0].mxu0
  %v348 = vpop.f32.mrb[0].mxu0
  %v349 = vpop.f32.mrb[0].mxu0
  %350 = vdwg.mxu0
  %v351 = vpack.c.b16 %v90, %v90
  %v354 = vunpack.c.l.b16 %v42
  %v355 = vunpack.c.l.b16 %v43
  %v356 = vpack.c.b16 %v355, %v354
  %v358 = vsel %vm197, %v92, 0
  %v360 = vsel %vm197, %v93, 0
  %v362 = vsel %vm197, %v94, 0
  %v364 = vsel %vm197, %v95, 0
  %v366 = vsel %vm197, %v96, 0
  %v368 = vsel %vm197, %v97, 0
  %v370 = vsel %vm197, %v98, 0
  %v372 = vsel %vm197, %v99, 0
  %v374 = vsel %vm197, %v100, 0
  %v376 = vsel %vm197, %v101, 0
  %v379 = vsel %vm197, %v351, 0
  %381 = vmatprep.subr.bf16.mxu0 0
  %382 = vmatpush1.bf16.msra.mxu0 %v356
  %383 = vmatprep.subr.bf16.mxu0 0
  %384 = vmatpush1.bf16.msra.mxu0 0
  %385 = vmatprep.subr.bf16.mxu0 0
  %386 = vmatpush1.bf16.msra.mxu0 0
  %387 = vmatprep.subr.bf16.mxu0 0
  %388 = vmatpush1.bf16.msra.mxu0 0
  %389 = vmatprep.subr.bf16.mxu0 0
  %390 = vmatpush1.bf16.msra.mxu0 0
  %391 = vmatprep.subr.bf16.mxu0 0
  %392 = vmatpush1.bf16.msra.mxu0 0
  %393 = vmatprep.subr.bf16.mxu0 0
  %394 = vmatpush1.bf16.msra.mxu0 0
  %395 = vmatprep.subr.bf16.mxu0 0
  %396 = vmatpush1.bf16.msra.mxu0 0
  %397 = vmatprep.subr.bf16.mxu0 0
  %398 = vmatpush1.bf16.msra.mxu0 0
  %399 = vmatprep.subr.bf16.mxu0 0
  %400 = vmatpush1.bf16.msra.mxu0 0
  %401 = vmatprep.subr.bf16.mxu0 0
  %402 = vmatpush1.bf16.msra.mxu0 0
  %403 = vmatprep.subr.bf16.mxu0 0
  %404 = vmatpush1.bf16.msra.mxu0 0
  %405 = vmatprep.subr.bf16.mxu0 0
  %406 = vmatpush1.bf16.msra.mxu0 0
  %407 = vmatprep.subr.bf16.mxu0 0
  %408 = vmatpush1.bf16.msra.mxu0 0
  %409 = vmatprep.subr.bf16.mxu0 0
  %410 = vmatpush1.bf16.msra.mxu0 0
  %411 = vmatprep.subr.bf16.mxu0 0
  %412 = vmatpush1.bf16.msra.mxu0 0
  %413 = vmatprep.mubr.bf16.mxu0 0
  %414 = vmatmul.mubr.bf16.gmra.mrb[0].mxu0 %v358
  %v415 = vpop.f32.mrb[0].mxu0
  %v416 = vadd.f32 %v266, %v415
  %v417 = vpop.f32.mrb[0].mxu0
  %v418 = vpop.f32.mrb[0].mxu0
  %v419 = vadd.f32 %v269, %v418
  %v420 = vpop.f32.mrb[0].mxu0
  %421 = vmatprep.mubr.bf16.mxu0 0
  %422 = vmatmul.mubr.bf16.gmra.mrb[0].mxu0 %v360
  %v423 = vpop.f32.mrb[0].mxu0
  %v424 = vadd.f32 %v274, %v423
  %v425 = vpop.f32.mrb[0].mxu0
  %v426 = vpop.f32.mrb[0].mxu0
  %v427 = vadd.f32 %v277, %v426
  %v428 = vpop.f32.mrb[0].mxu0
  %429 = vmatprep.mubr.bf16.mxu0 0
  %430 = vmatmul.mubr.bf16.gmra.mrb[0].mxu0 %v362
  %v431 = vpop.f32.mrb[0].mxu0
  %v432 = vadd.f32 %v282, %v431
  %v433 = vpop.f32.mrb[0].mxu0
  %v434 = vpop.f32.mrb[0].mxu0
  %v435 = vadd.f32 %v285, %v434
  %v436 = vpop.f32.mrb[0].mxu0
  %437 = vmatprep.mubr.bf16.mxu0 0
  %438 = vmatmul.mubr.bf16.gmra.mrb[0].mxu0 %v364
  %v439 = vpop.f32.mrb[0].mxu0
  %v440 = vadd.f32 %v290, %v439
  %v441 = vpop.f32.mrb[0].mxu0
  %v442 = vpop.f32.mrb[0].mxu0
  %v443 = vadd.f32 %v293, %v442
  %v444 = vpop.f32.mrb[0].mxu0
  %445 = vmatprep.mubr.bf16.mxu0 0
  %446 = vmatmul.mubr.bf16.gmra.mrb[0].mxu0 %v366
  %v447 = vpop.f32.mrb[0].mxu0
  %v448 = vadd.f32 %v298, %v447
  %v449 = vpop.f32.mrb[0].mxu0
  %v450 = vpop.f32.mrb[0].mxu0
  %v451 = vadd.f32 %v301, %v450
  %v452 = vpop.f32.mrb[0].mxu0
  %453 = vmatprep.mubr.bf16.mxu0 0
  %454 = vmatmul.mubr.bf16.gmra.mrb[0].mxu0 %v368
  %v455 = vpop.f32.mrb[0].mxu0
  %v456 = vadd.f32 %v306, %v455
  %v457 = vpop.f32.mrb[0].mxu0
  %v458 = vpop.f32.mrb[0].mxu0
  %v459 = vadd.f32 %v309, %v458
  %v460 = vpop.f32.mrb[0].mxu0
  %461 = vmatprep.mubr.bf16.mxu0 0
  %462 = vmatmul.mubr.bf16.gmra.mrb[0].mxu0 %v370
  %v463 = vpop.f32.mrb[0].mxu0
  %v464 = vadd.f32 %v314, %v463
  %v465 = vpop.f32.mrb[0].mxu0
  %v466 = vpop.f32.mrb[0].mxu0
  %v467 = vadd.f32 %v317, %v466
  %v468 = vpop.f32.mrb[0].mxu0
  %469 = vmatprep.mubr.bf16.mxu0 0
  %470 = vmatmul.mubr.bf16.gmra.mrb[0].mxu0 %v372
  %v471 = vpop.f32.mrb[0].mxu0
  %v472 = vadd.f32 %v322, %v471
  %v473 = vpop.f32.mrb[0].mxu0
  %v474 = vpop.f32.mrb[0].mxu0
  %v475 = vadd.f32 %v325, %v474
  %v476 = vpop.f32.mrb[0].mxu0
  %477 = vmatprep.mubr.bf16.mxu0 0
  %478 = vmatmul.mubr.bf16.gmra.mrb[0].mxu0 %v374
  %v479 = vpop.f32.mrb[0].mxu0
  %v480 = vadd.f32 %v330, %v479
  %v481 = vpop.f32.mrb[0].mxu0
  %v482 = vpop.f32.mrb[0].mxu0
  %v483 = vadd.f32 %v333, %v482
  %v484 = vpop.f32.mrb[0].mxu0
  %485 = vmatprep.mubr.bf16.mxu0 0
  %486 = vmatmul.mubr.bf16.gmra.mrb[0].mxu0 %v376
  %v487 = vpop.f32.mrb[0].mxu0
  %v488 = vadd.f32 %v338, %v487
  %v489 = vpop.f32.mrb[0].mxu0
  %v490 = vpop.f32.mrb[0].mxu0
  %v491 = vadd.f32 %v341, %v490
  %v492 = vpop.f32.mrb[0].mxu0
  %493 = vmatprep.mubr.bf16.mxu0 0
  %494 = vmatmul.mubr.bf16.gmra.mrb[0].mxu0 %v379
  %v495 = vpop.f32.mrb[0].mxu0
  %v496 = vadd.f32 %v346, %v495
  %v497 = vpop.f32.mrb[0].mxu0
  %v498 = vpop.f32.mrb[0].mxu0
  %v499 = vpop.f32.mrb[0].mxu0
  %500 = vdwg.mxu0
  %v501 = vld [vmem:[%s0 + $0x4] sm:$0xf]
  %v502 = vld [vmem:[%s0 + $0x8] sm:$0xf]
  %v503 = vld [vmem:[%s0 + $0xc] sm:$0xf]
  %v504 = vld [vmem:[%s0 + $0x10] sm:$0xf]
  %v505 = vld [vmem:[%s0 + $0x14] sm:$0xf]
  %v506 = vld [vmem:[%s0 + $0x18] sm:$0xf]
  %v507 = vld [vmem:[%s0 + $0x1c] sm:$0xf]
  %v508 = vld [vmem:[%s0 + $0x20] sm:$0xf]
  %v509 = vld [vmem:[%s0 + $0x24] sm:$0xf]
  %v510 = vld [vmem:[%s0 + $0x28] sm:$0xf]
  %v511 = vld [vmem:[%s0 + $0x2c] sm:$0xf]
  %v512 = vld [vmem:[%s0 + $0x30] sm:$0xf]
  %v513 = vld [vmem:[%s0 + $0x34] sm:$0xf]
  %v514 = vld [vmem:[%s0 + $0x38] sm:$0xf]
  %v515 = vld [vmem:[%s0 + $0x3c] sm:$0xf]
  %v516 = vld [vmem:[%s0 + $0x40] sm:$0xf]
  %v517 = vld [vmem:[%s0 + $0x44] sm:$0xf]
  %v518 = vld [vmem:[%s0 + $0x48] sm:$0xf]
  %v519 = vld [vmem:[%s0 + $0x4c] sm:$0xf]
  %v520 = vld [vmem:[%s0 + $0x50] sm:$0xf]
  %v521 = vld [vmem:[%s0 + $0x54] sm:$0xf]
  %v522 = vld [vmem:[%s0 + $0x58] sm:$0x1]
  %s523 = scalar_lea.vmem %s1, 16
  %v524 = vld [vmem:[%s523] sm:$0xf]
  %v525 = vld [vmem:[%s523 + $0x4] sm:$0xf]
  %v548 = vunpack.c.l.b16 %v501
  %v549 = vunpack.c.l.b16 %v502
  %v550 = vunpack.c.l.b16 %v503
  %v551 = vunpack.c.l.b16 %v504
  %v552 = vunpack.c.l.b16 %v505
  %v553 = vunpack.c.l.b16 %v506
  %v554 = vunpack.c.l.b16 %v507
  %v555 = vunpack.c.l.b16 %v508
  %v556 = vunpack.c.l.b16 %v509
  %v557 = vunpack.c.l.b16 %v510
  %v558 = vunpack.c.l.b16 %v511
  %v559 = vunpack.c.l.b16 %v512
  %v560 = vunpack.c.l.b16 %v513
  %v561 = vunpack.c.l.b16 %v514
  %v562 = vunpack.c.l.b16 %v515
  %v563 = vunpack.c.l.b16 %v516
  %v564 = vunpack.c.l.b16 %v517
  %v565 = vunpack.c.l.b16 %v518
  %v566 = vunpack.c.l.b16 %v519
  %v567 = vunpack.c.l.b16 %v520
  %v568 = vunpack.c.l.b16 %v521
  %v569 = vunpack.c.l.b16 %v522
  %v570 = vpack.c.b16 %v549, %v548
  %v571 = vpack.c.b16 %v551, %v550
  %v572 = vpack.c.b16 %v553, %v552
  %v573 = vpack.c.b16 %v555, %v554
  %v574 = vpack.c.b16 %v557, %v556
  %v575 = vpack.c.b16 %v559, %v558
  %v576 = vpack.c.b16 %v561, %v560
  %v577 = vpack.c.b16 %v563, %v562
  %v578 = vpack.c.b16 %v565, %v564
  %v579 = vpack.c.b16 %v567, %v566
  %v580 = vpack.c.b16 %v569, %v568
  %v582 = vshrl.u32 %v570, 16
  %v584 = vshll.u32 %v570, 16
  %v586 = vrot.slane %v584, 1
  %v587 = vor.u32 %v582, %v586
  %v589 = vshll.u32 %v571, 16
  %v591 = vrot.slane %v589, 1
  %v592 = vsel %vm103, %v587, %v591
  %v593 = vshrl.u32 %v571, 16
  %v595 = vor.u32 %v593, %v591
  %v597 = vshll.u32 %v572, 16
  %v599 = vrot.slane %v597, 1
  %v600 = vsel %vm103, %v595, %v599
  %v601 = vshrl.u32 %v572, 16
  %v603 = vor.u32 %v601, %v599
  %v605 = vshll.u32 %v573, 16
  %v607 = vrot.slane %v605, 1
  %v608 = vsel %vm103, %v603, %v607
  %v609 = vshrl.u32 %v573, 16
  %v611 = vor.u32 %v609, %v607
  %v613 = vshll.u32 %v574, 16
  %v615 = vrot.slane %v613, 1
  %v616 = vsel %vm103, %v611, %v615
  %v617 = vshrl.u32 %v574, 16
  %v619 = vor.u32 %v617, %v615
  %v621 = vshll.u32 %v575, 16
  %v623 = vrot.slane %v621, 1
  %v624 = vsel %vm103, %v619, %v623
  %v625 = vshrl.u32 %v575, 16
  %v627 = vor.u32 %v625, %v623
  %v629 = vshll.u32 %v576, 16
  %v631 = vrot.slane %v629, 1
  %v632 = vsel %vm103, %v627, %v631
  %v633 = vshrl.u32 %v576, 16
  %v635 = vor.u32 %v633, %v631
  %v637 = vshll.u32 %v577, 16
  %v639 = vrot.slane %v637, 1
  %v640 = vsel %vm103, %v635, %v639
  %v641 = vshrl.u32 %v577, 16
  %v643 = vor.u32 %v641, %v639
  %v645 = vshll.u32 %v578, 16
  %v647 = vrot.slane %v645, 1
  %v648 = vsel %vm103, %v643, %v647
  %v649 = vshrl.u32 %v578, 16
  %v651 = vor.u32 %v649, %v647
  %v653 = vshll.u32 %v579, 16
  %v655 = vrot.slane %v653, 1
  %v656 = vsel %vm103, %v651, %v655
  %v657 = vshrl.u32 %v579, 16
  %v659 = vor.u32 %v657, %v655
  %v661 = vshll.u32 %v580, 16
  %v663 = vrot.slane %v661, 1
  %v664 = vsel %vm103, %v659, %v663
  %v665 = vshrl.u32 %v580, 16
  %v667 = vor.u32 %v665, %v663
  %v670 = vunpack.c.l.b16 %v524
  %v671 = vunpack.c.l.b16 %v525
  %v672 = vpack.c.b16 %v671, %v670
  %v675 = vsel %vm197, %v592, 0
  %v678 = vsel %vm197, %v600, 0
  %v681 = vsel %vm197, %v608, 0
  %v684 = vsel %vm197, %v616, 0
  %v687 = vsel %vm197, %v624, 0
  %v690 = vsel %vm197, %v632, 0
  %v693 = vsel %vm197, %v640, 0
  %v696 = vsel %vm197, %v648, 0
  %v699 = vsel %vm197, %v656, 0
  %v702 = vsel %vm197, %v664, 0
  %v705 = vsel %vm197, %v667, 0
  %707 = vmatprep.subr.bf16.mxu0 0
  %708 = vmatpush1.bf16.msra.mxu0 %v672
  %709 = vmatprep.subr.bf16.mxu0 0
  %710 = vmatpush1.bf16.msra.mxu0 0
  %711 = vmatprep.subr.bf16.mxu0 0
  %712 = vmatpush1.bf16.msra.mxu0 0
  %713 = vmatprep.subr.bf16.mxu0 0
  %714 = vmatpush1.bf16.msra.mxu0 0
  %715 = vmatprep.subr.bf16.mxu0 0
  %716 = vmatpush1.bf16.msra.mxu0 0
  %717 = vmatprep.subr.bf16.mxu0 0
  %718 = vmatpush1.bf16.msra.mxu0 0
  %719 = vmatprep.subr.bf16.mxu0 0
  %720 = vmatpush1.bf16.msra.mxu0 0
  %721 = vmatprep.subr.bf16.mxu0 0
  %722 = vmatpush1.bf16.msra.mxu0 0
  %723 = vmatprep.subr.bf16.mxu0 0
  %724 = vmatpush1.bf16.msra.mxu0 0
  %725 = vmatprep.subr.bf16.mxu0 0
  %726 = vmatpush1.bf16.msra.mxu0 0
  %727 = vmatprep.subr.bf16.mxu0 0
  %728 = vmatpush1.bf16.msra.mxu0 0
  %729 = vmatprep.subr.bf16.mxu0 0
  %730 = vmatpush1.bf16.msra.mxu0 0
  %731 = vmatprep.subr.bf16.mxu0 0
  %732 = vmatpush1.bf16.msra.mxu0 0
  %733 = vmatprep.subr.bf16.mxu0 0
  %734 = vmatpush1.bf16.msra.mxu0 0
  %735 = vmatprep.subr.bf16.mxu0 0
  %736 = vmatpush1.bf16.msra.mxu0 0
  %737 = vmatprep.subr.bf16.mxu0 0
  %738 = vmatpush1.bf16.msra.mxu0 0
  %739 = vmatprep.mubr.bf16.mxu0 0
  %740 = vmatmul.mubr.bf16.gmra.mrb[0].mxu0 %v675
  %v741 = vpop.f32.mrb[0].mxu0
  %v742 = vadd.f32 0.0, %v741
  %v743 = vpop.f32.mrb[0].mxu0
  %v744 = vpop.f32.mrb[0].mxu0
  %v745 = vadd.f32 0.0, %v744
  %v746 = vpop.f32.mrb[0].mxu0
  %747 = vmatprep.mubr.bf16.mxu0 0
  %748 = vmatmul.mubr.bf16.gmra.mrb[0].mxu0 %v678
  %v749 = vpop.f32.mrb[0].mxu0
  %v750 = vadd.f32 0.0, %v749
  %v751 = vpop.f32.mrb[0].mxu0
  %v752 = vpop.f32.mrb[0].mxu0
  %v753 = vadd.f32 0.0, %v752
  %v754 = vpop.f32.mrb[0].mxu0
  %755 = vmatprep.mubr.bf16.mxu0 0
  %756 = vmatmul.mubr.bf16.gmra.mrb[0].mxu0 %v681
  %v757 = vpop.f32.mrb[0].mxu0
  %v758 = vadd.f32 0.0, %v757
  %v759 = vpop.f32.mrb[0].mxu0
  %v760 = vpop.f32.mrb[0].mxu0
  %v761 = vadd.f32 0.0, %v760
  %v762 = vpop.f32.mrb[0].mxu0
  %763 = vmatprep.mubr.bf16.mxu0 0
  %764 = vmatmul.mubr.bf16.gmra.mrb[0].mxu0 %v684
  %v765 = vpop.f32.mrb[0].mxu0
  %v766 = vadd.f32 0.0, %v765
  %v767 = vpop.f32.mrb[0].mxu0
  %v768 = vpop.f32.mrb[0].mxu0
  %v769 = vadd.f32 0.0, %v768
  %v770 = vpop.f32.mrb[0].mxu0
  %771 = vmatprep.mubr.bf16.mxu0 0
  %772 = vmatmul.mubr.bf16.gmra.mrb[0].mxu0 %v687
  %v773 = vpop.f32.mrb[0].mxu0
  %v774 = vadd.f32 0.0, %v773
  %v775 = vpop.f32.mrb[0].mxu0
  %v776 = vpop.f32.mrb[0].mxu0
  %v777 = vadd.f32 0.0, %v776
  %v778 = vpop.f32.mrb[0].mxu0
  %779 = vmatprep.mubr.bf16.mxu0 0
  %780 = vmatmul.mubr.bf16.gmra.mrb[0].mxu0 %v690
  %v781 = vpop.f32.mrb[0].mxu0
  %v782 = vadd.f32 0.0, %v781
  %v783 = vpop.f32.mrb[0].mxu0
  %v784 = vpop.f32.mrb[0].mxu0
  %v785 = vadd.f32 0.0, %v784
  %v786 = vpop.f32.mrb[0].mxu0
  %787 = vmatprep.mubr.bf16.mxu0 0
  %788 = vmatmul.mubr.bf16.gmra.mrb[0].mxu0 %v693
  %v789 = vpop.f32.mrb[0].mxu0
  %v790 = vadd.f32 0.0, %v789
  %v791 = vpop.f32.mrb[0].mxu0
  %v792 = vpop.f32.mrb[0].mxu0
  %v793 = vadd.f32 0.0, %v792
  %v794 = vpop.f32.mrb[0].mxu0
  %795 = vmatprep.mubr.bf16.mxu0 0
  %796 = vmatmul.mubr.bf16.gmra.mrb[0].mxu0 %v696
  %v797 = vpop.f32.mrb[0].mxu0
  %v798 = vadd.f32 0.0, %v797
  %v799 = vpop.f32.mrb[0].mxu0
  %v800 = vpop.f32.mrb[0].mxu0
  %v801 = vadd.f32 0.0, %v800
  %v802 = vpop.f32.mrb[0].mxu0
  %803 = vmatprep.mubr.bf16.mxu0 0
  %804 = vmatmul.mubr.bf16.gmra.mrb[0].mxu0 %v699
  %v805 = vpop.f32.mrb[0].mxu0
  %v806 = vadd.f32 0.0, %v805
  %v807 = vpop.f32.mrb[0].mxu0
  %v808 = vpop.f32.mrb[0].mxu0
  %v809 = vadd.f32 0.0, %v808
  %v810 = vpop.f32.mrb[0].mxu0
  %811 = vmatprep.mubr.bf16.mxu0 0
  %812 = vmatmul.mubr.bf16.gmra.mrb[0].mxu0 %v702
  %v813 = vpop.f32.mrb[0].mxu0
  %v814 = vadd.f32 0.0, %v813
  %v815 = vpop.f32.mrb[0].mxu0
  %v816 = vpop.f32.mrb[0].mxu0
  %v817 = vadd.f32 0.0, %v816
  %v818 = vpop.f32.mrb[0].mxu0
  %819 = vmatprep.mubr.bf16.mxu0 0
  %820 = vmatmul.mubr.bf16.gmra.mrb[0].mxu0 %v705
  %v821 = vpop.f32.mrb[0].mxu0
  %v822 = vadd.f32 0.0, %v821
  %v823 = vpop.f32.mrb[0].mxu0
  %v824 = vpop.f32.mrb[0].mxu0
  %v825 = vpop.f32.mrb[0].mxu0
  %826 = vdwg.mxu0
  %v827 = vadd.f32 %v416, %v742
  %v828 = vadd.f32 %v419, %v745
  %v829 = vadd.f32 %v424, %v750
  %v830 = vadd.f32 %v427, %v753
  %v831 = vadd.f32 %v432, %v758
  %v832 = vadd.f32 %v435, %v761
  %v833 = vadd.f32 %v440, %v766
  %v834 = vadd.f32 %v443, %v769
  %v835 = vadd.f32 %v448, %v774
  %v836 = vadd.f32 %v451, %v777
  %v837 = vadd.f32 %v456, %v782
  %v838 = vadd.f32 %v459, %v785
  %v839 = vadd.f32 %v464, %v790
  %v840 = vadd.f32 %v467, %v793
  %v841 = vadd.f32 %v472, %v798
  %v842 = vadd.f32 %v475, %v801
  %v843 = vadd.f32 %v480, %v806
  %v844 = vadd.f32 %v483, %v809
  %v845 = vadd.f32 %v488, %v814
  %v846 = vadd.f32 %v491, %v817
  %v847 = vadd.f32 %v496, %v822
  %v848 = vld [vmem:[%s0 + $0x4] sm:$0xe]
  %s849 = scalar_lea.vmem %s1, 24
  %v850 = vld [vmem:[%s849] sm:$0xf]
  %v851 = vld [vmem:[%s849 + $0x4] sm:$0xf]
  %v853 = vunpack.c.l.b16 %v848
  %v854 = vpack.c.b16 %v549, %v853
  %vm855 = vcmask 1046528
  %v856 = vrot.slane %v854, 1
  %v857 = vrot.slane %v571, 1
  %v858 = vsel %vm855, %v856, %v857
  %v859 = vrot.slane %v572, 1
  %v860 = vsel %vm855, %v857, %v859
  %v861 = vrot.slane %v573, 1
  %v862 = vsel %vm855, %v859, %v861
  %v863 = vrot.slane %v574, 1
  %v864 = vsel %vm855, %v861, %v863
  %v865 = vrot.slane %v575, 1
  %v866 = vsel %vm855, %v863, %v865
  %v867 = vrot.slane %v576, 1
  %v868 = vsel %vm855, %v865, %v867
  %v869 = vrot.slane %v577, 1
  %v870 = vsel %vm855, %v867, %v869
  %v871 = vrot.slane %v578, 1
  %v872 = vsel %vm855, %v869, %v871
  %v873 = vrot.slane %v579, 1
  %v874 = vsel %vm855, %v871, %v873
  %v875 = vrot.slane %v580, 1
  %v876 = vsel %vm855, %v873, %v875
  %v879 = vunpack.c.l.b16 %v850
  %v880 = vunpack.c.l.b16 %v851
  %v881 = vpack.c.b16 %v880, %v879
  %v884 = vsel %vm197, %v858, 0
  %v887 = vsel %vm197, %v860, 0
  %v890 = vsel %vm197, %v862, 0
  %v893 = vsel %vm197, %v864, 0
  %v896 = vsel %vm197, %v866, 0
  %v899 = vsel %vm197, %v868, 0
  %v902 = vsel %vm197, %v870, 0
  %v905 = vsel %vm197, %v872, 0
  %v908 = vsel %vm197, %v874, 0
  %v911 = vsel %vm197, %v876, 0
  %v914 = vsel %vm197, %v875, 0
  %916 = vmatprep.subr.bf16.mxu0 0
  %917 = vmatpush1.bf16.msra.mxu0 %v881
  %918 = vmatprep.subr.bf16.mxu0 0
  %919 = vmatpush1.bf16.msra.mxu0 0
  %920 = vmatprep.subr.bf16.mxu0 0
  %921 = vmatpush1.bf16.msra.mxu0 0
  %922 = vmatprep.subr.bf16.mxu0 0
  %923 = vmatpush1.bf16.msra.mxu0 0
  %924 = vmatprep.subr.bf16.mxu0 0
  %925 = vmatpush1.bf16.msra.mxu0 0
  %926 = vmatprep.subr.bf16.mxu0 0
  %927 = vmatpush1.bf16.msra.mxu0 0
  %928 = vmatprep.subr.bf16.mxu0 0
  %929 = vmatpush1.bf16.msra.mxu0 0
  %930 = vmatprep.subr.bf16.mxu0 0
  %931 = vmatpush1.bf16.msra.mxu0 0
  %932 = vmatprep.subr.bf16.mxu0 0
  %933 = vmatpush1.bf16.msra.mxu0 0
  %934 = vmatprep.subr.bf16.mxu0 0
  %935 = vmatpush1.bf16.msra.mxu0 0
  %936 = vmatprep.subr.bf16.mxu0 0
  %937 = vmatpush1.bf16.msra.mxu0 0
  %938 = vmatprep.subr.bf16.mxu0 0
  %939 = vmatpush1.bf16.msra.mxu0 0
  %940 = vmatprep.subr.bf16.mxu0 0
  %941 = vmatpush1.bf16.msra.mxu0 0
  %942 = vmatprep.subr.bf16.mxu0 0
  %943 = vmatpush1.bf16.msra.mxu0 0
  %944 = vmatprep.subr.bf16.mxu0 0
  %945 = vmatpush1.bf16.msra.mxu0 0
  %946 = vmatprep.subr.bf16.mxu0 0
  %947 = vmatpush1.bf16.msra.mxu0 0
  %948 = vmatprep.mubr.bf16.mxu0 0
  %949 = vmatmul.mubr.bf16.gmra.mrb[0].mxu0 %v884
  %v950 = vpop.f32.mrb[0].mxu0
  %v951 = vadd.f32 0.0, %v950
  %v952 = vpop.f32.mrb[0].mxu0
  %v953 = vpop.f32.mrb[0].mxu0
  %v954 = vadd.f32 0.0, %v953
  %v955 = vpop.f32.mrb[0].mxu0
  %956 = vmatprep.mubr.bf16.mxu0 0
  %957 = vmatmul.mubr.bf16.gmra.mrb[0].mxu0 %v887
  %v958 = vpop.f32.mrb[0].mxu0
  %v959 = vadd.f32 0.0, %v958
  %v960 = vpop.f32.mrb[0].mxu0
  %v961 = vpop.f32.mrb[0].mxu0
  %v962 = vadd.f32 0.0, %v961
  %v963 = vpop.f32.mrb[0].mxu0
  %964 = vmatprep.mubr.bf16.mxu0 0
  %965 = vmatmul.mubr.bf16.gmra.mrb[0].mxu0 %v890
  %v966 = vpop.f32.mrb[0].mxu0
  %v967 = vadd.f32 0.0, %v966
  %v968 = vpop.f32.mrb[0].mxu0
  %v969 = vpop.f32.mrb[0].mxu0
  %v970 = vadd.f32 0.0, %v969
  %v971 = vpop.f32.mrb[0].mxu0
  %972 = vmatprep.mubr.bf16.mxu0 0
  %973 = vmatmul.mubr.bf16.gmra.mrb[0].mxu0 %v893
  %v974 = vpop.f32.mrb[0].mxu0
  %v975 = vadd.f32 0.0, %v974
  %v976 = vpop.f32.mrb[0].mxu0
  %v977 = vpop.f32.mrb[0].mxu0
  %v978 = vadd.f32 0.0, %v977
  %v979 = vpop.f32.mrb[0].mxu0
  %980 = vmatprep.mubr.bf16.mxu0 0
  %981 = vmatmul.mubr.bf16.gmra.mrb[0].mxu0 %v896
  %v982 = vpop.f32.mrb[0].mxu0
  %v983 = vadd.f32 0.0, %v982
  %v984 = vpop.f32.mrb[0].mxu0
  %v985 = vpop.f32.mrb[0].mxu0
  %v986 = vadd.f32 0.0, %v985
  %v987 = vpop.f32.mrb[0].mxu0
  %988 = vmatprep.mubr.bf16.mxu0 0
  %989 = vmatmul.mubr.bf16.gmra.mrb[0].mxu0 %v899
  %v990 = vpop.f32.mrb[0].mxu0
  %v991 = vadd.f32 0.0, %v990
  %v992 = vpop.f32.mrb[0].mxu0
  %v993 = vpop.f32.mrb[0].mxu0
  %v994 = vadd.f32 0.0, %v993
  %v995 = vpop.f32.mrb[0].mxu0
  %996 = vmatprep.mubr.bf16.mxu0 0
  %997 = vmatmul.mubr.bf16.gmra.mrb[0].mxu0 %v902
  %v998 = vpop.f32.mrb[0].mxu0
  %v999 = vadd.f32 0.0, %v998
  %v1000 = vpop.f32.mrb[0].mxu0
  %v1001 = vpop.f32.mrb[0].mxu0
  %v1002 = vadd.f32 0.0, %v1001
  %v1003 = vpop.f32.mrb[0].mxu0
  %1004 = vmatprep.mubr.bf16.mxu0 0
  %1005 = vmatmul.mubr.bf16.gmra.mrb[0].mxu0 %v905
  %v1006 = vpop.f32.mrb[0].mxu0
  %v1007 = vadd.f32 0.0, %v1006
  %v1008 = vpop.f32.mrb[0].mxu0
  %v1009 = vpop.f32.mrb[0].mxu0
  %v1010 = vadd.f32 0.0, %v1009
  %v1011 = vpop.f32.mrb[0].mxu0
  %1012 = vmatprep.mubr.bf16.mxu0 0
  %1013 = vmatmul.mubr.bf16.gmra.mrb[0].mxu0 %v908
  %v1014 = vpop.f32.mrb[0].mxu0
  %v1015 = vadd.f32 0.0, %v1014
  %v1016 = vpop.f32.mrb[0].mxu0
  %v1017 = vpop.f32.mrb[0].mxu0
  %v1018 = vadd.f32 0.0, %v1017
  %v1019 = vpop.f32.mrb[0].mxu0
  %1020 = vmatprep.mubr.bf16.mxu0 0
  %1021 = vmatmul.mubr.bf16.gmra.mrb[0].mxu0 %v911
  %v1022 = vpop.f32.mrb[0].mxu0
  %v1023 = vadd.f32 0.0, %v1022
  %v1024 = vpop.f32.mrb[0].mxu0
  %v1025 = vpop.f32.mrb[0].mxu0
  %v1026 = vadd.f32 0.0, %v1025
  %v1027 = vpop.f32.mrb[0].mxu0
  %1028 = vmatprep.mubr.bf16.mxu0 0
  %1029 = vmatmul.mubr.bf16.gmra.mrb[0].mxu0 %v914
  %v1030 = vpop.f32.mrb[0].mxu0
  %v1031 = vadd.f32 0.0, %v1030
  %v1032 = vpop.f32.mrb[0].mxu0
  %v1033 = vpop.f32.mrb[0].mxu0
  %v1034 = vpop.f32.mrb[0].mxu0
  %1035 = vdwg.mxu0
  %v1036 = vadd.f32 %v827, %v951
  %v1037 = vadd.f32 %v828, %v954
  %v1038 = vadd.f32 %v829, %v959
  %v1039 = vadd.f32 %v830, %v962
  %v1040 = vadd.f32 %v831, %v967
  %v1041 = vadd.f32 %v832, %v970
  %v1042 = vadd.f32 %v833, %v975
  %v1043 = vadd.f32 %v834, %v978
  %v1044 = vadd.f32 %v835, %v983
  %v1045 = vadd.f32 %v836, %v986
  %v1046 = vadd.f32 %v837, %v991
  %v1047 = vadd.f32 %v838, %v994
  %v1048 = vadd.f32 %v839, %v999
  %v1049 = vadd.f32 %v840, %v1002
  %v1050 = vadd.f32 %v841, %v1007
  %v1051 = vadd.f32 %v842, %v1010
  %v1052 = vadd.f32 %v843, %v1015
  %v1053 = vadd.f32 %v844, %v1018
  %v1054 = vadd.f32 %v845, %v1023
  %v1055 = vadd.f32 %v846, %v1026
  %v1056 = vadd.f32 %v847, %v1031
  %v1057 = vld [vmem:[%s2] sm:$0x1]
  %v1059 = vlaneseq
  %v1060 = vshrl.u32 %v1059, 7
  %v1061 = vsub.s32 0, %v1060
  %v1062 = vrot.slane %v1057, %v1061
  %v1064 = vadd.f32 %v1036, %v1062
  %v1065 = vadd.f32 %v1037, %v1062
  %v1066 = vadd.f32 %v1038, %v1062
  %v1067 = vadd.f32 %v1039, %v1062
  %v1068 = vadd.f32 %v1040, %v1062
  %v1069 = vadd.f32 %v1041, %v1062
  %v1070 = vadd.f32 %v1042, %v1062
  %v1071 = vadd.f32 %v1043, %v1062
  %v1072 = vadd.f32 %v1044, %v1062
  %v1073 = vadd.f32 %v1045, %v1062
  %v1074 = vadd.f32 %v1046, %v1062
  %v1075 = vadd.f32 %v1047, %v1062
  %v1076 = vadd.f32 %v1048, %v1062
  %v1077 = vadd.f32 %v1049, %v1062
  %v1078 = vadd.f32 %v1050, %v1062
  %v1079 = vadd.f32 %v1051, %v1062
  %v1080 = vadd.f32 %v1052, %v1062
  %v1081 = vadd.f32 %v1053, %v1062
  %v1082 = vadd.f32 %v1054, %v1062
  %v1083 = vadd.f32 %v1055, %v1062
  %v1084 = vadd.f32 %v1056, %v1062
  %v1085 = vmax.f32 %v1064, 0.0
  %v1086 = vmax.f32 %v1065, 0.0
  %v1087 = vmax.f32 %v1066, 0.0
  %v1088 = vmax.f32 %v1067, 0.0
  %v1089 = vmax.f32 %v1068, 0.0
  %v1090 = vmax.f32 %v1069, 0.0
  %v1091 = vmax.f32 %v1070, 0.0
  %v1092 = vmax.f32 %v1071, 0.0
  %v1093 = vmax.f32 %v1072, 0.0
  %v1094 = vmax.f32 %v1073, 0.0
  %v1095 = vmax.f32 %v1074, 0.0
  %v1096 = vmax.f32 %v1075, 0.0
  %v1097 = vmax.f32 %v1076, 0.0
  %v1098 = vmax.f32 %v1077, 0.0
  %v1099 = vmax.f32 %v1078, 0.0
  %v1100 = vmax.f32 %v1079, 0.0
  %v1101 = vmax.f32 %v1080, 0.0
  %v1102 = vmax.f32 %v1081, 0.0
  %v1103 = vmax.f32 %v1082, 0.0
  %v1104 = vmax.f32 %v1083, 0.0
  %v1105 = vmax.f32 %v1084, 0.0
  %v1106 = vpack.c.bf16 %v1086, %v1085
  %v1107 = vpack.c.bf16 %v1088, %v1087
  %v1108 = vpack.c.bf16 %v1090, %v1089
  %v1109 = vpack.c.bf16 %v1092, %v1091
  %v1110 = vpack.c.bf16 %v1094, %v1093
  %v1111 = vpack.c.bf16 %v1096, %v1095
  %v1112 = vpack.c.bf16 %v1098, %v1097
  %v1113 = vpack.c.bf16 %v1100, %v1099
  %v1114 = vpack.c.bf16 %v1102, %v1101
  %v1115 = vpack.c.bf16 %v1104, %v1103
  %v1116 = vpack.c.bf16 %v1105, %v1105
  %v1117 = vld [vmem:[%s3] sm:$0xf]
  %v1118 = vld [vmem:[%s3 + $0x4] sm:$0xf]
  %v1119 = vld [vmem:[%s3 + $0x8] sm:$0xf]
  %v1120 = vld [vmem:[%s3 + $0xc] sm:$0xf]
  %v1121 = vld [vmem:[%s3 + $0x10] sm:$0xf]
  %v1122 = vld [vmem:[%s3 + $0x14] sm:$0xf]
  %v1123 = vld [vmem:[%s3 + $0x18] sm:$0xf]
  %v1124 = vld [vmem:[%s3 + $0x1c] sm:$0xf]
  %v1125 = vld [vmem:[%s4] sm:$0x1]
  %v1127 = vlaneseq
  %v1128 = vshrl.u32 %v1127, 7
  %v1129 = vsub.s32 0, %v1128
  %v1130 = vrot.slane %v1125, %v1129
  %v1140 = vunpack.c.l.b16 %v1117
  %v1141 = vunpack.c.l.b16 %v1118
  %v1142 = vunpack.c.l.b16 %v1119
  %v1143 = vunpack.c.l.b16 %v1120
  %v1144 = vunpack.c.l.b16 %v1121
  %v1145 = vunpack.c.l.b16 %v1122
  %v1146 = vunpack.c.l.b16 %v1123
  %v1147 = vunpack.c.l.b16 %v1124
  %v1148 = vpack.c.b16 %v1141, %v1140
  %v1149 = vpack.c.b16 %v1143, %v1142
  %v1150 = vpack.c.b16 %v1145, %v1144
  %v1151 = vpack.c.b16 %v1147, %v1146
  %vm1156 = vcmask 523264
  %v1158 = vsel %vm1156, %v1106, 0
  %v1161 = vsel %vm1156, %v1107, 0
  %v1164 = vsel %vm1156, %v1108, 0
  %v1167 = vsel %vm1156, %v1109, 0
  %v1170 = vsel %vm1156, %v1110, 0
  %v1173 = vsel %vm1156, %v1111, 0
  %v1176 = vsel %vm1156, %v1112, 0
  %v1179 = vsel %vm1156, %v1113, 0
  %v1182 = vsel %vm1156, %v1114, 0
  %v1185 = vsel %vm1156, %v1115, 0
  %v1188 = vsel %vm1156, %v1116, 0
  %1190 = vmatprep.subr.bf16.mxu0 0
  %1191 = vmatpush1.bf16.msra.mxu0 %v1148
  %1192 = vmatprep.subr.bf16.mxu0 0
  %1193 = vmatpush1.bf16.msra.mxu0 %v1149
  %1194 = vmatprep.subr.bf16.mxu0 0
  %1195 = vmatpush1.bf16.msra.mxu0 %v1150
  %1196 = vmatprep.subr.bf16.mxu0 0
  %1197 = vmatpush1.bf16.msra.mxu0 %v1151
  %1198 = vmatprep.subr.bf16.mxu0 0
  %1199 = vmatpush1.bf16.msra.mxu0 0
  %1200 = vmatprep.subr.bf16.mxu0 0
  %1201 = vmatpush1.bf16.msra.mxu0 0
  %1202 = vmatprep.subr.bf16.mxu0 0
  %1203 = vmatpush1.bf16.msra.mxu0 0
  %1204 = vmatprep.subr.bf16.mxu0 0
  %1205 = vmatpush1.bf16.msra.mxu0 0
  %1206 = vmatprep.subr.bf16.mxu0 0
  %1207 = vmatpush1.bf16.msra.mxu0 0
  %1208 = vmatprep.subr.bf16.mxu0 0
  %1209 = vmatpush1.bf16.msra.mxu0 0
  %1210 = vmatprep.subr.bf16.mxu0 0
  %1211 = vmatpush1.bf16.msra.mxu0 0
  %1212 = vmatprep.subr.bf16.mxu0 0
  %1213 = vmatpush1.bf16.msra.mxu0 0
  %1214 = vmatprep.subr.bf16.mxu0 0
  %1215 = vmatpush1.bf16.msra.mxu0 0
  %1216 = vmatprep.subr.bf16.mxu0 0
  %1217 = vmatpush1.bf16.msra.mxu0 0
  %1218 = vmatprep.subr.bf16.mxu0 0
  %1219 = vmatpush1.bf16.msra.mxu0 0
  %1220 = vmatprep.subr.bf16.mxu0 0
  %1221 = vmatpush1.bf16.msra.mxu0 0
  %1222 = vmatprep.mubr.bf16.mxu0 0
  %1223 = vmatmul.mubr.bf16.gmra.mrb[0].mxu0 %v1158
  %v1224 = vpop.f32.mrb[0].mxu0
  %v1225 = vadd.f32 %v1130, %v1224
  %v1226 = vpop.f32.mrb[0].mxu0
  %v1227 = vpop.f32.mrb[0].mxu0
  %v1228 = vadd.f32 %v1130, %v1227
  %v1229 = vpop.f32.mrb[0].mxu0
  %1230 = vmatprep.mubr.bf16.mxu0 0
  %1231 = vmatmul.mubr.bf16.gmra.mrb[0].mxu0 %v1161
  %v1232 = vpop.f32.mrb[0].mxu0
  %v1233 = vadd.f32 %v1130, %v1232
  %v1234 = vpop.f32.mrb[0].mxu0
  %v1235 = vpop.f32.mrb[0].mxu0
  %v1236 = vadd.f32 %v1130, %v1235
  %v1237 = vpop.f32.mrb[0].mxu0
  %1238 = vmatprep.mubr.bf16.mxu0 0
  %1239 = vmatmul.mubr.bf16.gmra.mrb[0].mxu0 %v1164
  %v1240 = vpop.f32.mrb[0].mxu0
  %v1241 = vadd.f32 %v1130, %v1240
  %v1242 = vpop.f32.mrb[0].mxu0
  %v1243 = vpop.f32.mrb[0].mxu0
  %v1244 = vadd.f32 %v1130, %v1243
  %v1245 = vpop.f32.mrb[0].mxu0
  %1246 = vmatprep.mubr.bf16.mxu0 0
  %1247 = vmatmul.mubr.bf16.gmra.mrb[0].mxu0 %v1167
  %v1248 = vpop.f32.mrb[0].mxu0
  %v1249 = vadd.f32 %v1130, %v1248
  %v1250 = vpop.f32.mrb[0].mxu0
  %v1251 = vpop.f32.mrb[0].mxu0
  %v1252 = vadd.f32 %v1130, %v1251
  %v1253 = vpop.f32.mrb[0].mxu0
  %1254 = vmatprep.mubr.bf16.mxu0 0
  %1255 = vmatmul.mubr.bf16.gmra.mrb[0].mxu0 %v1170
  %v1256 = vpop.f32.mrb[0].mxu0
  %v1257 = vadd.f32 %v1130, %v1256
  %v1258 = vpop.f32.mrb[0].mxu0
  %v1259 = vpop.f32.mrb[0].mxu0
  %v1260 = vadd.f32 %v1130, %v1259
  %v1261 = vpop.f32.mrb[0].mxu0
  %1262 = vmatprep.mubr.bf16.mxu0 0
  %1263 = vmatmul.mubr.bf16.gmra.mrb[0].mxu0 %v1173
  %v1264 = vpop.f32.mrb[0].mxu0
  %v1265 = vadd.f32 %v1130, %v1264
  %v1266 = vpop.f32.mrb[0].mxu0
  %v1267 = vpop.f32.mrb[0].mxu0
  %v1268 = vadd.f32 %v1130, %v1267
  %v1269 = vpop.f32.mrb[0].mxu0
  %1270 = vmatprep.mubr.bf16.mxu0 0
  %1271 = vmatmul.mubr.bf16.gmra.mrb[0].mxu0 %v1176
  %v1272 = vpop.f32.mrb[0].mxu0
  %v1273 = vadd.f32 %v1130, %v1272
  %v1274 = vpop.f32.mrb[0].mxu0
  %v1275 = vpop.f32.mrb[0].mxu0
  %v1276 = vadd.f32 %v1130, %v1275
  %v1277 = vpop.f32.mrb[0].mxu0
  %1278 = vmatprep.mubr.bf16.mxu0 0
  %1279 = vmatmul.mubr.bf16.gmra.mrb[0].mxu0 %v1179
  %v1280 = vpop.f32.mrb[0].mxu0
  %v1281 = vadd.f32 %v1130, %v1280
  %v1282 = vpop.f32.mrb[0].mxu0
  %v1283 = vpop.f32.mrb[0].mxu0
  %v1284 = vadd.f32 %v1130, %v1283
  %v1285 = vpop.f32.mrb[0].mxu0
  %1286 = vmatprep.mubr.bf16.mxu0 0
  %1287 = vmatmul.mubr.bf16.gmra.mrb[0].mxu0 %v1182
  %v1288 = vpop.f32.mrb[0].mxu0
  %v1289 = vadd.f32 %v1130, %v1288
  %v1290 = vpop.f32.mrb[0].mxu0
  %v1291 = vpop.f32.mrb[0].mxu0
  %v1292 = vadd.f32 %v1130, %v1291
  %v1293 = vpop.f32.mrb[0].mxu0
  %1294 = vmatprep.mubr.bf16.mxu0 0
  %1295 = vmatmul.mubr.bf16.gmra.mrb[0].mxu0 %v1185
  %v1296 = vpop.f32.mrb[0].mxu0
  %v1297 = vadd.f32 %v1130, %v1296
  %v1298 = vpop.f32.mrb[0].mxu0
  %v1299 = vpop.f32.mrb[0].mxu0
  %v1300 = vadd.f32 %v1130, %v1299
  %v1301 = vpop.f32.mrb[0].mxu0
  %1302 = vmatprep.mubr.bf16.mxu0 0
  %1303 = vmatmul.mubr.bf16.gmra.mrb[0].mxu0 %v1188
  %v1304 = vpop.f32.mrb[0].mxu0
  %v1305 = vadd.f32 %v1130, %v1304
  %v1306 = vpop.f32.mrb[0].mxu0
  %v1307 = vpop.f32.mrb[0].mxu0
  %v1308 = vpop.f32.mrb[0].mxu0
  %1309 = vdwg.mxu0
  %vm1310 = vcmask 261120
  %1311 = vst.msk [vmem:[%s5] sm:$0xff] %vm1310, %v1225
  %1312 = vst.msk [vmem:[%s5 + $0x8] sm:$0xff] %vm1310, %v1228
  %1313 = vst.msk [vmem:[%s5 + $0x10] sm:$0xff] %vm1310, %v1233
  %1314 = vst.msk [vmem:[%s5 + $0x18] sm:$0xff] %vm1310, %v1236
  %1315 = vst.msk [vmem:[%s5 + $0x20] sm:$0xff] %vm1310, %v1241
  %1316 = vst.msk [vmem:[%s5 + $0x28] sm:$0xff] %vm1310, %v1244
  %1317 = vst.msk [vmem:[%s5 + $0x30] sm:$0xff] %vm1310, %v1249
  %1318 = vst.msk [vmem:[%s5 + $0x38] sm:$0xff] %vm1310, %v1252
  %1319 = vst.msk [vmem:[%s5 + $0x40] sm:$0xff] %vm1310, %v1257
  %1320 = vst.msk [vmem:[%s5 + $0x48] sm:$0xff] %vm1310, %v1260
  %1321 = vst.msk [vmem:[%s5 + $0x50] sm:$0xff] %vm1310, %v1265
  %1322 = vst.msk [vmem:[%s5 + $0x58] sm:$0xff] %vm1310, %v1268
  %1323 = vst.msk [vmem:[%s5 + $0x60] sm:$0xff] %vm1310, %v1273
  %1324 = vst.msk [vmem:[%s5 + $0x68] sm:$0xff] %vm1310, %v1276
  %1325 = vst.msk [vmem:[%s5 + $0x70] sm:$0xff] %vm1310, %v1281
  %1326 = vst.msk [vmem:[%s5 + $0x78] sm:$0xff] %vm1310, %v1284
  %1327 = vst.msk [vmem:[%s5 + $0x80] sm:$0xff] %vm1310, %v1289
  %1328 = vst.msk [vmem:[%s5 + $0x88] sm:$0xff] %vm1310, %v1292
  %1329 = vst.msk [vmem:[%s5 + $0x90] sm:$0xff] %vm1310, %v1297
  %1330 = vst.msk [vmem:[%s5 + $0x98] sm:$0xff] %vm1310, %v1300
  %1331 = vst.msk [vmem:[%s5 + $0xa0] sm:$0xff] %vm1310, %v1305
  // Predicated region
  $region22: #{fcn_forward.7} parent=0 // pred_check
    _
  $region23: #{fcn_forward.7} parent=0 // pred_check_branch
    %1333 = sbr.rel (0) target = $region25
  $region24: #{fcn_forward.7} parent=0 // pred_region
    _
  $region25: #{fcn_forward.7} parent=0 // pred_fallthru
    _
  // Predicated region
  $region26: #{fcn_forward.7} parent=0 // pred_check
    _
  $region27: #{fcn_forward.7} parent=0 // pred_check_branch
    %1335 = sbr.rel (0) target = $region29
  $region28: #{fcn_forward.7} parent=0 // pred_region
    _
  $region29: #{fcn_forward.7} parent=0 // pred_fallthru
    _

</llo_original>
